<compile_context>
chip_gen: v5e
topology: v5e:2x2
jax: 0.10.0
libtpu: 0.0.40
codegen_flags: <defaults>
</compile_context>

<pallas_src>
import functools
import math

import jax
import jax.numpy as jnp
from jax.experimental import pallas as pl
from jax.experimental.pallas import tpu as pltpu

COMPUTE_DTYPE = jnp.bfloat16   # MXU-native matmul dtype on v5e / v6e / v7x
LN_EPS = 1e-5


# ---------------------------------------------------------------------------
# In-kernel helpers (traced inside the Pallas kernels)
# ---------------------------------------------------------------------------

def _layernorm(z, gamma, beta, eps):
    """LayerNorm over the last dim; statistics in float32."""
    mean = jnp.mean(z, axis=-1, keepdims=True)
    var = jnp.mean(jnp.square(z - mean), axis=-1, keepdims=True)
    zn = (z - mean) * jax.lax.rsqrt(var + eps)
    return zn * gamma + beta


def _mha_heads(q, k, v, mask, wo, *, n_heads, head_dim, sm_scale,
               alpha_sink=None):
    """Per-head attention + fused head-merge/output-projection.

    q: (Lq, H) f32, k/v: (Lk, H) f32, mask: (Lq, Lk) f32, wo: (H, H) bf16.
    Returns sum_h softmax(q_h k_h^T * sm_scale) v_h @ wo[h*D:(h+1)*D, :]
    as a (Lq, H) float32 array (output-projection bias NOT added here).
    """
    Lq = q.shape[0]
    H = wo.shape[1]
    acc = jnp.zeros((Lq, H), jnp.float32)
    for h in range(n_heads):                      # static unroll over heads
        sl = slice(h * head_dim, (h + 1) * head_dim)
        qh = (q[:, sl] * sm_scale).astype(COMPUTE_DTYPE)   # fold 1/scale into Q
        kh = k[:, sl].astype(COMPUTE_DTYPE)
        vh = v[:, sl].astype(COMPUTE_DTYPE)
        # scores = q_h @ k_h^T  (contract head_dim), f32 accumulation
        s = jax.lax.dot_general(qh, kh, (((1,), (1,)), ((), ())),
                                preferred_element_type=jnp.float32)
        s = jnp.where(mask == 0, jnp.float32(-1e10), s)
        s_max = jnp.max(s, axis=-1, keepdims=True)
        e = jnp.exp(s - s_max)
        denom = jnp.sum(e, axis=-1, keepdims=True)
        alpha = e * pl.reciprocal(denom, approx=True)      # EUP slot (~free)
        if alpha_sink is not None:
            alpha_sink(h, alpha)
        oh = jnp.dot(alpha.astype(COMPUTE_DTYPE), vh,
                     preferred_element_type=jnp.float32)   # (Lq, D)
        # head-merge + output projection folded: acc += o_h @ wo_h
        acc = acc + jnp.dot(oh.astype(COMPUTE_DTYPE), wo[sl, :],
                            preferred_element_type=jnp.float32)
    return acc


# ---------------------------------------------------------------------------
# Fused kernels
# ---------------------------------------------------------------------------

def _self_mha_ln_kernel(x_ref, mask_ref, wqkv_ref, bqkv_ref, wo_ref, bo_ref,
                        g_ref, beta_ref, o_ref, *, n_heads, head_dim,
                        sm_scale, eps):
    """LayerNorm(x + SelfAttention(x)) for one batch element (all heads)."""
    x = x_ref[0]                                   # (L, H) f32 (residual)
    H = x.shape[-1]
    qkv = jnp.dot(x.astype(COMPUTE_DTYPE), wqkv_ref[...],
                  preferred_element_type=jnp.float32) + bqkv_ref[...]
    q, k, v = qkv[:, :H], qkv[:, H:2 * H], qkv[:, 2 * H:]
    attn = _mha_heads(q, k, v, mask_ref[0], wo_ref[...],
                      n_heads=n_heads, head_dim=head_dim, sm_scale=sm_scale)
    z = x + attn + bo_ref[...]
    o_ref[0] = _layernorm(z, g_ref[...], beta_ref[...], eps).astype(o_ref.dtype)


def _cross_mha_ln_kernel(x_ref, kv_ref, mask_ref, wq_ref, bq_ref, wkv_ref,
                         bkv_ref, wo_ref, bo_ref, g_ref, beta_ref,
                         o_ref, alpha_ref, *, n_heads, head_dim,
                         sm_scale, eps):
    """LayerNorm(x + CrossAttention(x, kv)) + attention weights, per batch."""
    x = x_ref[0]                                   # (Lq, H) f32 (query + residual)
    kv_in = kv_ref[0]                              # (Lk, H) f32
    H = x.shape[-1]
    q = jnp.dot(x.astype(COMPUTE_DTYPE), wq_ref[...],
                preferred_element_type=jnp.float32) + bq_ref[...]
    kv = jnp.dot(kv_in.astype(COMPUTE_DTYPE), wkv_ref[...],
                 preferred_element_type=jnp.float32) + bkv_ref[...]
    k, v = kv[:, :H], kv[:, H:]

    def alpha_sink(h, alpha):
        alpha_ref[0, h] = alpha.astype(alpha_ref.dtype)

    attn = _mha_heads(q, k, v, mask_ref[0], wo_ref[...],
                      n_heads=n_heads, head_dim=head_dim, sm_scale=sm_scale,
                      alpha_sink=alpha_sink)
    z = x + attn + bo_ref[...]
    o_ref[0] = _layernorm(z, g_ref[...], beta_ref[...], eps).astype(o_ref.dtype)


def _ffn_ln_kernel(x_ref, w1_ref, b1_ref, w2_ref, b2_ref, g_ref, beta_ref,
                   o_ref, *, eps):
    """LayerNorm(x + fc2(relu(fc1(x)))) for one batch element."""
    x = x_ref[0]                                   # (L, H) f32 (residual)
    h = jnp.dot(x.astype(COMPUTE_DTYPE), w1_ref[...],
                preferred_element_type=jnp.float32) + b1_ref[...]
    h = jnp.maximum(h, 0.0)
    y = jnp.dot(h.astype(COMPUTE_DTYPE), w2_ref[...],
                preferred_element_type=jnp.float32) + b2_ref[...]
    z = x + y
    o_ref[0] = _layernorm(z, g_ref[...], beta_ref[...], eps).astype(o_ref.dtype)


# ---------------------------------------------------------------------------
# Wrappers (one pallas_call each)
# ---------------------------------------------------------------------------

def _prep_mask(mask, B, Lq, Lk):
    m = jnp.asarray(mask, jnp.float32)
    m = jnp.broadcast_to(m, (B, 1, Lq, Lk))
    return m.reshape(B, Lq, Lk)


def self_mha_add_ln(x, mask, p, ln, n_heads, eps=LN_EPS):
    B, L, H = x.shape
    head_dim = H // n_heads
    sm_scale = 1.0 / math.sqrt(head_dim)
    m = _prep_mask(mask, B, L, L)
    kernel = functools.partial(_self_mha_ln_kernel, n_heads=n_heads,
                               head_dim=head_dim, sm_scale=sm_scale, eps=eps)
    return pl.pallas_call(
        kernel,
        out_shape=jax.ShapeDtypeStruct((B, L, H), x.dtype),
        grid=(B,),
        in_specs=[
            pl.BlockSpec((1, L, H), lambda b: (b, 0, 0)),       # x
            pl.BlockSpec((1, L, L), lambda b: (b, 0, 0)),       # mask
            pl.BlockSpec((H, 3 * H), lambda b: (0, 0)),         # wqkv
            pl.BlockSpec((1, 3 * H), lambda b: (0, 0)),         # bqkv
            pl.BlockSpec((H, H), lambda b: (0, 0)),             # wo
            pl.BlockSpec((1, H), lambda b: (0, 0)),             # bo
            pl.BlockSpec((1, H), lambda b: (0, 0)),             # gamma
            pl.BlockSpec((1, H), lambda b: (0, 0)),             # beta
        ],
        out_specs=pl.BlockSpec((1, L, H), lambda b: (b, 0, 0)),
        compiler_params=pltpu.CompilerParams(
            dimension_semantics=("parallel",)),
    )(x, m, p["wqkv"], p["bqkv"], p["wo"], p["bo"], ln["gamma"], ln["beta"])


def cross_mha_add_ln(x, kv, mask, p, ln, n_heads, eps=LN_EPS):
    B, Lq, H = x.shape
    Lk = kv.shape[1]
    head_dim = H // n_heads
    sm_scale = 1.0 / math.sqrt(head_dim)
    m = _prep_mask(mask, B, Lq, Lk)
    kernel = functools.partial(_cross_mha_ln_kernel, n_heads=n_heads,
                               head_dim=head_dim, sm_scale=sm_scale, eps=eps)
    out, alpha = pl.pallas_call(
        kernel,
        out_shape=(
            jax.ShapeDtypeStruct((B, Lq, H), x.dtype),
            jax.ShapeDtypeStruct((B, n_heads, Lq, Lk), jnp.float32),
        ),
        grid=(B,),
        in_specs=[
            pl.BlockSpec((1, Lq, H), lambda b: (b, 0, 0)),      # x (query/resid)
            pl.BlockSpec((1, Lk, H), lambda b: (b, 0, 0)),      # enc_src
            pl.BlockSpec((1, Lq, Lk), lambda b: (b, 0, 0)),     # mask
            pl.BlockSpec((H, H), lambda b: (0, 0)),             # wq
            pl.BlockSpec((1, H), lambda b: (0, 0)),             # bq
            pl.BlockSpec((H, 2 * H), lambda b: (0, 0)),         # wkv
            pl.BlockSpec((1, 2 * H), lambda b: (0, 0)),         # bkv
            pl.BlockSpec((H, H), lambda b: (0, 0)),             # wo
            pl.BlockSpec((1, H), lambda b: (0, 0)),             # bo
            pl.BlockSpec((1, H), lambda b: (0, 0)),             # gamma
            pl.BlockSpec((1, H), lambda b: (0, 0)),             # beta
        ],
        out_specs=[
            pl.BlockSpec((1, Lq, H), lambda b: (b, 0, 0)),
            pl.BlockSpec((1, n_heads, Lq, Lk), lambda b: (b, 0, 0, 0)),
        ],
        compiler_params=pltpu.CompilerParams(
            dimension_semantics=("parallel",)),
    )(x, kv, m, p["wq"], p["bq"], p["wkv"], p["bkv"], p["wo"], p["bo"],
      ln["gamma"], ln["beta"])
    return out, alpha


def ffn_add_ln(x, p, ln, eps=LN_EPS):
    B, L, H = x.shape
    PF = p["w1"].shape[1]
    return pl.pallas_call(
        functools.partial(_ffn_ln_kernel, eps=eps),
        out_shape=jax.ShapeDtypeStruct((B, L, H), x.dtype),
        grid=(B,),
        in_specs=[
            pl.BlockSpec((1, L, H), lambda b: (b, 0, 0)),       # x
            pl.BlockSpec((H, PF), lambda b: (0, 0)),            # w1
            pl.BlockSpec((1, PF), lambda b: (0, 0)),            # b1
            pl.BlockSpec((PF, H), lambda b: (0, 0)),            # w2
            pl.BlockSpec((1, H), lambda b: (0, 0)),             # b2
            pl.BlockSpec((1, H), lambda b: (0, 0)),             # gamma
            pl.BlockSpec((1, H), lambda b: (0, 0)),             # beta
        ],
        out_specs=pl.BlockSpec((1, L, H), lambda b: (b, 0, 0)),
        compiler_params=pltpu.CompilerParams(
            dimension_semantics=("parallel",)),
    )(x, p["w1"], p["b1"], p["w2"], p["b2"], ln["gamma"], ln["beta"])


def decoder_layer(trg, enc_src, trg_mask, src_mask, params, *, n_heads):
    # 1) masked decoder self-attention + add & norm (alpha not materialized)
    trg = self_mha_add_ln(trg, trg_mask, params["self_attn"],
                          params["ln_self"], n_heads)
    # 2) encoder cross-attention + add & norm (returns alpha)
    trg, enc_alpha = cross_mha_add_ln(trg, enc_src, src_mask,
                                      params["enc_attn"], params["ln_enc"],
                                      n_heads)
    # 3) position-wise feed-forward + add & norm
    trg = ffn_add_ln(trg, params["ff"], params["ln_ff"])
    return trg, enc_alpha


decoder_layer_jit = jax.jit(decoder_layer, static_argnames=("n_heads",))


# ---------------------------------------------------------------------------
# Deterministic parameter initialization
# ---------------------------------------------------------------------------

def _init_linear(key, fan_in, fan_out):
    kw, kb = jax.random.split(key)
    bound = 1.0 / math.sqrt(fan_in)
    w = jax.random.uniform(kw, (fan_in, fan_out), jnp.float32, -bound, bound)
    b = jax.random.uniform(kb, (fan_out,), jnp.float32, -bound, bound)
    return w, b


def init_params(key, hid_dim, n_heads, pf_dim):
    k_self, k_enc, k_ff1, k_ff2 = jax.random.split(key, 4)

    def attn_params(k):
        ks = jax.random.split(k, 4)
        wq, bq = _init_linear(ks[0], hid_dim, hid_dim)
        wk, bk = _init_linear(ks[1], hid_dim, hid_dim)
        wv, bv = _init_linear(ks[2], hid_dim, hid_dim)
        wo, bo = _init_linear(ks[3], hid_dim, hid_dim)
        return dict(
            # fused QKV weight (used by self-attention kernel)
            wqkv=jnp.concatenate([wq, wk, wv], axis=1).astype(COMPUTE_DTYPE),
            bqkv=jnp.concatenate([bq, bk, bv]).reshape(1, -1),
            # separate Q + fused KV (used by cross-attention kernel)
            wq=wq.astype(COMPUTE_DTYPE), bq=bq.reshape(1, -1),
            wkv=jnp.concatenate([wk, wv], axis=1).astype(COMPUTE_DTYPE),
            bkv=jnp.concatenate([bk, bv]).reshape(1, -1),
            wo=wo.astype(COMPUTE_DTYPE), bo=bo.reshape(1, -1),
        )

    w1, b1 = _init_linear(k_ff1, hid_dim, pf_dim)
    w2, b2 = _init_linear(k_ff2, pf_dim, hid_dim)

    def ln():
        return dict(gamma=jnp.ones((1, hid_dim), jnp.float32),
                    beta=jnp.zeros((1, hid_dim), jnp.float32))

    return dict(
        self_attn=attn_params(k_self),
        enc_attn=attn_params(k_enc),
        ff=dict(w1=w1.astype(COMPUTE_DTYPE), b1=b1.reshape(1, -1),
                w2=w2.astype(COMPUTE_DTYPE), b2=b2.reshape(1, -1)),
        ln_self=ln(), ln_enc=ln(), ln_ff=ln(),
    )


# ---------------------------------------------------------------------------
# Main
# ---------------------------------------------------------------------------

if __name__ == "__main__":
    B, TRG_LEN, SRC_LEN = 2, 8, 8
    HID, N_HEADS, PF = 32, 4, 64

    root = jax.random.PRNGKey(0)
    k_params, k_trg, k_src = jax.random.split(root, 3)

    params = init_params(k_params, HID, N_HEADS, PF)

    trg = jax.random.normal(k_trg, (B, TRG_LEN, HID), jnp.float32)
    enc_src = jax.random.normal(k_src, (B, SRC_LEN, HID), jnp.float32)

    # causal mask for decoder self-attention, pad-mask (all valid) for cross-attn
    trg_mask = jnp.broadcast_to(
        jnp.tril(jnp.ones((TRG_LEN, TRG_LEN), jnp.float32))[None, None],
        (B, 1, TRG_LEN, TRG_LEN),
    )
    src_mask = jnp.ones((B, 1, 1, SRC_LEN), jnp.float32)

    out, enc_alpha = decoder_layer_jit(trg, enc_src, trg_mask, src_mask,
                                       params, n_heads=N_HEADS)
    out = jax.block_until_ready(out)
    enc_alpha = jax.block_until_ready(enc_alpha)

    assert out.shape == (B, TRG_LEN, HID)
    assert enc_alpha.shape == (B, N_HEADS, TRG_LEN, SRC_LEN)
    assert bool(jnp.all(jnp.isfinite(out)))
    assert bool(jnp.all(jnp.isfinite(enc_alpha)))

    print("KERNEL_OK")
</pallas_src>

<mosaic_0001>
module attributes {stable_mosaic.version = 11 : i64} {
  func.func @_cross_mha_ln_kernel(%arg0: i32, %arg1: memref<1x8x32xf32, #tpu.memory_space<vmem>>, %arg2: memref<1x8x32xf32, #tpu.memory_space<vmem>>, %arg3: memref<1x8x8xf32, #tpu.memory_space<vmem>>, %arg4: memref<32x32xbf16, #tpu.memory_space<vmem>>, %arg5: memref<1x32xf32, #tpu.memory_space<vmem>>, %arg6: memref<32x64xbf16, #tpu.memory_space<vmem>>, %arg7: memref<1x64xf32, #tpu.memory_space<vmem>>, %arg8: memref<32x32xbf16, #tpu.memory_space<vmem>>, %arg9: memref<1x32xf32, #tpu.memory_space<vmem>>, %arg10: memref<1x32xf32, #tpu.memory_space<vmem>>, %arg11: memref<1x32xf32, #tpu.memory_space<vmem>>, %arg12: memref<1x8x32xf32, #tpu.memory_space<vmem>>, %arg13: memref<1x4x8x8xf32, #tpu.memory_space<vmem>>) attributes {dimension_semantics = [#tpu.dimension_semantics<parallel>], iteration_bounds = array<i64: 2>, scalar_prefetch = 0 : i64, scratch_operands = 0 : i64, tpu.core_type = #tpu.core_type<tc>, window_params = [{transform_indices = @transform_0, window_bounds = array<i64: 1, 8, 32>}, {transform_indices = @transform_1, window_bounds = array<i64: 1, 8, 32>}, {transform_indices = @transform_2, window_bounds = array<i64: 1, 8, 8>}, {pipeline_mode = #tpu.pipeline_mode<synchronous>, transform_indices = @transform_3, window_bounds = array<i64: 32, 32>}, {pipeline_mode = #tpu.pipeline_mode<synchronous>, transform_indices = @transform_4, window_bounds = array<i64: 1, 32>}, {pipeline_mode = #tpu.pipeline_mode<synchronous>, transform_indices = @transform_5, window_bounds = array<i64: 32, 64>}, {pipeline_mode = #tpu.pipeline_mode<synchronous>, transform_indices = @transform_6, window_bounds = array<i64: 1, 64>}, {pipeline_mode = #tpu.pipeline_mode<synchronous>, transform_indices = @transform_7, window_bounds = array<i64: 32, 32>}, {pipeline_mode = #tpu.pipeline_mode<synchronous>, transform_indices = @transform_8, window_bounds = array<i64: 1, 32>}, {pipeline_mode = #tpu.pipeline_mode<synchronous>, transform_indices = @transform_9, window_bounds = array<i64: 1, 32>}, {pipeline_mode = #tpu.pipeline_mode<synchronous>, transform_indices = @transform_10, window_bounds = array<i64: 1, 32>}, {transform_indices = @transform_11, window_bounds = array<i64: 1, 8, 32>}, {transform_indices = @transform_12, window_bounds = array<i64: 1, 4, 8, 8>}]} {
    %c0 = arith.constant 0 : index
    %c0_0 = arith.constant 0 : index
    %c0_1 = arith.constant 0 : index
    %0 = vector.load %arg1[%c0, %c0_0, %c0_1] : memref<1x8x32xf32, #tpu.memory_space<vmem>>, vector<1x8x32xf32>
    %1 = vector.shape_cast %0 : vector<1x8x32xf32> to vector<8x32xf32>
    %c0_2 = arith.constant 0 : index
    %c0_3 = arith.constant 0 : index
    %c0_4 = arith.constant 0 : index
    %2 = vector.load %arg2[%c0_2, %c0_3, %c0_4] : memref<1x8x32xf32, #tpu.memory_space<vmem>>, vector<1x8x32xf32>
    %3 = vector.shape_cast %2 : vector<1x8x32xf32> to vector<8x32xf32>
    %4 = arith.truncf %1 : vector<8x32xf32> to vector<8x32xbf16>
    %c0_5 = arith.constant 0 : index
    %c0_6 = arith.constant 0 : index
    %5 = vector.load %arg4[%c0_5, %c0_6] : memref<32x32xbf16, #tpu.memory_space<vmem>>, vector<32x32xbf16>
    %cst = arith.constant dense<0.000000e+00> : vector<8x32xf32>
    %6 = tpu.matmul %4, %5, %cst {dimension_numbers = #tpu.dot_dimension_numbers<[1], [0], [0], [1], [0, 0, 1, 1], [], []>} : vector<8x32xbf16>, vector<32x32xbf16>, vector<8x32xf32> -> vector<8x32xf32>
    %c0_7 = arith.constant 0 : index
    %c0_8 = arith.constant 0 : index
    %7 = vector.load %arg5[%c0_7, %c0_8] : memref<1x32xf32, #tpu.memory_space<vmem>>, vector<1x32xf32>
    %8 = vector.broadcast %7 : vector<1x32xf32> to vector<8x32xf32>
    %9 = arith.addf %6, %8 : vector<8x32xf32>
    %10 = arith.truncf %3 : vector<8x32xf32> to vector<8x32xbf16>
    %c0_9 = arith.constant 0 : index
    %c0_10 = arith.constant 0 : index
    %11 = vector.load %arg6[%c0_9, %c0_10] : memref<32x64xbf16, #tpu.memory_space<vmem>>, vector<32x64xbf16>
    %cst_11 = arith.constant dense<0.000000e+00> : vector<8x64xf32>
    %12 = tpu.matmul %10, %11, %cst_11 {dimension_numbers = #tpu.dot_dimension_numbers<[1], [0], [0], [1], [0, 0, 1, 1], [], []>} : vector<8x32xbf16>, vector<32x64xbf16>, vector<8x64xf32> -> vector<8x64xf32>
    %c0_12 = arith.constant 0 : index
    %c0_13 = arith.constant 0 : index
    %13 = vector.load %arg7[%c0_12, %c0_13] : memref<1x64xf32, #tpu.memory_space<vmem>>, vector<1x64xf32>
    %14 = vector.broadcast %13 : vector<1x64xf32> to vector<8x64xf32>
    %15 = arith.addf %12, %14 : vector<8x64xf32>
    %16 = vector.extract_strided_slice %15 {offsets = [0, 0], sizes = [8, 32], strides = [1, 1]} : vector<8x64xf32> to vector<8x32xf32>
    %17 = vector.extract_strided_slice %15 {offsets = [0, 32], sizes = [8, 32], strides = [1, 1]} : vector<8x64xf32> to vector<8x32xf32>
    %c0_14 = arith.constant 0 : index
    %c0_15 = arith.constant 0 : index
    %c0_16 = arith.constant 0 : index
    %18 = vector.load %arg3[%c0_14, %c0_15, %c0_16] : memref<1x8x8xf32, #tpu.memory_space<vmem>>, vector<1x8x8xf32>
    %19 = vector.shape_cast %18 : vector<1x8x8xf32> to vector<8x8xf32>
    %c0_17 = arith.constant 0 : index
    %c0_18 = arith.constant 0 : index
    %20 = vector.load %arg8[%c0_17, %c0_18] : memref<32x32xbf16, #tpu.memory_space<vmem>>, vector<32x32xbf16>
    %cst_19 = arith.constant 0.000000e+00 : f32
    %21 = vector.broadcast %cst_19 : f32 to vector<8x32xf32>
    %22 = vector.extract_strided_slice %9 {offsets = [0, 0], sizes = [8, 8], strides = [1, 1]} : vector<8x32xf32> to vector<8x8xf32>
    %cst_20 = arith.constant 0.353553385 : f32
    %23 = vector.broadcast %cst_20 : f32 to vector<8x8xf32>
    %24 = arith.mulf %22, %23 : vector<8x8xf32>
    %25 = arith.truncf %24 : vector<8x8xf32> to vector<8x8xbf16>
    %26 = vector.extract_strided_slice %16 {offsets = [0, 0], sizes = [8, 8], strides = [1, 1]} : vector<8x32xf32> to vector<8x8xf32>
    %27 = arith.truncf %26 : vector<8x8xf32> to vector<8x8xbf16>
    %28 = vector.extract_strided_slice %17 {offsets = [0, 0], sizes = [8, 8], strides = [1, 1]} : vector<8x32xf32> to vector<8x8xf32>
    %29 = arith.truncf %28 : vector<8x8xf32> to vector<8x8xbf16>
    %cst_21 = arith.constant dense<0.000000e+00> : vector<8x8xf32>
    %30 = tpu.matmul %25, %27, %cst_21 {dimension_numbers = #tpu.dot_dimension_numbers<[1], [1], [0], [0], [0, 0, 1, 0], [], []>} : vector<8x8xbf16>, vector<8x8xbf16>, vector<8x8xf32> -> vector<8x8xf32>
    %cst_22 = arith.constant 0.000000e+00 : f32
    %31 = vector.broadcast %cst_22 : f32 to vector<8x8xf32>
    %32 = arith.cmpf oeq, %19, %31 : vector<8x8xf32>
    %cst_23 = arith.constant -1.000000e+10 : f32
    %33 = vector.broadcast %cst_23 : f32 to vector<8x8xf32>
    %34 = arith.select %32, %33, %30 : vector<8x8xi1>, vector<8x8xf32>
    %cst_24 = arith.constant dense<0xFF800000> : vector<8xf32>
    %35 = vector.multi_reduction <maximumf>, %34, %cst_24 [1] : vector<8x8xf32> to vector<8xf32>
    %36 = vector.shape_cast %35 : vector<8xf32> to vector<8x1xf32>
    %37 = vector.broadcast %36 : vector<8x1xf32> to vector<8x8xf32>
    %38 = arith.subf %34, %37 : vector<8x8xf32>
    %39 = math.exp %38 : vector<8x8xf32>
    %cst_25 = arith.constant dense<0.000000e+00> : vector<8xf32>
    %40 = vector.multi_reduction <add>, %39, %cst_25 [1] : vector<8x8xf32> to vector<8xf32>
    %41 = vector.shape_cast %40 : vector<8xf32> to vector<8x1xf32>
    %42 = tpu.reciprocal %41 {approx = true} : vector<8x1xf32> -> vector<8x1xf32>
    %43 = vector.broadcast %42 : vector<8x1xf32> to vector<8x8xf32>
    %44 = arith.mulf %39, %43 : vector<8x8xf32>
    %c0_26 = arith.constant 0 : index
    %c0_27 = arith.constant 0 : index
    %c0_28 = arith.constant 0 : index
    %c0_29 = arith.constant 0 : index
    %45 = vector.load %arg13[%c0_26, %c0_27, %c0_28, %c0_29] : memref<1x4x8x8xf32, #tpu.memory_space<vmem>>, vector<1x1x8x8xf32>
    %46 = vector.shape_cast %45 : vector<1x1x8x8xf32> to vector<8x8xf32>
    %47 = vector.shape_cast %44 : vector<8x8xf32> to vector<1x1x8x8xf32>
    tpu.vector_store %arg13[%c0_26, %c0_27, %c0_28, %c0_29], %47 {strides = array<i32>} : memref<1x4x8x8xf32, #tpu.memory_space<vmem>>, vector<1x1x8x8xf32>,
    %48 = arith.truncf %44 : vector<8x8xf32> to vector<8x8xbf16>
    %cst_30 = arith.constant dense<0.000000e+00> : vector<8x8xf32>
    %49 = tpu.matmul %48, %29, %cst_30 {dimension_numbers = #tpu.dot_dimension_numbers<[1], [0], [0], [1], [0, 0, 1, 1], [], []>} : vector<8x8xbf16>, vector<8x8xbf16>, vector<8x8xf32> -> vector<8x8xf32>
    %50 = arith.truncf %49 : vector<8x8xf32> to vector<8x8xbf16>
    %51 = vector.extract_strided_slice %20 {offsets = [0, 0], sizes = [8, 32], strides = [1, 1]} : vector<32x32xbf16> to vector<8x32xbf16>
    %cst_31 = arith.constant dense<0.000000e+00> : vector<8x32xf32>
    %52 = tpu.matmul %50, %51, %cst_31 {dimension_numbers = #tpu.dot_dimension_numbers<[1], [0], [0], [1], [0, 0, 1, 1], [], []>} : vector<8x8xbf16>, vector<8x32xbf16>, vector<8x32xf32> -> vector<8x32xf32>
    %53 = arith.addf %21, %52 : vector<8x32xf32>
    %54 = vector.extract_strided_slice %9 {offsets = [0, 8], sizes = [8, 8], strides = [1, 1]} : vector<8x32xf32> to vector<8x8xf32>
    %cst_32 = arith.constant 0.353553385 : f32
    %55 = vector.broadcast %cst_32 : f32 to vector<8x8xf32>
    %56 = arith.mulf %54, %55 : vector<8x8xf32>
    %57 = arith.truncf %56 : vector<8x8xf32> to vector<8x8xbf16>
    %58 = vector.extract_strided_slice %16 {offsets = [0, 8], sizes = [8, 8], strides = [1, 1]} : vector<8x32xf32> to vector<8x8xf32>
    %59 = arith.truncf %58 : vector<8x8xf32> to vector<8x8xbf16>
    %60 = vector.extract_strided_slice %17 {offsets = [0, 8], sizes = [8, 8], strides = [1, 1]} : vector<8x32xf32> to vector<8x8xf32>
    %61 = arith.truncf %60 : vector<8x8xf32> to vector<8x8xbf16>
    %cst_33 = arith.constant dense<0.000000e+00> : vector<8x8xf32>
    %62 = tpu.matmul %57, %59, %cst_33 {dimension_numbers = #tpu.dot_dimension_numbers<[1], [1], [0], [0], [0, 0, 1, 0], [], []>} : vector<8x8xbf16>, vector<8x8xbf16>, vector<8x8xf32> -> vector<8x8xf32>
    %cst_34 = arith.constant 0.000000e+00 : f32
    %63 = vector.broadcast %cst_34 : f32 to vector<8x8xf32>
    %64 = arith.cmpf oeq, %19, %63 : vector<8x8xf32>
    %cst_35 = arith.constant -1.000000e+10 : f32
    %65 = vector.broadcast %cst_35 : f32 to vector<8x8xf32>
    %66 = arith.select %64, %65, %62 : vector<8x8xi1>, vector<8x8xf32>
    %cst_36 = arith.constant dense<0xFF800000> : vector<8xf32>
    %67 = vector.multi_reduction <maximumf>, %66, %cst_36 [1] : vector<8x8xf32> to vector<8xf32>
    %68 = vector.shape_cast %67 : vector<8xf32> to vector<8x1xf32>
    %69 = vector.broadcast %68 : vector<8x1xf32> to vector<8x8xf32>
    %70 = arith.subf %66, %69 : vector<8x8xf32>
    %71 = math.exp %70 : vector<8x8xf32>
    %cst_37 = arith.constant dense<0.000000e+00> : vector<8xf32>
    %72 = vector.multi_reduction <add>, %71, %cst_37 [1] : vector<8x8xf32> to vector<8xf32>
    %73 = vector.shape_cast %72 : vector<8xf32> to vector<8x1xf32>
    %74 = tpu.reciprocal %73 {approx = true} : vector<8x1xf32> -> vector<8x1xf32>
    %75 = vector.broadcast %74 : vector<8x1xf32> to vector<8x8xf32>
    %76 = arith.mulf %71, %75 : vector<8x8xf32>
    %c0_38 = arith.constant 0 : index
    %c1 = arith.constant 1 : index
    %c0_39 = arith.constant 0 : index
    %c0_40 = arith.constant 0 : index
    %77 = vector.load %arg13[%c0_38, %c1, %c0_39, %c0_40] : memref<1x4x8x8xf32, #tpu.memory_space<vmem>>, vector<1x1x8x8xf32>
    %78 = vector.shape_cast %77 : vector<1x1x8x8xf32> to vector<8x8xf32>
    %79 = vector.shape_cast %76 : vector<8x8xf32> to vector<1x1x8x8xf32>
    tpu.vector_store %arg13[%c0_38, %c1, %c0_39, %c0_40], %79 {strides = array<i32>} : memref<1x4x8x8xf32, #tpu.memory_space<vmem>>, vector<1x1x8x8xf32>,
    %80 = arith.truncf %76 : vector<8x8xf32> to vector<8x8xbf16>
    %cst_41 = arith.constant dense<0.000000e+00> : vector<8x8xf32>
    %81 = tpu.matmul %80, %61, %cst_41 {dimension_numbers = #tpu.dot_dimension_numbers<[1], [0], [0], [1], [0, 0, 1, 1], [], []>} : vector<8x8xbf16>, vector<8x8xbf16>, vector<8x8xf32> -> vector<8x8xf32>
    %82 = arith.truncf %81 : vector<8x8xf32> to vector<8x8xbf16>
    %83 = vector.extract_strided_slice %20 {offsets = [8, 0], sizes = [8, 32], strides = [1, 1]} : vector<32x32xbf16> to vector<8x32xbf16>
    %cst_42 = arith.constant dense<0.000000e+00> : vector<8x32xf32>
    %84 = tpu.matmul %82, %83, %cst_42 {dimension_numbers = #tpu.dot_dimension_numbers<[1], [0], [0], [1], [0, 0, 1, 1], [], []>} : vector<8x8xbf16>, vector<8x32xbf16>, vector<8x32xf32> -> vector<8x32xf32>
    %85 = arith.addf %53, %84 : vector<8x32xf32>
    %86 = vector.extract_strided_slice %9 {offsets = [0, 16], sizes = [8, 8], strides = [1, 1]} : vector<8x32xf32> to vector<8x8xf32>
    %cst_43 = arith.constant 0.353553385 : f32
    %87 = vector.broadcast %cst_43 : f32 to vector<8x8xf32>
    %88 = arith.mulf %86, %87 : vector<8x8xf32>
    %89 = arith.truncf %88 : vector<8x8xf32> to vector<8x8xbf16>
    %90 = vector.extract_strided_slice %16 {offsets = [0, 16], sizes = [8, 8], strides = [1, 1]} : vector<8x32xf32> to vector<8x8xf32>
    %91 = arith.truncf %90 : vector<8x8xf32> to vector<8x8xbf16>
    %92 = vector.extract_strided_slice %17 {offsets = [0, 16], sizes = [8, 8], strides = [1, 1]} : vector<8x32xf32> to vector<8x8xf32>
    %93 = arith.truncf %92 : vector<8x8xf32> to vector<8x8xbf16>
    %cst_44 = arith.constant dense<0.000000e+00> : vector<8x8xf32>
    %94 = tpu.matmul %89, %91, %cst_44 {dimension_numbers = #tpu.dot_dimension_numbers<[1], [1], [0], [0], [0, 0, 1, 0], [], []>} : vector<8x8xbf16>, vector<8x8xbf16>, vector<8x8xf32> -> vector<8x8xf32>
    %cst_45 = arith.constant 0.000000e+00 : f32
    %95 = vector.broadcast %cst_45 : f32 to vector<8x8xf32>
    %96 = arith.cmpf oeq, %19, %95 : vector<8x8xf32>
    %cst_46 = arith.constant -1.000000e+10 : f32
    %97 = vector.broadcast %cst_46 : f32 to vector<8x8xf32>
    %98 = arith.select %96, %97, %94 : vector<8x8xi1>, vector<8x8xf32>
    %cst_47 = arith.constant dense<0xFF800000> : vector<8xf32>
    %99 = vector.multi_reduction <maximumf>, %98, %cst_47 [1] : vector<8x8xf32> to vector<8xf32>
    %100 = vector.shape_cast %99 : vector<8xf32> to vector<8x1xf32>
    %101 = vector.broadcast %100 : vector<8x1xf32> to vector<8x8xf32>
    %102 = arith.subf %98, %101 : vector<8x8xf32>
    %103 = math.exp %102 : vector<8x8xf32>
    %cst_48 = arith.constant dense<0.000000e+00> : vector<8xf32>
    %104 = vector.multi_reduction <add>, %103, %cst_48 [1] : vector<8x8xf32> to vector<8xf32>
    %105 = vector.shape_cast %104 : vector<8xf32> to vector<8x1xf32>
    %106 = tpu.reciprocal %105 {approx = true} : vector<8x1xf32> -> vector<8x1xf32>
    %107 = vector.broadcast %106 : vector<8x1xf32> to vector<8x8xf32>
    %108 = arith.mulf %103, %107 : vector<8x8xf32>
    %c0_49 = arith.constant 0 : index
    %c2 = arith.constant 2 : index
    %c0_50 = arith.constant 0 : index
    %c0_51 = arith.constant 0 : index
    %109 = vector.load %arg13[%c0_49, %c2, %c0_50, %c0_51] : memref<1x4x8x8xf32, #tpu.memory_space<vmem>>, vector<1x1x8x8xf32>
    %110 = vector.shape_cast %109 : vector<1x1x8x8xf32> to vector<8x8xf32>
    %111 = vector.shape_cast %108 : vector<8x8xf32> to vector<1x1x8x8xf32>
    tpu.vector_store %arg13[%c0_49, %c2, %c0_50, %c0_51], %111 {strides = array<i32>} : memref<1x4x8x8xf32, #tpu.memory_space<vmem>>, vector<1x1x8x8xf32>,
    %112 = arith.truncf %108 : vector<8x8xf32> to vector<8x8xbf16>
    %cst_52 = arith.constant dense<0.000000e+00> : vector<8x8xf32>
    %113 = tpu.matmul %112, %93, %cst_52 {dimension_numbers = #tpu.dot_dimension_numbers<[1], [0], [0], [1], [0, 0, 1, 1], [], []>} : vector<8x8xbf16>, vector<8x8xbf16>, vector<8x8xf32> -> vector<8x8xf32>
    %114 = arith.truncf %113 : vector<8x8xf32> to vector<8x8xbf16>
    %115 = vector.extract_strided_slice %20 {offsets = [16, 0], sizes = [8, 32], strides = [1, 1]} : vector<32x32xbf16> to vector<8x32xbf16>
    %cst_53 = arith.constant dense<0.000000e+00> : vector<8x32xf32>
    %116 = tpu.matmul %114, %115, %cst_53 {dimension_numbers = #tpu.dot_dimension_numbers<[1], [0], [0], [1], [0, 0, 1, 1], [], []>} : vector<8x8xbf16>, vector<8x32xbf16>, vector<8x32xf32> -> vector<8x32xf32>
    %117 = arith.addf %85, %116 : vector<8x32xf32>
    %118 = vector.extract_strided_slice %9 {offsets = [0, 24], sizes = [8, 8], strides = [1, 1]} : vector<8x32xf32> to vector<8x8xf32>
    %cst_54 = arith.constant 0.353553385 : f32
    %119 = vector.broadcast %cst_54 : f32 to vector<8x8xf32>
    %120 = arith.mulf %118, %119 : vector<8x8xf32>
    %121 = arith.truncf %120 : vector<8x8xf32> to vector<8x8xbf16>
    %122 = vector.extract_strided_slice %16 {offsets = [0, 24], sizes = [8, 8], strides = [1, 1]} : vector<8x32xf32> to vector<8x8xf32>
    %123 = arith.truncf %122 : vector<8x8xf32> to vector<8x8xbf16>
    %124 = vector.extract_strided_slice %17 {offsets = [0, 24], sizes = [8, 8], strides = [1, 1]} : vector<8x32xf32> to vector<8x8xf32>
    %125 = arith.truncf %124 : vector<8x8xf32> to vector<8x8xbf16>
    %cst_55 = arith.constant dense<0.000000e+00> : vector<8x8xf32>
    %126 = tpu.matmul %121, %123, %cst_55 {dimension_numbers = #tpu.dot_dimension_numbers<[1], [1], [0], [0], [0, 0, 1, 0], [], []>} : vector<8x8xbf16>, vector<8x8xbf16>, vector<8x8xf32> -> vector<8x8xf32>
    %cst_56 = arith.constant 0.000000e+00 : f32
    %127 = vector.broadcast %cst_56 : f32 to vector<8x8xf32>
    %128 = arith.cmpf oeq, %19, %127 : vector<8x8xf32>
    %cst_57 = arith.constant -1.000000e+10 : f32
    %129 = vector.broadcast %cst_57 : f32 to vector<8x8xf32>
    %130 = arith.select %128, %129, %126 : vector<8x8xi1>, vector<8x8xf32>
    %cst_58 = arith.constant dense<0xFF800000> : vector<8xf32>
    %131 = vector.multi_reduction <maximumf>, %130, %cst_58 [1] : vector<8x8xf32> to vector<8xf32>
    %132 = vector.shape_cast %131 : vector<8xf32> to vector<8x1xf32>
    %133 = vector.broadcast %132 : vector<8x1xf32> to vector<8x8xf32>
    %134 = arith.subf %130, %133 : vector<8x8xf32>
    %135 = math.exp %134 : vector<8x8xf32>
    %cst_59 = arith.constant dense<0.000000e+00> : vector<8xf32>
    %136 = vector.multi_reduction <add>, %135, %cst_59 [1] : vector<8x8xf32> to vector<8xf32>
    %137 = vector.shape_cast %136 : vector<8xf32> to vector<8x1xf32>
    %138 = tpu.reciprocal %137 {approx = true} : vector<8x1xf32> -> vector<8x1xf32>
    %139 = vector.broadcast %138 : vector<8x1xf32> to vector<8x8xf32>
    %140 = arith.mulf %135, %139 : vector<8x8xf32>
    %c0_60 = arith.constant 0 : index
    %c3 = arith.constant 3 : index
    %c0_61 = arith.constant 0 : index
    %c0_62 = arith.constant 0 : index
    %141 = vector.load %arg13[%c0_60, %c3, %c0_61, %c0_62] : memref<1x4x8x8xf32, #tpu.memory_space<vmem>>, vector<1x1x8x8xf32>
    %142 = vector.shape_cast %141 : vector<1x1x8x8xf32> to vector<8x8xf32>
    %143 = vector.shape_cast %140 : vector<8x8xf32> to vector<1x1x8x8xf32>
    tpu.vector_store %arg13[%c0_60, %c3, %c0_61, %c0_62], %143 {strides = array<i32>} : memref<1x4x8x8xf32, #tpu.memory_space<vmem>>, vector<1x1x8x8xf32>,
    %144 = arith.truncf %140 : vector<8x8xf32> to vector<8x8xbf16>
    %cst_63 = arith.constant dense<0.000000e+00> : vector<8x8xf32>
    %145 = tpu.matmul %144, %125, %cst_63 {dimension_numbers = #tpu.dot_dimension_numbers<[1], [0], [0], [1], [0, 0, 1, 1], [], []>} : vector<8x8xbf16>, vector<8x8xbf16>, vector<8x8xf32> -> vector<8x8xf32>
    %146 = arith.truncf %145 : vector<8x8xf32> to vector<8x8xbf16>
    %147 = vector.extract_strided_slice %20 {offsets = [24, 0], sizes = [8, 32], strides = [1, 1]} : vector<32x32xbf16> to vector<8x32xbf16>
    %cst_64 = arith.constant dense<0.000000e+00> : vector<8x32xf32>
    %148 = tpu.matmul %146, %147, %cst_64 {dimension_numbers = #tpu.dot_dimension_numbers<[1], [0], [0], [1], [0, 0, 1, 1], [], []>} : vector<8x8xbf16>, vector<8x32xbf16>, vector<8x32xf32> -> vector<8x32xf32>
    %149 = arith.addf %117, %148 : vector<8x32xf32>
    %150 = arith.addf %1, %149 : vector<8x32xf32>
    %c0_65 = arith.constant 0 : index
    %c0_66 = arith.constant 0 : index
    %151 = vector.load %arg9[%c0_65, %c0_66] : memref<1x32xf32, #tpu.memory_space<vmem>>, vector<1x32xf32>
    %152 = vector.broadcast %151 : vector<1x32xf32> to vector<8x32xf32>
    %153 = arith.addf %150, %152 : vector<8x32xf32>
    %c0_67 = arith.constant 0 : index
    %c0_68 = arith.constant 0 : index
    %154 = vector.load %arg10[%c0_67, %c0_68] : memref<1x32xf32, #tpu.memory_space<vmem>>, vector<1x32xf32>
    %c0_69 = arith.constant 0 : index
    %c0_70 = arith.constant 0 : index
    %155 = vector.load %arg11[%c0_69, %c0_70] : memref<1x32xf32, #tpu.memory_space<vmem>>, vector<1x32xf32>
    %cst_71 = arith.constant dense<0.000000e+00> : vector<8xf32>
    %156 = vector.multi_reduction <add>, %153, %cst_71 [1] : vector<8x32xf32> to vector<8xf32>
    %157 = vector.shape_cast %156 : vector<8xf32> to vector<8x1xf32>
    %cst_72 = arith.constant 3.200000e+01 : f32
    %158 = vector.broadcast %cst_72 : f32 to vector<8x1xf32>
    %159 = arith.divf %157, %158 : vector<8x1xf32>
    %160 = vector.broadcast %159 : vector<8x1xf32> to vector<8x32xf32>
    %161 = arith.subf %153, %160 : vector<8x32xf32>
    %162 = arith.mulf %161, %161 : vector<8x32xf32>
    %cst_73 = arith.constant dense<0.000000e+00> : vector<8xf32>
    %163 = vector.multi_reduction <add>, %162, %cst_73 [1] : vector<8x32xf32> to vector<8xf32>
    %164 = vector.shape_cast %163 : vector<8xf32> to vector<8x1xf32>
    %cst_74 = arith.constant 3.200000e+01 : f32
    %165 = vector.broadcast %cst_74 : f32 to vector<8x1xf32>
    %166 = arith.divf %164, %165 : vector<8x1xf32>
    %167 = vector.broadcast %159 : vector<8x1xf32> to vector<8x32xf32>
    %168 = arith.subf %153, %167 : vector<8x32xf32>
    %cst_75 = arith.constant 9.99999974E-6 : f32
    %169 = vector.broadcast %cst_75 : f32 to vector<8x1xf32>
    %170 = arith.addf %166, %169 : vector<8x1xf32>
    %171 = math.rsqrt %170 : vector<8x1xf32>
    %172 = vector.broadcast %171 : vector<8x1xf32> to vector<8x32xf32>
    %173 = arith.mulf %168, %172 : vector<8x32xf32>
    %174 = vector.broadcast %154 : vector<1x32xf32> to vector<8x32xf32>
    %175 = arith.mulf %173, %174 : vector<8x32xf32>
    %176 = vector.broadcast %155 : vector<1x32xf32> to vector<8x32xf32>
    %177 = arith.addf %175, %176 : vector<8x32xf32>
    %c0_76 = arith.constant 0 : index
    %c0_77 = arith.constant 0 : index
    %c0_78 = arith.constant 0 : index
    %178 = vector.load %arg12[%c0_76, %c0_77, %c0_78] : memref<1x8x32xf32, #tpu.memory_space<vmem>>, vector<1x8x32xf32>
    %179 = vector.shape_cast %178 : vector<1x8x32xf32> to vector<8x32xf32>
    %180 = vector.shape_cast %177 : vector<8x32xf32> to vector<1x8x32xf32>
    tpu.vector_store %arg12[%c0_76, %c0_77, %c0_78], %180 {strides = array<i32>} : memref<1x8x32xf32, #tpu.memory_space<vmem>>, vector<1x8x32xf32>,
    return
  }
  func.func @transform_0(%arg0: i32) -> (i32, i32, i32) {
    %c0_i32 = arith.constant 0 : i32
    %c0_i32_0 = arith.constant 0 : i32
    %c0_i32_1 = arith.constant 0 : i32
    return %arg0, %c0_i32, %c0_i32_0 : i32, i32, i32
  }
  func.func @transform_1(%arg0: i32) -> (i32, i32, i32) {
    %c0_i32 = arith.constant 0 : i32
    %c0_i32_0 = arith.constant 0 : i32
    %c0_i32_1 = arith.constant 0 : i32
    return %arg0, %c0_i32, %c0_i32_0 : i32, i32, i32
  }
  func.func @transform_2(%arg0: i32) -> (i32, i32, i32) {
    %c0_i32 = arith.constant 0 : i32
    %c0_i32_0 = arith.constant 0 : i32
    %c0_i32_1 = arith.constant 0 : i32
    return %arg0, %c0_i32, %c0_i32_0 : i32, i32, i32
  }
  func.func @transform_3(%arg0: i32) -> (i32, i32) {
    %c0_i32 = arith.constant 0 : i32
    %c0_i32_0 = arith.constant 0 : i32
    %c0_i32_1 = arith.constant 0 : i32
    return %c0_i32, %c0_i32_0 : i32, i32
  }
  func.func @transform_4(%arg0: i32) -> (i32, i32) {
    %c0_i32 = arith.constant 0 : i32
    %c0_i32_0 = arith.constant 0 : i32
    %c0_i32_1 = arith.constant 0 : i32
    return %c0_i32, %c0_i32_0 : i32, i32
  }
  func.func @transform_5(%arg0: i32) -> (i32, i32) {
    %c0_i32 = arith.constant 0 : i32
    %c0_i32_0 = arith.constant 0 : i32
    %c0_i32_1 = arith.constant 0 : i32
    return %c0_i32, %c0_i32_0 : i32, i32
  }
  func.func @transform_6(%arg0: i32) -> (i32, i32) {
    %c0_i32 = arith.constant 0 : i32
    %c0_i32_0 = arith.constant 0 : i32
    %c0_i32_1 = arith.constant 0 : i32
    return %c0_i32, %c0_i32_0 : i32, i32
  }
  func.func @transform_7(%arg0: i32) -> (i32, i32) {
    %c0_i32 = arith.constant 0 : i32
    %c0_i32_0 = arith.constant 0 : i32
    %c0_i32_1 = arith.constant 0 : i32
    return %c0_i32, %c0_i32_0 : i32, i32
  }
  func.func @transform_8(%arg0: i32) -> (i32, i32) {
    %c0_i32 = arith.constant 0 : i32
    %c0_i32_0 = arith.constant 0 : i32
    %c0_i32_1 = arith.constant 0 : i32
    return %c0_i32, %c0_i32_0 : i32, i32
  }
  func.func @transform_9(%arg0: i32) -> (i32, i32) {
    %c0_i32 = arith.constant 0 : i32
    %c0_i32_0 = arith.constant 0 : i32
    %c0_i32_1 = arith.constant 0 : i32
    return %c0_i32, %c0_i32_0 : i32, i32
  }
  func.func @transform_10(%arg0: i32) -> (i32, i32) {
    %c0_i32 = arith.constant 0 : i32
    %c0_i32_0 = arith.constant 0 : i32
    %c0_i32_1 = arith.constant 0 : i32
    return %c0_i32, %c0_i32_0 : i32, i32
  }
  func.func @transform_11(%arg0: i32) -> (i32, i32, i32) {
    %c0_i32 = arith.constant 0 : i32
    %c0_i32_0 = arith.constant 0 : i32
    %c0_i32_1 = arith.constant 0 : i32
    return %arg0, %c0_i32, %c0_i32_0 : i32, i32, i32
  }
  func.func @transform_12(%arg0: i32) -> (i32, i32, i32, i32) {
    %c0_i32 = arith.constant 0 : i32
    %c0_i32_0 = arith.constant 0 : i32
    %c0_i32_1 = arith.constant 0 : i32
    %c0_i32_2 = arith.constant 0 : i32
    return %arg0, %c0_i32, %c0_i32_0, %c0_i32_1 : i32, i32, i32, i32
  }
}

module attributes {stable_mosaic.version = 11 : i64} {
  func.func @_self_mha_ln_kernel(%arg0: i32, %arg1: memref<1x8x32xf32, #tpu.memory_space<vmem>>, %arg2: memref<1x8x8xf32, #tpu.memory_space<vmem>>, %arg3: memref<32x96xbf16, #tpu.memory_space<vmem>>, %arg4: memref<1x96xf32, #tpu.memory_space<vmem>>, %arg5: memref<32x32xbf16, #tpu.memory_space<vmem>>, %arg6: memref<1x32xf32, #tpu.memory_space<vmem>>, %arg7: memref<1x32xf32, #tpu.memory_space<vmem>>, %arg8: memref<1x32xf32, #tpu.memory_space<vmem>>, %arg9: memref<1x8x32xf32, #tpu.memory_space<vmem>>) attributes {dimension_semantics = [#tpu.dimension_semantics<parallel>], iteration_bounds = array<i64: 2>, scalar_prefetch = 0 : i64, scratch_operands = 0 : i64, tpu.core_type = #tpu.core_type<tc>, window_params = [{transform_indices = @transform_0, window_bounds = array<i64: 1, 8, 32>}, {transform_indices = @transform_1, window_bounds = array<i64: 1, 8, 8>}, {pipeline_mode = #tpu.pipeline_mode<synchronous>, transform_indices = @transform_2, window_bounds = array<i64: 32, 96>}, {pipeline_mode = #tpu.pipeline_mode<synchronous>, transform_indices = @transform_3, window_bounds = array<i64: 1, 96>}, {pipeline_mode = #tpu.pipeline_mode<synchronous>, transform_indices = @transform_4, window_bounds = array<i64: 32, 32>}, {pipeline_mode = #tpu.pipeline_mode<synchronous>, transform_indices = @transform_5, window_bounds = array<i64: 1, 32>}, {pipeline_mode = #tpu.pipeline_mode<synchronous>, transform_indices = @transform_6, window_bounds = array<i64: 1, 32>}, {pipeline_mode = #tpu.pipeline_mode<synchronous>, transform_indices = @transform_7, window_bounds = array<i64: 1, 32>}, {transform_indices = @transform_8, window_bounds = array<i64: 1, 8, 32>}]} {
    %c0 = arith.constant 0 : index
    %c0_0 = arith.constant 0 : index
    %c0_1 = arith.constant 0 : index
    %0 = vector.load %arg1[%c0, %c0_0, %c0_1] : memref<1x8x32xf32, #tpu.memory_space<vmem>>, vector<1x8x32xf32>
    %1 = vector.shape_cast %0 : vector<1x8x32xf32> to vector<8x32xf32>
    %2 = arith.truncf %1 : vector<8x32xf32> to vector<8x32xbf16>
    %c0_2 = arith.constant 0 : index
    %c0_3 = arith.constant 0 : index
    %3 = vector.load %arg3[%c0_2, %c0_3] : memref<32x96xbf16, #tpu.memory_space<vmem>>, vector<32x96xbf16>
    %cst = arith.constant dense<0.000000e+00> : vector<8x96xf32>
    %4 = tpu.matmul %2, %3, %cst {dimension_numbers = #tpu.dot_dimension_numbers<[1], [0], [0], [1], [0, 0, 1, 1], [], []>} : vector<8x32xbf16>, vector<32x96xbf16>, vector<8x96xf32> -> vector<8x96xf32>
    %c0_4 = arith.constant 0 : index
    %c0_5 = arith.constant 0 : index
    %5 = vector.load %arg4[%c0_4, %c0_5] : memref<1x96xf32, #tpu.memory_space<vmem>>, vector<1x96xf32>
    %6 = vector.broadcast %5 : vector<1x96xf32> to vector<8x96xf32>
    %7 = arith.addf %4, %6 : vector<8x96xf32>
    %8 = vector.extract_strided_slice %7 {offsets = [0, 0], sizes = [8, 32], strides = [1, 1]} : vector<8x96xf32> to vector<8x32xf32>
    %9 = vector.extract_strided_slice %7 {offsets = [0, 32], sizes = [8, 32], strides = [1, 1]} : vector<8x96xf32> to vector<8x32xf32>
    %10 = vector.extract_strided_slice %7 {offsets = [0, 64], sizes = [8, 32], strides = [1, 1]} : vector<8x96xf32> to vector<8x32xf32>
    %c0_6 = arith.constant 0 : index
    %c0_7 = arith.constant 0 : index
    %c0_8 = arith.constant 0 : index
    %11 = vector.load %arg2[%c0_6, %c0_7, %c0_8] : memref<1x8x8xf32, #tpu.memory_space<vmem>>, vector<1x8x8xf32>
    %12 = vector.shape_cast %11 : vector<1x8x8xf32> to vector<8x8xf32>
    %c0_9 = arith.constant 0 : index
    %c0_10 = arith.constant 0 : index
    %13 = vector.load %arg5[%c0_9, %c0_10] : memref<32x32xbf16, #tpu.memory_space<vmem>>, vector<32x32xbf16>
    %cst_11 = arith.constant 0.000000e+00 : f32
    %14 = vector.broadcast %cst_11 : f32 to vector<8x32xf32>
    %15 = vector.extract_strided_slice %8 {offsets = [0, 0], sizes = [8, 8], strides = [1, 1]} : vector<8x32xf32> to vector<8x8xf32>
    %cst_12 = arith.constant 0.353553385 : f32
    %16 = vector.broadcast %cst_12 : f32 to vector<8x8xf32>
    %17 = arith.mulf %15, %16 : vector<8x8xf32>
    %18 = arith.truncf %17 : vector<8x8xf32> to vector<8x8xbf16>
    %19 = vector.extract_strided_slice %9 {offsets = [0, 0], sizes = [8, 8], strides = [1, 1]} : vector<8x32xf32> to vector<8x8xf32>
    %20 = arith.truncf %19 : vector<8x8xf32> to vector<8x8xbf16>
    %21 = vector.extract_strided_slice %10 {offsets = [0, 0], sizes = [8, 8], strides = [1, 1]} : vector<8x32xf32> to vector<8x8xf32>
    %22 = arith.truncf %21 : vector<8x8xf32> to vector<8x8xbf16>
    %cst_13 = arith.constant dense<0.000000e+00> : vector<8x8xf32>
    %23 = tpu.matmul %18, %20, %cst_13 {dimension_numbers = #tpu.dot_dimension_numbers<[1], [1], [0], [0], [0, 0, 1, 0], [], []>} : vector<8x8xbf16>, vector<8x8xbf16>, vector<8x8xf32> -> vector<8x8xf32>
    %cst_14 = arith.constant 0.000000e+00 : f32
    %24 = vector.broadcast %cst_14 : f32 to vector<8x8xf32>
    %25 = arith.cmpf oeq, %12, %24 : vector<8x8xf32>
    %cst_15 = arith.constant -1.000000e+10 : f32
    %26 = vector.broadcast %cst_15 : f32 to vector<8x8xf32>
    %27 = arith.select %25, %26, %23 : vector<8x8xi1>, vector<8x8xf32>
    %cst_16 = arith.constant dense<0xFF800000> : vector<8xf32>
    %28 = vector.multi_reduction <maximumf>, %27, %cst_16 [1] : vector<8x8xf32> to vector<8xf32>
    %29 = vector.shape_cast %28 : vector<8xf32> to vector<8x1xf32>
    %30 = vector.broadcast %29 : vector<8x1xf32> to vector<8x8xf32>
    %31 = arith.subf %27, %30 : vector<8x8xf32>
    %32 = math.exp %31 : vector<8x8xf32>
    %cst_17 = arith.constant dense<0.000000e+00> : vector<8xf32>
    %33 = vector.multi_reduction <add>, %32, %cst_17 [1] : vector<8x8xf32> to vector<8xf32>
    %34 = vector.shape_cast %33 : vector<8xf32> to vector<8x1xf32>
    %35 = tpu.reciprocal %34 {approx = true} : vector<8x1xf32> -> vector<8x1xf32>
    %36 = vector.broadcast %35 : vector<8x1xf32> to vector<8x8xf32>
    %37 = arith.mulf %32, %36 : vector<8x8xf32>
    %38 = arith.truncf %37 : vector<8x8xf32> to vector<8x8xbf16>
    %cst_18 = arith.constant dense<0.000000e+00> : vector<8x8xf32>
    %39 = tpu.matmul %38, %22, %cst_18 {dimension_numbers = #tpu.dot_dimension_numbers<[1], [0], [0], [1], [0, 0, 1, 1], [], []>} : vector<8x8xbf16>, vector<8x8xbf16>, vector<8x8xf32> -> vector<8x8xf32>
    %40 = arith.truncf %39 : vector<8x8xf32> to vector<8x8xbf16>
    %41 = vector.extract_strided_slice %13 {offsets = [0, 0], sizes = [8, 32], strides = [1, 1]} : vector<32x32xbf16> to vector<8x32xbf16>
    %cst_19 = arith.constant dense<0.000000e+00> : vector<8x32xf32>
    %42 = tpu.matmul %40, %41, %cst_19 {dimension_numbers = #tpu.dot_dimension_numbers<[1], [0], [0], [1], [0, 0, 1, 1], [], []>} : vector<8x8xbf16>, vector<8x32xbf16>, vector<8x32xf32> -> vector<8x32xf32>
    %43 = arith.addf %14, %42 : vector<8x32xf32>
    %44 = vector.extract_strided_slice %8 {offsets = [0, 8], sizes = [8, 8], strides = [1, 1]} : vector<8x32xf32> to vector<8x8xf32>
    %cst_20 = arith.constant 0.353553385 : f32
    %45 = vector.broadcast %cst_20 : f32 to vector<8x8xf32>
    %46 = arith.mulf %44, %45 : vector<8x8xf32>
    %47 = arith.truncf %46 : vector<8x8xf32> to vector<8x8xbf16>
    %48 = vector.extract_strided_slice %9 {offsets = [0, 8], sizes = [8, 8], strides = [1, 1]} : vector<8x32xf32> to vector<8x8xf32>
    %49 = arith.truncf %48 : vector<8x8xf32> to vector<8x8xbf16>
    %50 = vector.extract_strided_slice %10 {offsets = [0, 8], sizes = [8, 8], strides = [1, 1]} : vector<8x32xf32> to vector<8x8xf32>
    %51 = arith.truncf %50 : vector<8x8xf32> to vector<8x8xbf16>
    %cst_21 = arith.constant dense<0.000000e+00> : vector<8x8xf32>
    %52 = tpu.matmul %47, %49, %cst_21 {dimension_numbers = #tpu.dot_dimension_numbers<[1], [1], [0], [0], [0, 0, 1, 0], [], []>} : vector<8x8xbf16>, vector<8x8xbf16>, vector<8x8xf32> -> vector<8x8xf32>
    %cst_22 = arith.constant 0.000000e+00 : f32
    %53 = vector.broadcast %cst_22 : f32 to vector<8x8xf32>
    %54 = arith.cmpf oeq, %12, %53 : vector<8x8xf32>
    %cst_23 = arith.constant -1.000000e+10 : f32
    %55 = vector.broadcast %cst_23 : f32 to vector<8x8xf32>
    %56 = arith.select %54, %55, %52 : vector<8x8xi1>, vector<8x8xf32>
    %cst_24 = arith.constant dense<0xFF800000> : vector<8xf32>
    %57 = vector.multi_reduction <maximumf>, %56, %cst_24 [1] : vector<8x8xf32> to vector<8xf32>
    %58 = vector.shape_cast %57 : vector<8xf32> to vector<8x1xf32>
    %59 = vector.broadcast %58 : vector<8x1xf32> to vector<8x8xf32>
    %60 = arith.subf %56, %59 : vector<8x8xf32>
    %61 = math.exp %60 : vector<8x8xf32>
    %cst_25 = arith.constant dense<0.000000e+00> : vector<8xf32>
    %62 = vector.multi_reduction <add>, %61, %cst_25 [1] : vector<8x8xf32> to vector<8xf32>
    %63 = vector.shape_cast %62 : vector<8xf32> to vector<8x1xf32>
    %64 = tpu.reciprocal %63 {approx = true} : vector<8x1xf32> -> vector<8x1xf32>
    %65 = vector.broadcast %64 : vector<8x1xf32> to vector<8x8xf32>
    %66 = arith.mulf %61, %65 : vector<8x8xf32>
    %67 = arith.truncf %66 : vector<8x8xf32> to vector<8x8xbf16>
    %cst_26 = arith.constant dense<0.000000e+00> : vector<8x8xf32>
    %68 = tpu.matmul %67, %51, %cst_26 {dimension_numbers = #tpu.dot_dimension_numbers<[1], [0], [0], [1], [0, 0, 1, 1], [], []>} : vector<8x8xbf16>, vector<8x8xbf16>, vector<8x8xf32> -> vector<8x8xf32>
    %69 = arith.truncf %68 : vector<8x8xf32> to vector<8x8xbf16>
    %70 = vector.extract_strided_slice %13 {offsets = [8, 0], sizes = [8, 32], strides = [1, 1]} : vector<32x32xbf16> to vector<8x32xbf16>
    %cst_27 = arith.constant dense<0.000000e+00> : vector<8x32xf32>
    %71 = tpu.matmul %69, %70, %cst_27 {dimension_numbers = #tpu.dot_dimension_numbers<[1], [0], [0], [1], [0, 0, 1, 1], [], []>} : vector<8x8xbf16>, vector<8x32xbf16>, vector<8x32xf32> -> vector<8x32xf32>
    %72 = arith.addf %43, %71 : vector<8x32xf32>
    %73 = vector.extract_strided_slice %8 {offsets = [0, 16], sizes = [8, 8], strides = [1, 1]} : vector<8x32xf32> to vector<8x8xf32>
    %cst_28 = arith.constant 0.353553385 : f32
    %74 = vector.broadcast %cst_28 : f32 to vector<8x8xf32>
    %75 = arith.mulf %73, %74 : vector<8x8xf32>
    %76 = arith.truncf %75 : vector<8x8xf32> to vector<8x8xbf16>
    %77 = vector.extract_strided_slice %9 {offsets = [0, 16], sizes = [8, 8], strides = [1, 1]} : vector<8x32xf32> to vector<8x8xf32>
    %78 = arith.truncf %77 : vector<8x8xf32> to vector<8x8xbf16>
    %79 = vector.extract_strided_slice %10 {offsets = [0, 16], sizes = [8, 8], strides = [1, 1]} : vector<8x32xf32> to vector<8x8xf32>
    %80 = arith.truncf %79 : vector<8x8xf32> to vector<8x8xbf16>
    %cst_29 = arith.constant dense<0.000000e+00> : vector<8x8xf32>
    %81 = tpu.matmul %76, %78, %cst_29 {dimension_numbers = #tpu.dot_dimension_numbers<[1], [1], [0], [0], [0, 0, 1, 0], [], []>} : vector<8x8xbf16>, vector<8x8xbf16>, vector<8x8xf32> -> vector<8x8xf32>
    %cst_30 = arith.constant 0.000000e+00 : f32
    %82 = vector.broadcast %cst_30 : f32 to vector<8x8xf32>
    %83 = arith.cmpf oeq, %12, %82 : vector<8x8xf32>
    %cst_31 = arith.constant -1.000000e+10 : f32
    %84 = vector.broadcast %cst_31 : f32 to vector<8x8xf32>
    %85 = arith.select %83, %84, %81 : vector<8x8xi1>, vector<8x8xf32>
    %cst_32 = arith.constant dense<0xFF800000> : vector<8xf32>
    %86 = vector.multi_reduction <maximumf>, %85, %cst_32 [1] : vector<8x8xf32> to vector<8xf32>
    %87 = vector.shape_cast %86 : vector<8xf32> to vector<8x1xf32>
    %88 = vector.broadcast %87 : vector<8x1xf32> to vector<8x8xf32>
    %89 = arith.subf %85, %88 : vector<8x8xf32>
    %90 = math.exp %89 : vector<8x8xf32>
    %cst_33 = arith.constant dense<0.000000e+00> : vector<8xf32>
    %91 = vector.multi_reduction <add>, %90, %cst_33 [1] : vector<8x8xf32> to vector<8xf32>
    %92 = vector.shape_cast %91 : vector<8xf32> to vector<8x1xf32>
    %93 = tpu.reciprocal %92 {approx = true} : vector<8x1xf32> -> vector<8x1xf32>
    %94 = vector.broadcast %93 : vector<8x1xf32> to vector<8x8xf32>
    %95 = arith.mulf %90, %94 : vector<8x8xf32>
    %96 = arith.truncf %95 : vector<8x8xf32> to vector<8x8xbf16>
    %cst_34 = arith.constant dense<0.000000e+00> : vector<8x8xf32>
    %97 = tpu.matmul %96, %80, %cst_34 {dimension_numbers = #tpu.dot_dimension_numbers<[1], [0], [0], [1], [0, 0, 1, 1], [], []>} : vector<8x8xbf16>, vector<8x8xbf16>, vector<8x8xf32> -> vector<8x8xf32>
    %98 = arith.truncf %97 : vector<8x8xf32> to vector<8x8xbf16>
    %99 = vector.extract_strided_slice %13 {offsets = [16, 0], sizes = [8, 32], strides = [1, 1]} : vector<32x32xbf16> to vector<8x32xbf16>
    %cst_35 = arith.constant dense<0.000000e+00> : vector<8x32xf32>
    %100 = tpu.matmul %98, %99, %cst_35 {dimension_numbers = #tpu.dot_dimension_numbers<[1], [0], [0], [1], [0, 0, 1, 1], [], []>} : vector<8x8xbf16>, vector<8x32xbf16>, vector<8x32xf32> -> vector<8x32xf32>
    %101 = arith.addf %72, %100 : vector<8x32xf32>
    %102 = vector.extract_strided_slice %8 {offsets = [0, 24], sizes = [8, 8], strides = [1, 1]} : vector<8x32xf32> to vector<8x8xf32>
    %cst_36 = arith.constant 0.353553385 : f32
    %103 = vector.broadcast %cst_36 : f32 to vector<8x8xf32>
    %104 = arith.mulf %102, %103 : vector<8x8xf32>
    %105 = arith.truncf %104 : vector<8x8xf32> to vector<8x8xbf16>
    %106 = vector.extract_strided_slice %9 {offsets = [0, 24], sizes = [8, 8], strides = [1, 1]} : vector<8x32xf32> to vector<8x8xf32>
    %107 = arith.truncf %106 : vector<8x8xf32> to vector<8x8xbf16>
    %108 = vector.extract_strided_slice %10 {offsets = [0, 24], sizes = [8, 8], strides = [1, 1]} : vector<8x32xf32> to vector<8x8xf32>
    %109 = arith.truncf %108 : vector<8x8xf32> to vector<8x8xbf16>
    %cst_37 = arith.constant dense<0.000000e+00> : vector<8x8xf32>
    %110 = tpu.matmul %105, %107, %cst_37 {dimension_numbers = #tpu.dot_dimension_numbers<[1], [1], [0], [0], [0, 0, 1, 0], [], []>} : vector<8x8xbf16>, vector<8x8xbf16>, vector<8x8xf32> -> vector<8x8xf32>
    %cst_38 = arith.constant 0.000000e+00 : f32
    %111 = vector.broadcast %cst_38 : f32 to vector<8x8xf32>
    %112 = arith.cmpf oeq, %12, %111 : vector<8x8xf32>
    %cst_39 = arith.constant -1.000000e+10 : f32
    %113 = vector.broadcast %cst_39 : f32 to vector<8x8xf32>
    %114 = arith.select %112, %113, %110 : vector<8x8xi1>, vector<8x8xf32>
    %cst_40 = arith.constant dense<0xFF800000> : vector<8xf32>
    %115 = vector.multi_reduction <maximumf>, %114, %cst_40 [1] : vector<8x8xf32> to vector<8xf32>
    %116 = vector.shape_cast %115 : vector<8xf32> to vector<8x1xf32>
    %117 = vector.broadcast %116 : vector<8x1xf32> to vector<8x8xf32>
    %118 = arith.subf %114, %117 : vector<8x8xf32>
    %119 = math.exp %118 : vector<8x8xf32>
    %cst_41 = arith.constant dense<0.000000e+00> : vector<8xf32>
    %120 = vector.multi_reduction <add>, %119, %cst_41 [1] : vector<8x8xf32> to vector<8xf32>
    %121 = vector.shape_cast %120 : vector<8xf32> to vector<8x1xf32>
    %122 = tpu.reciprocal %121 {approx = true} : vector<8x1xf32> -> vector<8x1xf32>
    %123 = vector.broadcast %122 : vector<8x1xf32> to vector<8x8xf32>
    %124 = arith.mulf %119, %123 : vector<8x8xf32>
    %125 = arith.truncf %124 : vector<8x8xf32> to vector<8x8xbf16>
    %cst_42 = arith.constant dense<0.000000e+00> : vector<8x8xf32>
    %126 = tpu.matmul %125, %109, %cst_42 {dimension_numbers = #tpu.dot_dimension_numbers<[1], [0], [0], [1], [0, 0, 1, 1], [], []>} : vector<8x8xbf16>, vector<8x8xbf16>, vector<8x8xf32> -> vector<8x8xf32>
    %127 = arith.truncf %126 : vector<8x8xf32> to vector<8x8xbf16>
    %128 = vector.extract_strided_slice %13 {offsets = [24, 0], sizes = [8, 32], strides = [1, 1]} : vector<32x32xbf16> to vector<8x32xbf16>
    %cst_43 = arith.constant dense<0.000000e+00> : vector<8x32xf32>
    %129 = tpu.matmul %127, %128, %cst_43 {dimension_numbers = #tpu.dot_dimension_numbers<[1], [0], [0], [1], [0, 0, 1, 1], [], []>} : vector<8x8xbf16>, vector<8x32xbf16>, vector<8x32xf32> -> vector<8x32xf32>
    %130 = arith.addf %101, %129 : vector<8x32xf32>
    %131 = arith.addf %1, %130 : vector<8x32xf32>
    %c0_44 = arith.constant 0 : index
    %c0_45 = arith.constant 0 : index
    %132 = vector.load %arg6[%c0_44, %c0_45] : memref<1x32xf32, #tpu.memory_space<vmem>>, vector<1x32xf32>
    %133 = vector.broadcast %132 : vector<1x32xf32> to vector<8x32xf32>
    %134 = arith.addf %131, %133 : vector<8x32xf32>
    %c0_46 = arith.constant 0 : index
    %c0_47 = arith.constant 0 : index
    %135 = vector.load %arg7[%c0_46, %c0_47] : memref<1x32xf32, #tpu.memory_space<vmem>>, vector<1x32xf32>
    %c0_48 = arith.constant 0 : index
    %c0_49 = arith.constant 0 : index
    %136 = vector.load %arg8[%c0_48, %c0_49] : memref<1x32xf32, #tpu.memory_space<vmem>>, vector<1x32xf32>
    %cst_50 = arith.constant dense<0.000000e+00> : vector<8xf32>
    %137 = vector.multi_reduction <add>, %134, %cst_50 [1] : vector<8x32xf32> to vector<8xf32>
    %138 = vector.shape_cast %137 : vector<8xf32> to vector<8x1xf32>
    %cst_51 = arith.constant 3.200000e+01 : f32
    %139 = vector.broadcast %cst_51 : f32 to vector<8x1xf32>
    %140 = arith.divf %138, %139 : vector<8x1xf32>
    %141 = vector.broadcast %140 : vector<8x1xf32> to vector<8x32xf32>
    %142 = arith.subf %134, %141 : vector<8x32xf32>
    %143 = arith.mulf %142, %142 : vector<8x32xf32>
    %cst_52 = arith.constant dense<0.000000e+00> : vector<8xf32>
    %144 = vector.multi_reduction <add>, %143, %cst_52 [1] : vector<8x32xf32> to vector<8xf32>
    %145 = vector.shape_cast %144 : vector<8xf32> to vector<8x1xf32>
    %cst_53 = arith.constant 3.200000e+01 : f32
    %146 = vector.broadcast %cst_53 : f32 to vector<8x1xf32>
    %147 = arith.divf %145, %146 : vector<8x1xf32>
    %148 = vector.broadcast %140 : vector<8x1xf32> to vector<8x32xf32>
    %149 = arith.subf %134, %148 : vector<8x32xf32>
    %cst_54 = arith.constant 9.99999974E-6 : f32
    %150 = vector.broadcast %cst_54 : f32 to vector<8x1xf32>
    %151 = arith.addf %147, %150 : vector<8x1xf32>
    %152 = math.rsqrt %151 : vector<8x1xf32>
    %153 = vector.broadcast %152 : vector<8x1xf32> to vector<8x32xf32>
    %154 = arith.mulf %149, %153 : vector<8x32xf32>
    %155 = vector.broadcast %135 : vector<1x32xf32> to vector<8x32xf32>
    %156 = arith.mulf %154, %155 : vector<8x32xf32>
    %157 = vector.broadcast %136 : vector<1x32xf32> to vector<8x32xf32>
    %158 = arith.addf %156, %157 : vector<8x32xf32>
    %c0_55 = arith.constant 0 : index
    %c0_56 = arith.constant 0 : index
    %c0_57 = arith.constant 0 : index
    %159 = vector.load %arg9[%c0_55, %c0_56, %c0_57] : memref<1x8x32xf32, #tpu.memory_space<vmem>>, vector<1x8x32xf32>
    %160 = vector.shape_cast %159 : vector<1x8x32xf32> to vector<8x32xf32>
    %161 = vector.shape_cast %158 : vector<8x32xf32> to vector<1x8x32xf32>
    tpu.vector_store %arg9[%c0_55, %c0_56, %c0_57], %161 {strides = array<i32>} : memref<1x8x32xf32, #tpu.memory_space<vmem>>, vector<1x8x32xf32>,
    return
  }
  func.func @transform_0(%arg0: i32) -> (i32, i32, i32) {
    %c0_i32 = arith.constant 0 : i32
    %c0_i32_0 = arith.constant 0 : i32
    %c0_i32_1 = arith.constant 0 : i32
    return %arg0, %c0_i32, %c0_i32_0 : i32, i32, i32
  }
  func.func @transform_1(%arg0: i32) -> (i32, i32, i32) {
    %c0_i32 = arith.constant 0 : i32
    %c0_i32_0 = arith.constant 0 : i32
    %c0_i32_1 = arith.constant 0 : i32
    return %arg0, %c0_i32, %c0_i32_0 : i32, i32, i32
  }
  func.func @transform_2(%arg0: i32) -> (i32, i32) {
    %c0_i32 = arith.constant 0 : i32
    %c0_i32_0 = arith.constant 0 : i32
    %c0_i32_1 = arith.constant 0 : i32
    return %c0_i32, %c0_i32_0 : i32, i32
  }
  func.func @transform_3(%arg0: i32) -> (i32, i32) {
    %c0_i32 = arith.constant 0 : i32
    %c0_i32_0 = arith.constant 0 : i32
    %c0_i32_1 = arith.constant 0 : i32
    return %c0_i32, %c0_i32_0 : i32, i32
  }
  func.func @transform_4(%arg0: i32) -> (i32, i32) {
    %c0_i32 = arith.constant 0 : i32
    %c0_i32_0 = arith.constant 0 : i32
    %c0_i32_1 = arith.constant 0 : i32
    return %c0_i32, %c0_i32_0 : i32, i32
  }
  func.func @transform_5(%arg0: i32) -> (i32, i32) {
    %c0_i32 = arith.constant 0 : i32
    %c0_i32_0 = arith.constant 0 : i32
    %c0_i32_1 = arith.constant 0 : i32
    return %c0_i32, %c0_i32_0 : i32, i32
  }
  func.func @transform_6(%arg0: i32) -> (i32, i32) {
    %c0_i32 = arith.constant 0 : i32
    %c0_i32_0 = arith.constant 0 : i32
    %c0_i32_1 = arith.constant 0 : i32
    return %c0_i32, %c0_i32_0 : i32, i32
  }
  func.func @transform_7(%arg0: i32) -> (i32, i32) {
    %c0_i32 = arith.constant 0 : i32
    %c0_i32_0 = arith.constant 0 : i32
    %c0_i32_1 = arith.constant 0 : i32
    return %c0_i32, %c0_i32_0 : i32, i32
  }
  func.func @transform_8(%arg0: i32) -> (i32, i32, i32) {
    %c0_i32 = arith.constant 0 : i32
    %c0_i32_0 = arith.constant 0 : i32
    %c0_i32_1 = arith.constant 0 : i32
    return %arg0, %c0_i32, %c0_i32_0 : i32, i32, i32
  }
}

module attributes {stable_mosaic.version = 11 : i64} {
  func.func @_ffn_ln_kernel(%arg0: i32, %arg1: memref<1x8x32xf32, #tpu.memory_space<vmem>>, %arg2: memref<32x64xbf16, #tpu.memory_space<vmem>>, %arg3: memref<1x64xf32, #tpu.memory_space<vmem>>, %arg4: memref<64x32xbf16, #tpu.memory_space<vmem>>, %arg5: memref<1x32xf32, #tpu.memory_space<vmem>>, %arg6: memref<1x32xf32, #tpu.memory_space<vmem>>, %arg7: memref<1x32xf32, #tpu.memory_space<vmem>>, %arg8: memref<1x8x32xf32, #tpu.memory_space<vmem>>) attributes {dimension_semantics = [#tpu.dimension_semantics<parallel>], iteration_bounds = array<i64: 2>, scalar_prefetch = 0 : i64, scratch_operands = 0 : i64, tpu.core_type = #tpu.core_type<tc>, window_params = [{transform_indices = @transform_0, window_bounds = array<i64: 1, 8, 32>}, {pipeline_mode = #tpu.pipeline_mode<synchronous>, transform_indices = @transform_1, window_bounds = array<i64: 32, 64>}, {pipeline_mode = #tpu.pipeline_mode<synchronous>, transform_indices = @transform_2, window_bounds = array<i64: 1, 64>}, {pipeline_mode = #tpu.pipeline_mode<synchronous>, transform_indices = @transform_3, window_bounds = array<i64: 64, 32>}, {pipeline_mode = #tpu.pipeline_mode<synchronous>, transform_indices = @transform_4, window_bounds = array<i64: 1, 32>}, {pipeline_mode = #tpu.pipeline_mode<synchronous>, transform_indices = @transform_5, window_bounds = array<i64: 1, 32>}, {pipeline_mode = #tpu.pipeline_mode<synchronous>, transform_indices = @transform_6, window_bounds = array<i64: 1, 32>}, {transform_indices = @transform_7, window_bounds = array<i64: 1, 8, 32>}]} {
    %c0 = arith.constant 0 : index
    %c0_0 = arith.constant 0 : index
    %c0_1 = arith.constant 0 : index
    %0 = vector.load %arg1[%c0, %c0_0, %c0_1] : memref<1x8x32xf32, #tpu.memory_space<vmem>>, vector<1x8x32xf32>
    %1 = vector.shape_cast %0 : vector<1x8x32xf32> to vector<8x32xf32>
    %2 = arith.truncf %1 : vector<8x32xf32> to vector<8x32xbf16>
    %c0_2 = arith.constant 0 : index
    %c0_3 = arith.constant 0 : index
    %3 = vector.load %arg2[%c0_2, %c0_3] : memref<32x64xbf16, #tpu.memory_space<vmem>>, vector<32x64xbf16>
    %cst = arith.constant dense<0.000000e+00> : vector<8x64xf32>
    %4 = tpu.matmul %2, %3, %cst {dimension_numbers = #tpu.dot_dimension_numbers<[1], [0], [0], [1], [0, 0, 1, 1], [], []>} : vector<8x32xbf16>, vector<32x64xbf16>, vector<8x64xf32> -> vector<8x64xf32>
    %c0_4 = arith.constant 0 : index
    %c0_5 = arith.constant 0 : index
    %5 = vector.load %arg3[%c0_4, %c0_5] : memref<1x64xf32, #tpu.memory_space<vmem>>, vector<1x64xf32>
    %6 = vector.broadcast %5 : vector<1x64xf32> to vector<8x64xf32>
    %7 = arith.addf %4, %6 : vector<8x64xf32>
    %cst_6 = arith.constant 0.000000e+00 : f32
    %8 = vector.broadcast %cst_6 : f32 to vector<8x64xf32>
    %9 = arith.maximumf %7, %8 : vector<8x64xf32>
    %10 = arith.truncf %9 : vector<8x64xf32> to vector<8x64xbf16>
    %c0_7 = arith.constant 0 : index
    %c0_8 = arith.constant 0 : index
    %11 = vector.load %arg4[%c0_7, %c0_8] : memref<64x32xbf16, #tpu.memory_space<vmem>>, vector<64x32xbf16>
    %cst_9 = arith.constant dense<0.000000e+00> : vector<8x32xf32>
    %12 = tpu.matmul %10, %11, %cst_9 {dimension_numbers = #tpu.dot_dimension_numbers<[1], [0], [0], [1], [0, 0, 1, 1], [], []>} : vector<8x64xbf16>, vector<64x32xbf16>, vector<8x32xf32> -> vector<8x32xf32>
    %c0_10 = arith.constant 0 : index
    %c0_11 = arith.constant 0 : index
    %13 = vector.load %arg5[%c0_10, %c0_11] : memref<1x32xf32, #tpu.memory_space<vmem>>, vector<1x32xf32>
    %14 = vector.broadcast %13 : vector<1x32xf32> to vector<8x32xf32>
    %15 = arith.addf %12, %14 : vector<8x32xf32>
    %16 = arith.addf %1, %15 : vector<8x32xf32>
    %c0_12 = arith.constant 0 : index
    %c0_13 = arith.constant 0 : index
    %17 = vector.load %arg6[%c0_12, %c0_13] : memref<1x32xf32, #tpu.memory_space<vmem>>, vector<1x32xf32>
    %c0_14 = arith.constant 0 : index
    %c0_15 = arith.constant 0 : index
    %18 = vector.load %arg7[%c0_14, %c0_15] : memref<1x32xf32, #tpu.memory_space<vmem>>, vector<1x32xf32>
    %cst_16 = arith.constant dense<0.000000e+00> : vector<8xf32>
    %19 = vector.multi_reduction <add>, %16, %cst_16 [1] : vector<8x32xf32> to vector<8xf32>
    %20 = vector.shape_cast %19 : vector<8xf32> to vector<8x1xf32>
    %cst_17 = arith.constant 3.200000e+01 : f32
    %21 = vector.broadcast %cst_17 : f32 to vector<8x1xf32>
    %22 = arith.divf %20, %21 : vector<8x1xf32>
    %23 = vector.broadcast %22 : vector<8x1xf32> to vector<8x32xf32>
    %24 = arith.subf %16, %23 : vector<8x32xf32>
    %25 = arith.mulf %24, %24 : vector<8x32xf32>
    %cst_18 = arith.constant dense<0.000000e+00> : vector<8xf32>
    %26 = vector.multi_reduction <add>, %25, %cst_18 [1] : vector<8x32xf32> to vector<8xf32>
    %27 = vector.shape_cast %26 : vector<8xf32> to vector<8x1xf32>
    %cst_19 = arith.constant 3.200000e+01 : f32
    %28 = vector.broadcast %cst_19 : f32 to vector<8x1xf32>
    %29 = arith.divf %27, %28 : vector<8x1xf32>
    %30 = vector.broadcast %22 : vector<8x1xf32> to vector<8x32xf32>
    %31 = arith.subf %16, %30 : vector<8x32xf32>
    %cst_20 = arith.constant 9.99999974E-6 : f32
    %32 = vector.broadcast %cst_20 : f32 to vector<8x1xf32>
    %33 = arith.addf %29, %32 : vector<8x1xf32>
    %34 = math.rsqrt %33 : vector<8x1xf32>
    %35 = vector.broadcast %34 : vector<8x1xf32> to vector<8x32xf32>
    %36 = arith.mulf %31, %35 : vector<8x32xf32>
    %37 = vector.broadcast %17 : vector<1x32xf32> to vector<8x32xf32>
    %38 = arith.mulf %36, %37 : vector<8x32xf32>
    %39 = vector.broadcast %18 : vector<1x32xf32> to vector<8x32xf32>
    %40 = arith.addf %38, %39 : vector<8x32xf32>
    %c0_21 = arith.constant 0 : index
    %c0_22 = arith.constant 0 : index
    %c0_23 = arith.constant 0 : index
    %41 = vector.load %arg8[%c0_21, %c0_22, %c0_23] : memref<1x8x32xf32, #tpu.memory_space<vmem>>, vector<1x8x32xf32>
    %42 = vector.shape_cast %41 : vector<1x8x32xf32> to vector<8x32xf32>
    %43 = vector.shape_cast %40 : vector<8x32xf32> to vector<1x8x32xf32>
    tpu.vector_store %arg8[%c0_21, %c0_22, %c0_23], %43 {strides = array<i32>} : memref<1x8x32xf32, #tpu.memory_space<vmem>>, vector<1x8x32xf32>,
    return
  }
  func.func @transform_0(%arg0: i32) -> (i32, i32, i32) {
    %c0_i32 = arith.constant 0 : i32
    %c0_i32_0 = arith.constant 0 : i32
    %c0_i32_1 = arith.constant 0 : i32
    return %arg0, %c0_i32, %c0_i32_0 : i32, i32, i32
  }
  func.func @transform_1(%arg0: i32) -> (i32, i32) {
    %c0_i32 = arith.constant 0 : i32
    %c0_i32_0 = arith.constant 0 : i32
    %c0_i32_1 = arith.constant 0 : i32
    return %c0_i32, %c0_i32_0 : i32, i32
  }
  func.func @transform_2(%arg0: i32) -> (i32, i32) {
    %c0_i32 = arith.constant 0 : i32
    %c0_i32_0 = arith.constant 0 : i32
    %c0_i32_1 = arith.constant 0 : i32
    return %c0_i32, %c0_i32_0 : i32, i32
  }
  func.func @transform_3(%arg0: i32) -> (i32, i32) {
    %c0_i32 = arith.constant 0 : i32
    %c0_i32_0 = arith.constant 0 : i32
    %c0_i32_1 = arith.constant 0 : i32
    return %c0_i32, %c0_i32_0 : i32, i32
  }
  func.func @transform_4(%arg0: i32) -> (i32, i32) {
    %c0_i32 = arith.constant 0 : i32
    %c0_i32_0 = arith.constant 0 : i32
    %c0_i32_1 = arith.constant 0 : i32
    return %c0_i32, %c0_i32_0 : i32, i32
  }
  func.func @transform_5(%arg0: i32) -> (i32, i32) {
    %c0_i32 = arith.constant 0 : i32
    %c0_i32_0 = arith.constant 0 : i32
    %c0_i32_1 = arith.constant 0 : i32
    return %c0_i32, %c0_i32_0 : i32, i32
  }
  func.func @transform_6(%arg0: i32) -> (i32, i32) {
    %c0_i32 = arith.constant 0 : i32
    %c0_i32_0 = arith.constant 0 : i32
    %c0_i32_1 = arith.constant 0 : i32
    return %c0_i32, %c0_i32_0 : i32, i32
  }
  func.func @transform_7(%arg0: i32) -> (i32, i32, i32) {
    %c0_i32 = arith.constant 0 : i32
    %c0_i32_0 = arith.constant 0 : i32
    %c0_i32_1 = arith.constant 0 : i32
    return %arg0, %c0_i32, %c0_i32_0 : i32, i32, i32
  }
}

</mosaic_0001>

<llo_original>
// kernel: decoder_layer.5
$region0: #{decoder_layer.5}
  #allocation0 [shape = 'u32[]', space=smem, size = 0x4, offset = 0x4, fixed_abs, tag = 'smem constant byte address 0x4 - core index']
  #allocation1 [shape = 'u32[72,128]{1,0:T(1,128)}', space=vmem, size = 0x9000, scoped, tag = 'internal scratch']
  %s0 = inlined_call_operand.vmem [shape: f32[2,8,32], index: 0, kind: input, shape index: {}]
  %s1 = inlined_call_operand.vmem [shape: bf16[32,64], index: 1, kind: input, shape index: {}]
  %s2 = inlined_call_operand.vmem [shape: f32[1,64], index: 2, kind: input, shape index: {}]
  %s3 = inlined_call_operand.vmem [shape: bf16[64,32], index: 3, kind: input, shape index: {}]
  %s4 = inlined_call_operand.vmem [shape: f32[1,32], index: 4, kind: input, shape index: {}]
  %s5 = inlined_call_operand.vmem [shape: f32[1,32], index: 5, kind: input, shape index: {}]
  %s6 = inlined_call_operand.vmem [shape: f32[1,32], index: 6, kind: input, shape index: {}]
  %s7 = inlined_call_operand.hbm [shape: f32[2,8,32], index: 7, kind: output, shape index: {}]
  %s8 = sld [smem:[#allocation0]]
  $region61: #{decoder_layer.5} parent=0
    _
  %s10 = ssub.s32 1, %s8
  %s11 = scalar_select 0, %s10, %s8
  $region1: #{decoder_layer.5} parent=0
    #allocation2 [shape = 'u8[8192]{0}', space=vmem, size = 0x2000, scoped, tag = 'output window, operand 0']
    #allocation3 [shape = 's32[2]{0}', space=sflag, size = 0x8, scoped, tag = 'scoped memory for decoder_layer.5']
    %12 = vsyncpa [#allocation3], 0
    %s13 = scalar_lea.sflag [#allocation3], 1
    %14 = vsyncpa %s13, 0
    loop: start=0, step=1, limit=4
    $region2: #{decoder_layer.5} parent=1 // loop_pre_header
      _
    $region3: #{decoder_layer.5} parent=1 // loop_header
      %s16 = sphi 0, %s20
      %p17 = scmp.ge.s32.totalorder %s16, 4
      %s26 = sphi 0, %s28
      %s29 = sphi 0, %s26
      %s30 = sphi 0, %s29
      %s46 = sphi 0, %s30
      %s50 = sphi 0, %s50
      %s52 = sphi 0, %s50
      %s53 = sphi 0, %s52
      %s67 = sphi 0, %s53
      %s71 = sphi 0, %s71
      %s73 = sphi 0, %s71
      %s74 = sphi 0, %s73
      %s88 = sphi 0, %s74
      %s92 = sphi 0, %s92
      %s94 = sphi 0, %s92
      %s95 = sphi 0, %s94
      %s109 = sphi 0, %s95
      %s113 = sphi 0, %s113
      %s115 = sphi 0, %s113
      %s116 = sphi 0, %s115
      %s130 = sphi 0, %s116
      %s134 = sphi 0, %s134
      %s136 = sphi 0, %s134
      %s137 = sphi 0, %s136
      %s151 = sphi 0, %s137
      %s155 = sphi 0, %s155
      %s157 = sphi 0, %s155
      %s158 = sphi 0, %s157
      %s172 = sphi 0, %s158
      %s178 = sphi 0, %s180
      %s181 = sphi 0, %s178
      %s182 = sphi 0, %s181
      %s198 = sphi 0, %s182
    $region4: #{decoder_layer.5} parent=1 // loop_header_branch
      %19 = sbr.rel (%p17) target = $region8
    $region5: #{decoder_layer.5} parent=1 // loop_body
      %s21 = ssub.s32 %s16, 1
      %s22 = ssub.s32 %s16, 2
      %s23 = sadd.s32 %s16, 1
      %s24 = ssub.s32 %s16, %s23
      %p25 = scmp.eq.s32.totalorder %s24, 0
      %s27 = sadd.s32 %s26, 1
      %s28 = scalar_select %p25, %s26, %s27
      %p31 = pneg %p25
      %p32 = scmp.eq.s32.totalorder %s16, 1
      %p33 = por %p31, %p32
      %p34 = scmp.ne.s32.totalorder %s26, %s29
      %p35 = scmp.eq.s32.totalorder %s16, 0
      %p36 = por %p34, %p35
      %p37 = scmp.ne.s32.totalorder %s26, %s29
      %p38 = scmp.eq.s32.totalorder %s21, 1
      %p39 = por %p37, %p38
      %p40 = scmp.ne.s32.totalorder %s29, %s30
      %p41 = scmp.eq.s32.totalorder %s21, 0
      %p42 = por %p40, %p41
      %p43 = scmp.ne.s32.totalorder %s29, %s30
      %p44 = scmp.eq.s32.totalorder %s22, 1
      %p45 = por %p43, %p44
      %p47 = scmp.ne.s32.totalorder %s30, %s46
      %p48 = scmp.eq.s32.totalorder %s22, 0
      %p49 = por %p47, %p48
      %s51 = sadd.s32 %s50, 1
      %p54 = scmp.eq.s32.totalorder %s16, 1
      %p55 = scmp.ne.s32.totalorder %s50, %s52
      %p56 = scmp.eq.s32.totalorder %s16, 0
      %p57 = por %p55, %p56
      %p58 = scmp.ne.s32.totalorder %s50, %s52
      %p59 = scmp.eq.s32.totalorder %s21, 1
      %p60 = por %p58, %p59
      %p61 = scmp.ne.s32.totalorder %s52, %s53
      %p62 = scmp.eq.s32.totalorder %s21, 0
      %p63 = por %p61, %p62
      %p64 = scmp.ne.s32.totalorder %s52, %s53
      %p65 = scmp.eq.s32.totalorder %s22, 1
      %p66 = por %p64, %p65
      %p68 = scmp.ne.s32.totalorder %s53, %s67
      %p69 = scmp.eq.s32.totalorder %s22, 0
      %p70 = por %p68, %p69
      %s72 = sadd.s32 %s71, 1
      %p75 = scmp.eq.s32.totalorder %s16, 1
      %p76 = scmp.ne.s32.totalorder %s71, %s73
      %p77 = scmp.eq.s32.totalorder %s16, 0
      %p78 = por %p76, %p77
      %p79 = scmp.ne.s32.totalorder %s71, %s73
      %p80 = scmp.eq.s32.totalorder %s21, 1
      %p81 = por %p79, %p80
      %p82 = scmp.ne.s32.totalorder %s73, %s74
      %p83 = scmp.eq.s32.totalorder %s21, 0
      %p84 = por %p82, %p83
      %p85 = scmp.ne.s32.totalorder %s73, %s74
      %p86 = scmp.eq.s32.totalorder %s22, 1
      %p87 = por %p85, %p86
      %p89 = scmp.ne.s32.totalorder %s74, %s88
      %p90 = scmp.eq.s32.totalorder %s22, 0
      %p91 = por %p89, %p90
      %s93 = sadd.s32 %s92, 1
      %p96 = scmp.eq.s32.totalorder %s16, 1
      %p97 = scmp.ne.s32.totalorder %s92, %s94
      %p98 = scmp.eq.s32.totalorder %s16, 0
      %p99 = por %p97, %p98
      %p100 = scmp.ne.s32.totalorder %s92, %s94
      %p101 = scmp.eq.s32.totalorder %s21, 1
      %p102 = por %p100, %p101
      %p103 = scmp.ne.s32.totalorder %s94, %s95
      %p104 = scmp.eq.s32.totalorder %s21, 0
      %p105 = por %p103, %p104
      %p106 = scmp.ne.s32.totalorder %s94, %s95
      %p107 = scmp.eq.s32.totalorder %s22, 1
      %p108 = por %p106, %p107
      %p110 = scmp.ne.s32.totalorder %s95, %s109
      %p111 = scmp.eq.s32.totalorder %s22, 0
      %p112 = por %p110, %p111
      %s114 = sadd.s32 %s113, 1
      %p117 = scmp.eq.s32.totalorder %s16, 1
      %p118 = scmp.ne.s32.totalorder %s113, %s115
      %p119 = scmp.eq.s32.totalorder %s16, 0
      %p120 = por %p118, %p119
      %p121 = scmp.ne.s32.totalorder %s113, %s115
      %p122 = scmp.eq.s32.totalorder %s21, 1
      %p123 = por %p121, %p122
      %p124 = scmp.ne.s32.totalorder %s115, %s116
      %p125 = scmp.eq.s32.totalorder %s21, 0
      %p126 = por %p124, %p125
      %p127 = scmp.ne.s32.totalorder %s115, %s116
      %p128 = scmp.eq.s32.totalorder %s22, 1
      %p129 = por %p127, %p128
      %p131 = scmp.ne.s32.totalorder %s116, %s130
      %p132 = scmp.eq.s32.totalorder %s22, 0
      %p133 = por %p131, %p132
      %s135 = sadd.s32 %s134, 1
      %p138 = scmp.eq.s32.totalorder %s16, 1
      %p139 = scmp.ne.s32.totalorder %s134, %s136
      %p140 = scmp.eq.s32.totalorder %s16, 0
      %p141 = por %p139, %p140
      %p142 = scmp.ne.s32.totalorder %s134, %s136
      %p143 = scmp.eq.s32.totalorder %s21, 1
      %p144 = por %p142, %p143
      %p145 = scmp.ne.s32.totalorder %s136, %s137
      %p146 = scmp.eq.s32.totalorder %s21, 0
      %p147 = por %p145, %p146
      %p148 = scmp.ne.s32.totalorder %s136, %s137
      %p149 = scmp.eq.s32.totalorder %s22, 1
      %p150 = por %p148, %p149
      %p152 = scmp.ne.s32.totalorder %s137, %s151
      %p153 = scmp.eq.s32.totalorder %s22, 0
      %p154 = por %p152, %p153
      %s156 = sadd.s32 %s155, 1
      %p159 = scmp.eq.s32.totalorder %s16, 1
      %p160 = scmp.ne.s32.totalorder %s155, %s157
      %p161 = scmp.eq.s32.totalorder %s16, 0
      %p162 = por %p160, %p161
      %p163 = scmp.ne.s32.totalorder %s155, %s157
      %p164 = scmp.eq.s32.totalorder %s21, 1
      %p165 = por %p163, %p164
      %p166 = scmp.ne.s32.totalorder %s157, %s158
      %p167 = scmp.eq.s32.totalorder %s21, 0
      %p168 = por %p166, %p167
      %p169 = scmp.ne.s32.totalorder %s157, %s158
      %p170 = scmp.eq.s32.totalorder %s22, 1
      %p171 = por %p169, %p170
      %p173 = scmp.ne.s32.totalorder %s158, %s172
      %p174 = scmp.eq.s32.totalorder %s22, 0
      %p175 = por %p173, %p174
      %s176 = ssub.s32 %s16, %s23
      %p177 = scmp.eq.s32.totalorder %s176, 0
      %s179 = sadd.s32 %s178, 1
      %s180 = scalar_select %p177, %s178, %s179
      %p183 = pneg %p177
      %p184 = scmp.eq.s32.totalorder %s16, 1
      %p185 = por %p183, %p184
      %p186 = scmp.ne.s32.totalorder %s178, %s181
      %p187 = scmp.eq.s32.totalorder %s16, 0
      %p188 = por %p186, %p187
      %p189 = scmp.ne.s32.totalorder %s178, %s181
      %p190 = scmp.eq.s32.totalorder %s21, 1
      %p191 = por %p189, %p190
      %p192 = scmp.ne.s32.totalorder %s181, %s182
      %p193 = scmp.eq.s32.totalorder %s21, 0
      %p194 = por %p192, %p193
      %p195 = scmp.ne.s32.totalorder %s181, %s182
      %p196 = scmp.eq.s32.totalorder %s22, 1
      %p197 = por %p195, %p196
      %p199 = scmp.ne.s32.totalorder %s182, %s198
      %p200 = scmp.eq.s32.totalorder %s22, 0
      %p201 = por %p199, %p200
      %p202 = scmp.le.s32.totalorder 1, %s16
      %p203 = scmp.lt.s32.totalorder %s16, 3
      %p204 = pnand %p202, %p203
      %p205 = pneg %p204
      // Predicated region
      $region9: #{decoder_layer.5} parent=5 // pred_check
        _
      $region10: #{decoder_layer.5} parent=5 // pred_check_branch
        %207 = sbr.rel (%p204) target = $region12
      $region11: #{decoder_layer.5} parent=5 // pred_region
        %s208 = ssub.s32 %s16, 1
        // Predicated region
        $region13: #{decoder_layer.5} parent=11 // pred_check
          %p209 = pneg %p63
        $region14: #{decoder_layer.5} parent=11 // pred_check_branch
          %211 = sbr.rel (%p209) target = $region16
        $region15: #{decoder_layer.5} parent=11 // pred_region
          _
        $region16: #{decoder_layer.5} parent=11 // pred_fallthru
          _
        // Predicated region
        $region17: #{decoder_layer.5} parent=11 // pred_check
          %p212 = pneg %p84
        $region18: #{decoder_layer.5} parent=11 // pred_check_branch
          %214 = sbr.rel (%p212) target = $region20
        $region19: #{decoder_layer.5} parent=11 // pred_region
          _
        $region20: #{decoder_layer.5} parent=11 // pred_fallthru
          _
        // Predicated region
        $region21: #{decoder_layer.5} parent=11 // pred_check
          %p215 = pneg %p105
        $region22: #{decoder_layer.5} parent=11 // pred_check_branch
          %217 = sbr.rel (%p215) target = $region24
        $region23: #{decoder_layer.5} parent=11 // pred_region
          _
        $region24: #{decoder_layer.5} parent=11 // pred_fallthru
          _
        // Predicated region
        $region25: #{decoder_layer.5} parent=11 // pred_check
          %p218 = pneg %p126
        $region26: #{decoder_layer.5} parent=11 // pred_check_branch
          %220 = sbr.rel (%p218) target = $region28
        $region27: #{decoder_layer.5} parent=11 // pred_region
          _
        $region28: #{decoder_layer.5} parent=11 // pred_fallthru
          _
        // Predicated region
        $region29: #{decoder_layer.5} parent=11 // pred_check
          %p221 = pneg %p147
        $region30: #{decoder_layer.5} parent=11 // pred_check_branch
          %223 = sbr.rel (%p221) target = $region32
        $region31: #{decoder_layer.5} parent=11 // pred_region
          _
        $region32: #{decoder_layer.5} parent=11 // pred_fallthru
          _
        // Predicated region
        $region33: #{decoder_layer.5} parent=11 // pred_check
          %p224 = pneg %p168
        $region34: #{decoder_layer.5} parent=11 // pred_check_branch
          %226 = sbr.rel (%p224) target = $region36
        $region35: #{decoder_layer.5} parent=11 // pred_region
          _
        $region36: #{decoder_layer.5} parent=11 // pred_fallthru
          _
      $region12: #{decoder_layer.5} parent=5 // pred_fallthru
        _
      %p227 = scmp.lt.s32.totalorder %s16, 2
      // Predicated region
      $region37: #{decoder_layer.5} parent=5 // pred_check
        %p228 = pneg %p227
      $region38: #{decoder_layer.5} parent=5 // pred_check_branch
        %230 = sbr.rel (%p228) target = $region40
      $region39: #{decoder_layer.5} parent=5 // pred_region
        // Predicated region
        $region41: #{decoder_layer.5} parent=39 // pred_check
          %p231 = pneg %p36
        $region42: #{decoder_layer.5} parent=39 // pred_check_branch
          %233 = sbr.rel (%p231) target = $region44
        $region43: #{decoder_layer.5} parent=39 // pred_region
          %p234 = scmp.lt.s32.totalorder %s16, 1
          %s235 = scalar_select %p234, %s16, 1
          %s236 = smul.addr %s235, 8
          %s237 = scalar_lea.vmem %s0, %s236
        $region44: #{decoder_layer.5} parent=39 // pred_fallthru
          _
      $region40: #{decoder_layer.5} parent=5 // pred_fallthru
        _
      %p238 = scmp.le.s32.totalorder 1, %s16
      %p239 = scmp.lt.s32.totalorder %s16, 3
      %p240 = pnand %p238, %p239
      %p241 = pneg %p240
      // Predicated region
      $region45: #{decoder_layer.5} parent=5 // pred_check
        _
      $region46: #{decoder_layer.5} parent=5 // pred_check_branch
        %243 = sbr.rel (%p240) target = $region48
      $region47: #{decoder_layer.5} parent=5 // pred_region
        %s244 = ssub.s32 %s16, 1
        %p245 = scmp.lt.s32.totalorder %s21, 1
        %s246 = scalar_select %p245, %s21, 1
        %s247 = smul.addr %s246, 8
        %s248 = scalar_lea.vmem %s0, %s247
        %p249 = pneg %p42
        %p250 = pneg %p39
        %p251 = pneg %p63
        %p252 = pneg %p60
        %p253 = pneg %p84
        %p254 = pneg %p81
        %p255 = pneg %p105
        %p256 = pneg %p102
        %p257 = pneg %p126
        %p258 = pneg %p123
        %p259 = pneg %p147
        %p260 = pneg %p144
        %p261 = pneg %p168
        %p262 = pneg %p165
        %p263 = pneg %p194
        %p264 = pneg %p191
        %s265 = sand.u32 %s181, 1
        %s266 = scalar_lea.sflag [#allocation3], %s265
        %s267 = sand.u32 %s181, 1
        %s268 = smul.addr %s267, 8
        %s269 = scalar_lea.vmem [#allocation2], %s268
        %p270 = scmp.lt.s32.totalorder %s21, 1
        %s271 = scalar_select %p270, %s21, 1
        %s272 = smul.addr %s271, 8
        %s273 = scalar_lea.vmem %s0, %s272
        %v275 = vld [vmem:[%s273] sm:$0xff]
        %v276 = vpack.c.bf16 %v275, %v275
        %v277 = vld [vmem:[%s1] sm:$0xf]
        %v278 = vld [vmem:[%s1 + $0x4] sm:$0xf]
        %v279 = vld [vmem:[%s1 + $0x8] sm:$0xf]
        %v280 = vld [vmem:[%s1 + $0xc] sm:$0xf]
        %v281 = vld [vmem:[%s2] sm:$0x1]
        %v283 = vperm.slane %v281, 0
        %v289 = vunpack.c.l.b16 %v277
        %v290 = vunpack.c.l.b16 %v278
        %v291 = vunpack.c.l.b16 %v279
        %v292 = vunpack.c.l.b16 %v280
        %v293 = vpack.c.b16 %v290, %v289
        %v294 = vpack.c.b16 %v292, %v291
        %vm297 = vcmask 261120
        %v299 = vsel %vm297, %v276, 0
        %301 = vmatpush.bf16.msra.mxu0 0
        %302 = vmatpush.bf16.msra.mxu0 0
        %303 = vmatpush.bf16.msra.mxu0 0
        %304 = vmatpush.bf16.msra.mxu0 0
        %305 = vmatpush.bf16.msra.mxu0 0
        %306 = vmatpush.bf16.msra.mxu0 0
        %307 = vmatpush.bf16.msra.mxu0 %v294
        %308 = vmatpush.bf16.msra.mxu0 %v293
        %309 = vmatmul.bf16.gmra.mxu0 %v299
        %v310 = vpop.f32.mrf.mxu0
        %v311 = vadd.f32 %v283, %v310
        %v312 = vpop.f32.mrf.mxu0
        %313 = vdwg.mxu0
        %v314 = vmax.f32 %v311, 0.0
        %v315 = vpack.c.bf16 %v314, %v314
        %v316 = vld [vmem:[%s3] sm:$0xf]
        %v317 = vld [vmem:[%s3 + $0x4] sm:$0xf]
        %v318 = vld [vmem:[%s3 + $0x8] sm:$0xf]
        %v319 = vld [vmem:[%s3 + $0xc] sm:$0xf]
        %v320 = vld [vmem:[%s3 + $0x10] sm:$0xf]
        %v321 = vld [vmem:[%s3 + $0x14] sm:$0xf]
        %v322 = vld [vmem:[%s3 + $0x18] sm:$0xf]
        %v323 = vld [vmem:[%s3 + $0x1c] sm:$0xf]
        %v324 = vld [vmem:[%s4] sm:$0x1]
        %v326 = vperm.slane %v324, 0
        %v336 = vunpack.c.l.b16 %v316
        %v337 = vunpack.c.l.b16 %v317
        %v338 = vunpack.c.l.b16 %v318
        %v339 = vunpack.c.l.b16 %v319
        %v340 = vunpack.c.l.b16 %v320
        %v341 = vunpack.c.l.b16 %v321
        %v342 = vunpack.c.l.b16 %v322
        %v343 = vunpack.c.l.b16 %v323
        %v344 = vpack.c.b16 %v337, %v336
        %v345 = vpack.c.b16 %v339, %v338
        %v346 = vpack.c.b16 %v341, %v340
        %v347 = vpack.c.b16 %v343, %v342
        %vm352 = vcmask 523264
        %v354 = vsel %vm352, %v315, 0
        %356 = vmatpush.bf16.msra.mxu0 0
        %357 = vmatpush.bf16.msra.mxu0 0
        %358 = vmatpush.bf16.msra.mxu0 0
        %359 = vmatpush.bf16.msra.mxu0 0
        %360 = vmatpush.bf16.msra.mxu0 %v347
        %361 = vmatpush.bf16.msra.mxu0 %v346
        %362 = vmatpush.bf16.msra.mxu0 %v345
        %363 = vmatpush.bf16.msra.mxu0 %v344
        %364 = vmatmul.bf16.gmra.mxu0 %v354
        %v365 = vpop.f32.mrf.mxu0
        %v366 = vadd.f32 %v326, %v365
        %v367 = vpop.f32.mrf.mxu0
        %368 = vdwg.mxu0
        %v369 = vadd.f32 %v275, %v366
        %v370 = vld [vmem:[%s5] sm:$0x1]
        %v371 = vld [vmem:[%s6] sm:$0x1]
        %v372 = vsel %vm297, %v369, 0.0
        %373 = vadd.xlane.f32.xlu0 %v372
        %v374 = vpop.xlane.xlu0 %373
        %v375 = vrcp.pop 32.0
        %v376 = vmul.f32 32.0, %v375
        %v377 = vsub.f32 1.0, %v376
        %v378 = vmul.f32 %v375, %v377
        %v379 = vadd.f32 %v375, %v378
        %vm380 = vweird.f32 %v375
        %v381 = vsel %vm380, %v375, %v379
        %v382 = vmul.f32 %v374, %v381
        %v383 = vsub.f32 %v369, %v382
        %v384 = vmul.f32 %v383, %v383
        %v385 = vsel %vm297, %v384, 0.0
        %386 = vadd.xlane.f32.xlu0 %v385
        %v387 = vpop.xlane.xlu0 %386
        %v388 = vmul.f32 %v387, %v381
        %v389 = vadd.f32 %v388, 1e-05
        %v390 = vrsqrt.pop %v389
        %v391 = vmul.f32 %v390, %v389
        %v392 = vmul.f32 %v391, %v390
        %v393 = vmul.f32 0.5, %v392
        %v394 = vsub.f32 1.5, %v393
        %v395 = vmul.f32 %v390, %v394
        %vm396 = vweird.f32 %v389
        %vm397 = vweird.f32 %v390
        %vm398 = vmor %vm396, %vm397
        %v399 = vsel %vm398, %v390, %v395
        %v400 = vmul.f32 %v383, %v399
        %v402 = vperm.slane %v370, 0
        %v404 = vmul.f32 %v400, %v402
        %v406 = vperm.slane %v371, 0
        %v408 = vadd.f32 %v404, %v406
        %409 = vst.msk [vmem:[%s269] sm:$0xff] %vm297, %v408
        %s410 = sand.u32 %s181, 1
        %s411 = scalar_lea.sflag [#allocation3], %s410
        %s412 = sand.u32 %s181, 1
        %s413 = smul.addr %s412, 8
        %s414 = scalar_lea.vmem [#allocation2], %s413
        // Predicated region
        $region49: #{decoder_layer.5} parent=47 // pred_check
          %p415 = pneg %p191
        $region50: #{decoder_layer.5} parent=47 // pred_check_branch
          %417 = sbr.rel (%p415) target = $region52
        $region51: #{decoder_layer.5} parent=47 // pred_region
          %419 = vsyncadd %s411, 0
          %s420 = smul.addr %s21, 8
          %s421 = scalar_lea.hbm %s7, %s420
          %s423 = sshll.u32 %s414, 4
          %s424 = int_to_ptr.vmem [resolvable:$true] %s423
          %s425 = sshll.u32 %s421, 4
          %s426 = int_to_ptr.hbm [resolvable:$true] %s425
          %428 = dma.vmem_to_hbm [thread:$0]  %s424, 128, %s426, %s411
        $region52: #{decoder_layer.5} parent=47 // pred_fallthru
          _
      $region48: #{decoder_layer.5} parent=5 // pred_fallthru
        _
      %p429 = scmp.le.s32.totalorder 2, %s16
      // Predicated region
      $region53: #{decoder_layer.5} parent=5 // pred_check
        %p430 = pneg %p429
      $region54: #{decoder_layer.5} parent=5 // pred_check_branch
        %432 = sbr.rel (%p430) target = $region56
      $region55: #{decoder_layer.5} parent=5 // pred_region
        %s433 = ssub.s32 %s16, 2
        // Predicated region
        $region57: #{decoder_layer.5} parent=55 // pred_check
          %p434 = pneg %p197
        $region58: #{decoder_layer.5} parent=55 // pred_check_branch
          %436 = sbr.rel (%p434) target = $region60
        $region59: #{decoder_layer.5} parent=55 // pred_region
          %s437 = sand.u32 %s182, 1
          %s438 = scalar_lea.sflag [#allocation3], %s437
          %s439 = sand.u32 %s182, 1
          %s440 = smul.addr %s439, 8
          %s441 = scalar_lea.vmem [#allocation2], %s440
          %443 = dma.done %s438, 128
        $region60: #{decoder_layer.5} parent=55 // pred_fallthru
          _
      $region56: #{decoder_layer.5} parent=5 // pred_fallthru
        _
    $region6: #{decoder_layer.5} parent=1 // loop_footer
      %s20 = sadd.s32 1, %s16
    $region7: #{decoder_layer.5} parent=1 // loop_footer_branch
      %15 = sbr.rel target = $region3
    $region8: #{decoder_layer.5} parent=1 // loop_exit
      _
    %444 = vsyncpa [#allocation3], 1
    %s445 = scalar_lea.sflag [#allocation3], 1
    %446 = vsyncpa %s445, 1

// kernel: decoder_layer.4
$region0: #{decoder_layer.4}
  #allocation0 [shape = 'u32[]', space=smem, size = 0x4, offset = 0x4, fixed_abs, tag = 'smem constant byte address 0x4 - core index']
  #allocation1 [shape = 'u32[72,128]{1,0:T(1,128)}', space=vmem, size = 0x9000, scoped, tag = 'internal scratch']
  %s0 = inlined_call_operand.vmem [shape: f32[2,8,32], index: 0, kind: input, shape index: {}]
  %s1 = inlined_call_operand.hbm [shape: f32[2,8,32], index: 1, kind: input, shape index: {}]
  %s2 = inlined_call_operand.vmem [shape: f32[2,8,8], index: 2, kind: input, shape index: {}]
  %s3 = inlined_call_operand.hbm [shape: bf16[32,32], index: 3, kind: input, shape index: {}]
  %s4 = inlined_call_operand.vmem [shape: f32[1,32], index: 4, kind: input, shape index: {}]
  %s5 = inlined_call_operand.hbm [shape: bf16[32,64], index: 5, kind: input, shape index: {}]
  %s6 = inlined_call_operand.hbm [shape: f32[1,64], index: 6, kind: input, shape index: {}]
  %s7 = inlined_call_operand.hbm [shape: bf16[32,32], index: 7, kind: input, shape index: {}]
  %s8 = inlined_call_operand.hbm [shape: f32[1,32], index: 8, kind: input, shape index: {}]
  %s9 = inlined_call_operand.hbm [shape: f32[1,32], index: 9, kind: input, shape index: {}]
  %s10 = inlined_call_operand.hbm [shape: f32[1,32], index: 10, kind: input, shape index: {}]
  %s11 = inlined_call_operand.vmem [shape: f32[2,8,32], index: 11, kind: output, shape index: {0}]
  %s12 = inlined_call_operand.hbm [shape: f32[2,4,8,8], index: 12, kind: output, shape index: {1}]
  %13 = xla_tuple %s11, %s12
  %s14 = sld [smem:[#allocation0]]
  $region117: #{decoder_layer.4} parent=0
    _
  %s16 = ssub.s32 1, %s14
  %s17 = scalar_select 0, %s16, %s14
  $region1: #{decoder_layer.4} parent=0
    #allocation2 [shape = 'u8[8192]{0}', space=vmem, size = 0x2000, scoped, tag = 'input window, operand 1']
    #allocation3 [shape = 's32[2]{0}', space=sflag, size = 0x8, scoped, tag = 'scoped memory for decoder_layer.4']
    #allocation4 [shape = 's32[2]{0}', space=sflag, size = 0x8, scoped, tag = 'scoped memory for decoder_layer.4']
    #allocation5 [shape = 'u8[8192]{0}', space=vmem, size = 0x2000, scoped, tag = 'input window, operand 3, single buffered']
    #allocation6 [shape = 's32[1]{0}', space=sflag, size = 0x4, scoped, tag = 'scoped memory for decoder_layer.4']
    #allocation7 [shape = 'u8[8192]{0}', space=vmem, size = 0x2000, scoped, tag = 'input window, operand 5, single buffered']
    #allocation8 [shape = 'u8[512]{0}', space=vmem, size = 0x400, scoped, tag = 'input window, operand 6, single buffered']
    #allocation9 [shape = 's32[1]{0}', space=sflag, size = 0x4, scoped, tag = 'scoped memory for decoder_layer.4']
    #allocation10 [shape = 'u8[8192]{0}', space=vmem, size = 0x2000, scoped, tag = 'input window, operand 7, single buffered']
    #allocation11 [shape = 'u8[512]{0}', space=vmem, size = 0x400, scoped, tag = 'input window, operand 8, single buffered']
    #allocation12 [shape = 's32[1]{0}', space=sflag, size = 0x4, scoped, tag = 'scoped memory for decoder_layer.4']
    #allocation13 [shape = 'u8[512]{0}', space=vmem, size = 0x400, scoped, tag = 'input window, operand 9, single buffered']
    #allocation14 [shape = 'u8[512]{0}', space=vmem, size = 0x400, scoped, tag = 'input window, operand 10, single buffered']
    #allocation15 [shape = 's32[1]{0}', space=sflag, size = 0x4, scoped, tag = 'scoped memory for decoder_layer.4']
    #allocation16 [shape = 'u8[32768]{0}', space=vmem, size = 0x8000, scoped, tag = 'output window, operand 1']
    %18 = vsyncpa [#allocation3], 0
    %s19 = scalar_lea.sflag [#allocation3], 1
    %20 = vsyncpa %s19, 0
    %21 = vsyncpa [#allocation6], 0
    %22 = vsyncpa [#allocation9], 0
    %23 = vsyncpa [#allocation12], 0
    %24 = vsyncpa [#allocation15], 0
    %25 = vsyncpa [#allocation4], 0
    %s26 = scalar_lea.sflag [#allocation4], 1
    %27 = vsyncpa %s26, 0
    loop: start=0, step=1, limit=4
    $region2: #{decoder_layer.4} parent=1 // loop_pre_header
      _
    $region3: #{decoder_layer.4} parent=1 // loop_header
      %s29 = sphi 0, %s33
      %p30 = scmp.ge.s32.totalorder %s29, 4
      %s39 = sphi 0, %s41
      %s42 = sphi 0, %s39
      %s43 = sphi 0, %s42
      %s59 = sphi 0, %s43
      %s65 = sphi 0, %s67
      %s68 = sphi 0, %s65
      %s69 = sphi 0, %s68
      %s85 = sphi 0, %s69
      %s91 = sphi 0, %s93
      %s94 = sphi 0, %s91
      %s95 = sphi 0, %s94
      %s111 = sphi 0, %s95
      %s115 = sphi 0, %s115
      %s117 = sphi 0, %s115
      %s118 = sphi 0, %s117
      %s132 = sphi 0, %s118
      %s136 = sphi 0, %s136
      %s138 = sphi 0, %s136
      %s139 = sphi 0, %s138
      %s153 = sphi 0, %s139
      %s157 = sphi 0, %s157
      %s159 = sphi 0, %s157
      %s160 = sphi 0, %s159
      %s174 = sphi 0, %s160
      %s178 = sphi 0, %s178
      %s180 = sphi 0, %s178
      %s181 = sphi 0, %s180
      %s195 = sphi 0, %s181
      %s199 = sphi 0, %s199
      %s201 = sphi 0, %s199
      %s202 = sphi 0, %s201
      %s216 = sphi 0, %s202
      %s220 = sphi 0, %s220
      %s222 = sphi 0, %s220
      %s223 = sphi 0, %s222
      %s237 = sphi 0, %s223
      %s241 = sphi 0, %s241
      %s243 = sphi 0, %s241
      %s244 = sphi 0, %s243
      %s258 = sphi 0, %s244
      %s262 = sphi 0, %s262
      %s264 = sphi 0, %s262
      %s265 = sphi 0, %s264
      %s279 = sphi 0, %s265
      %s285 = sphi 0, %s287
      %s288 = sphi 0, %s285
      %s289 = sphi 0, %s288
      %s305 = sphi 0, %s289
      %s311 = sphi 0, %s313
      %s314 = sphi 0, %s311
      %s315 = sphi 0, %s314
      %s331 = sphi 0, %s315
    $region4: #{decoder_layer.4} parent=1 // loop_header_branch
      %32 = sbr.rel (%p30) target = $region8
    $region5: #{decoder_layer.4} parent=1 // loop_body
      %s34 = ssub.s32 %s29, 1
      %s35 = ssub.s32 %s29, 2
      %s36 = sadd.s32 %s29, 1
      %s37 = ssub.s32 %s29, %s36
      %p38 = scmp.eq.s32.totalorder %s37, 0
      %s40 = sadd.s32 %s39, 1
      %s41 = scalar_select %p38, %s39, %s40
      %p44 = pneg %p38
      %p45 = scmp.eq.s32.totalorder %s29, 1
      %p46 = por %p44, %p45
      %p47 = scmp.ne.s32.totalorder %s39, %s42
      %p48 = scmp.eq.s32.totalorder %s29, 0
      %p49 = por %p47, %p48
      %p50 = scmp.ne.s32.totalorder %s39, %s42
      %p51 = scmp.eq.s32.totalorder %s34, 1
      %p52 = por %p50, %p51
      %p53 = scmp.ne.s32.totalorder %s42, %s43
      %p54 = scmp.eq.s32.totalorder %s34, 0
      %p55 = por %p53, %p54
      %p56 = scmp.ne.s32.totalorder %s42, %s43
      %p57 = scmp.eq.s32.totalorder %s35, 1
      %p58 = por %p56, %p57
      %p60 = scmp.ne.s32.totalorder %s43, %s59
      %p61 = scmp.eq.s32.totalorder %s35, 0
      %p62 = por %p60, %p61
      %s63 = ssub.s32 %s29, %s36
      %p64 = scmp.eq.s32.totalorder %s63, 0
      %s66 = sadd.s32 %s65, 1
      %s67 = scalar_select %p64, %s65, %s66
      %p70 = pneg %p64
      %p71 = scmp.eq.s32.totalorder %s29, 1
      %p72 = por %p70, %p71
      %p73 = scmp.ne.s32.totalorder %s65, %s68
      %p74 = scmp.eq.s32.totalorder %s29, 0
      %p75 = por %p73, %p74
      %p76 = scmp.ne.s32.totalorder %s65, %s68
      %p77 = scmp.eq.s32.totalorder %s34, 1
      %p78 = por %p76, %p77
      %p79 = scmp.ne.s32.totalorder %s68, %s69
      %p80 = scmp.eq.s32.totalorder %s34, 0
      %p81 = por %p79, %p80
      %p82 = scmp.ne.s32.totalorder %s68, %s69
      %p83 = scmp.eq.s32.totalorder %s35, 1
      %p84 = por %p82, %p83
      %p86 = scmp.ne.s32.totalorder %s69, %s85
      %p87 = scmp.eq.s32.totalorder %s35, 0
      %p88 = por %p86, %p87
      %s89 = ssub.s32 %s29, %s36
      %p90 = scmp.eq.s32.totalorder %s89, 0
      %s92 = sadd.s32 %s91, 1
      %s93 = scalar_select %p90, %s91, %s92
      %p96 = pneg %p90
      %p97 = scmp.eq.s32.totalorder %s29, 1
      %p98 = por %p96, %p97
      %p99 = scmp.ne.s32.totalorder %s91, %s94
      %p100 = scmp.eq.s32.totalorder %s29, 0
      %p101 = por %p99, %p100
      %p102 = scmp.ne.s32.totalorder %s91, %s94
      %p103 = scmp.eq.s32.totalorder %s34, 1
      %p104 = por %p102, %p103
      %p105 = scmp.ne.s32.totalorder %s94, %s95
      %p106 = scmp.eq.s32.totalorder %s34, 0
      %p107 = por %p105, %p106
      %p108 = scmp.ne.s32.totalorder %s94, %s95
      %p109 = scmp.eq.s32.totalorder %s35, 1
      %p110 = por %p108, %p109
      %p112 = scmp.ne.s32.totalorder %s95, %s111
      %p113 = scmp.eq.s32.totalorder %s35, 0
      %p114 = por %p112, %p113
      %s116 = sadd.s32 %s115, 1
      %p119 = scmp.eq.s32.totalorder %s29, 1
      %p120 = scmp.ne.s32.totalorder %s115, %s117
      %p121 = scmp.eq.s32.totalorder %s29, 0
      %p122 = por %p120, %p121
      %p123 = scmp.ne.s32.totalorder %s115, %s117
      %p124 = scmp.eq.s32.totalorder %s34, 1
      %p125 = por %p123, %p124
      %p126 = scmp.ne.s32.totalorder %s117, %s118
      %p127 = scmp.eq.s32.totalorder %s34, 0
      %p128 = por %p126, %p127
      %p129 = scmp.ne.s32.totalorder %s117, %s118
      %p130 = scmp.eq.s32.totalorder %s35, 1
      %p131 = por %p129, %p130
      %p133 = scmp.ne.s32.totalorder %s118, %s132
      %p134 = scmp.eq.s32.totalorder %s35, 0
      %p135 = por %p133, %p134
      %s137 = sadd.s32 %s136, 1
      %p140 = scmp.eq.s32.totalorder %s29, 1
      %p141 = scmp.ne.s32.totalorder %s136, %s138
      %p142 = scmp.eq.s32.totalorder %s29, 0
      %p143 = por %p141, %p142
      %p144 = scmp.ne.s32.totalorder %s136, %s138
      %p145 = scmp.eq.s32.totalorder %s34, 1
      %p146 = por %p144, %p145
      %p147 = scmp.ne.s32.totalorder %s138, %s139
      %p148 = scmp.eq.s32.totalorder %s34, 0
      %p149 = por %p147, %p148
      %p150 = scmp.ne.s32.totalorder %s138, %s139
      %p151 = scmp.eq.s32.totalorder %s35, 1
      %p152 = por %p150, %p151
      %p154 = scmp.ne.s32.totalorder %s139, %s153
      %p155 = scmp.eq.s32.totalorder %s35, 0
      %p156 = por %p154, %p155
      %s158 = sadd.s32 %s157, 1
      %p161 = scmp.eq.s32.totalorder %s29, 1
      %p162 = scmp.ne.s32.totalorder %s157, %s159
      %p163 = scmp.eq.s32.totalorder %s29, 0
      %p164 = por %p162, %p163
      %p165 = scmp.ne.s32.totalorder %s157, %s159
      %p166 = scmp.eq.s32.totalorder %s34, 1
      %p167 = por %p165, %p166
      %p168 = scmp.ne.s32.totalorder %s159, %s160
      %p169 = scmp.eq.s32.totalorder %s34, 0
      %p170 = por %p168, %p169
      %p171 = scmp.ne.s32.totalorder %s159, %s160
      %p172 = scmp.eq.s32.totalorder %s35, 1
      %p173 = por %p171, %p172
      %p175 = scmp.ne.s32.totalorder %s160, %s174
      %p176 = scmp.eq.s32.totalorder %s35, 0
      %p177 = por %p175, %p176
      %s179 = sadd.s32 %s178, 1
      %p182 = scmp.eq.s32.totalorder %s29, 1
      %p183 = scmp.ne.s32.totalorder %s178, %s180
      %p184 = scmp.eq.s32.totalorder %s29, 0
      %p185 = por %p183, %p184
      %p186 = scmp.ne.s32.totalorder %s178, %s180
      %p187 = scmp.eq.s32.totalorder %s34, 1
      %p188 = por %p186, %p187
      %p189 = scmp.ne.s32.totalorder %s180, %s181
      %p190 = scmp.eq.s32.totalorder %s34, 0
      %p191 = por %p189, %p190
      %p192 = scmp.ne.s32.totalorder %s180, %s181
      %p193 = scmp.eq.s32.totalorder %s35, 1
      %p194 = por %p192, %p193
      %p196 = scmp.ne.s32.totalorder %s181, %s195
      %p197 = scmp.eq.s32.totalorder %s35, 0
      %p198 = por %p196, %p197
      %s200 = sadd.s32 %s199, 1
      %p203 = scmp.eq.s32.totalorder %s29, 1
      %p204 = scmp.ne.s32.totalorder %s199, %s201
      %p205 = scmp.eq.s32.totalorder %s29, 0
      %p206 = por %p204, %p205
      %p207 = scmp.ne.s32.totalorder %s199, %s201
      %p208 = scmp.eq.s32.totalorder %s34, 1
      %p209 = por %p207, %p208
      %p210 = scmp.ne.s32.totalorder %s201, %s202
      %p211 = scmp.eq.s32.totalorder %s34, 0
      %p212 = por %p210, %p211
      %p213 = scmp.ne.s32.totalorder %s201, %s202
      %p214 = scmp.eq.s32.totalorder %s35, 1
      %p215 = por %p213, %p214
      %p217 = scmp.ne.s32.totalorder %s202, %s216
      %p218 = scmp.eq.s32.totalorder %s35, 0
      %p219 = por %p217, %p218
      %s221 = sadd.s32 %s220, 1
      %p224 = scmp.eq.s32.totalorder %s29, 1
      %p225 = scmp.ne.s32.totalorder %s220, %s222
      %p226 = scmp.eq.s32.totalorder %s29, 0
      %p227 = por %p225, %p226
      %p228 = scmp.ne.s32.totalorder %s220, %s222
      %p229 = scmp.eq.s32.totalorder %s34, 1
      %p230 = por %p228, %p229
      %p231 = scmp.ne.s32.totalorder %s222, %s223
      %p232 = scmp.eq.s32.totalorder %s34, 0
      %p233 = por %p231, %p232
      %p234 = scmp.ne.s32.totalorder %s222, %s223
      %p235 = scmp.eq.s32.totalorder %s35, 1
      %p236 = por %p234, %p235
      %p238 = scmp.ne.s32.totalorder %s223, %s237
      %p239 = scmp.eq.s32.totalorder %s35, 0
      %p240 = por %p238, %p239
      %s242 = sadd.s32 %s241, 1
      %p245 = scmp.eq.s32.totalorder %s29, 1
      %p246 = scmp.ne.s32.totalorder %s241, %s243
      %p247 = scmp.eq.s32.totalorder %s29, 0
      %p248 = por %p246, %p247
      %p249 = scmp.ne.s32.totalorder %s241, %s243
      %p250 = scmp.eq.s32.totalorder %s34, 1
      %p251 = por %p249, %p250
      %p252 = scmp.ne.s32.totalorder %s243, %s244
      %p253 = scmp.eq.s32.totalorder %s34, 0
      %p254 = por %p252, %p253
      %p255 = scmp.ne.s32.totalorder %s243, %s244
      %p256 = scmp.eq.s32.totalorder %s35, 1
      %p257 = por %p255, %p256
      %p259 = scmp.ne.s32.totalorder %s244, %s258
      %p260 = scmp.eq.s32.totalorder %s35, 0
      %p261 = por %p259, %p260
      %s263 = sadd.s32 %s262, 1
      %p266 = scmp.eq.s32.totalorder %s29, 1
      %p267 = scmp.ne.s32.totalorder %s262, %s264
      %p268 = scmp.eq.s32.totalorder %s29, 0
      %p269 = por %p267, %p268
      %p270 = scmp.ne.s32.totalorder %s262, %s264
      %p271 = scmp.eq.s32.totalorder %s34, 1
      %p272 = por %p270, %p271
      %p273 = scmp.ne.s32.totalorder %s264, %s265
      %p274 = scmp.eq.s32.totalorder %s34, 0
      %p275 = por %p273, %p274
      %p276 = scmp.ne.s32.totalorder %s264, %s265
      %p277 = scmp.eq.s32.totalorder %s35, 1
      %p278 = por %p276, %p277
      %p280 = scmp.ne.s32.totalorder %s265, %s279
      %p281 = scmp.eq.s32.totalorder %s35, 0
      %p282 = por %p280, %p281
      %s283 = ssub.s32 %s29, %s36
      %p284 = scmp.eq.s32.totalorder %s283, 0
      %s286 = sadd.s32 %s285, 1
      %s287 = scalar_select %p284, %s285, %s286
      %p290 = pneg %p284
      %p291 = scmp.eq.s32.totalorder %s29, 1
      %p292 = por %p290, %p291
      %p293 = scmp.ne.s32.totalorder %s285, %s288
      %p294 = scmp.eq.s32.totalorder %s29, 0
      %p295 = por %p293, %p294
      %p296 = scmp.ne.s32.totalorder %s285, %s288
      %p297 = scmp.eq.s32.totalorder %s34, 1
      %p298 = por %p296, %p297
      %p299 = scmp.ne.s32.totalorder %s288, %s289
      %p300 = scmp.eq.s32.totalorder %s34, 0
      %p301 = por %p299, %p300
      %p302 = scmp.ne.s32.totalorder %s288, %s289
      %p303 = scmp.eq.s32.totalorder %s35, 1
      %p304 = por %p302, %p303
      %p306 = scmp.ne.s32.totalorder %s289, %s305
      %p307 = scmp.eq.s32.totalorder %s35, 0
      %p308 = por %p306, %p307
      %s309 = ssub.s32 %s29, %s36
      %p310 = scmp.eq.s32.totalorder %s309, 0
      %s312 = sadd.s32 %s311, 1
      %s313 = scalar_select %p310, %s311, %s312
      %p316 = pneg %p310
      %p317 = scmp.eq.s32.totalorder %s29, 1
      %p318 = por %p316, %p317
      %p319 = scmp.ne.s32.totalorder %s311, %s314
      %p320 = scmp.eq.s32.totalorder %s29, 0
      %p321 = por %p319, %p320
      %p322 = scmp.ne.s32.totalorder %s311, %s314
      %p323 = scmp.eq.s32.totalorder %s34, 1
      %p324 = por %p322, %p323
      %p325 = scmp.ne.s32.totalorder %s314, %s315
      %p326 = scmp.eq.s32.totalorder %s34, 0
      %p327 = por %p325, %p326
      %p328 = scmp.ne.s32.totalorder %s314, %s315
      %p329 = scmp.eq.s32.totalorder %s35, 1
      %p330 = por %p328, %p329
      %p332 = scmp.ne.s32.totalorder %s315, %s331
      %p333 = scmp.eq.s32.totalorder %s35, 0
      %p334 = por %p332, %p333
      %p335 = scmp.le.s32.totalorder 1, %s29
      %p336 = scmp.lt.s32.totalorder %s29, 3
      %p337 = pnand %p335, %p336
      %p338 = pneg %p337
      // Predicated region
      $region9: #{decoder_layer.4} parent=5 // pred_check
        _
      $region10: #{decoder_layer.4} parent=5 // pred_check_branch
        %340 = sbr.rel (%p337) target = $region12
      $region11: #{decoder_layer.4} parent=5 // pred_region
        %s341 = ssub.s32 %s29, 1
        // Predicated region
        $region13: #{decoder_layer.4} parent=11 // pred_check
          %p342 = pneg %p128
        $region14: #{decoder_layer.4} parent=11 // pred_check_branch
          %344 = sbr.rel (%p342) target = $region16
        $region15: #{decoder_layer.4} parent=11 // pred_region
          %346 = vsyncadd [#allocation6], 0
          %s347 = sshll.u32 %s3, 4
          %s348 = int_to_ptr.hbm [resolvable:$true] %s347
          %s349 = sshll.u32 [#allocation5], 4
          %s350 = int_to_ptr.vmem [resolvable:$true] %s349
          %355 = dma.hbm_to_vmem [thread:$0]  %s348, 256, %s350, [#allocation6], 64, 64, 4
        $region16: #{decoder_layer.4} parent=11 // pred_fallthru
          _
        // Predicated region
        $region17: #{decoder_layer.4} parent=11 // pred_check
          %p356 = pneg %p149
        $region18: #{decoder_layer.4} parent=11 // pred_check_branch
          %358 = sbr.rel (%p356) target = $region20
        $region19: #{decoder_layer.4} parent=11 // pred_region
          _
        $region20: #{decoder_layer.4} parent=11 // pred_fallthru
          _
        // Predicated region
        $region21: #{decoder_layer.4} parent=11 // pred_check
          %p359 = pneg %p170
        $region22: #{decoder_layer.4} parent=11 // pred_check_branch
          %361 = sbr.rel (%p359) target = $region24
        $region23: #{decoder_layer.4} parent=11 // pred_region
          %363 = vsyncadd [#allocation6], 0
          %s364 = sshll.u32 %s5, 4
          %s365 = int_to_ptr.hbm [resolvable:$true] %s364
          %s366 = sshll.u32 [#allocation7], 4
          %s367 = int_to_ptr.vmem [resolvable:$true] %s366
          %372 = dma.hbm_to_vmem [thread:$0]  %s365, 256, %s367, [#allocation6], 64, 64, 4
        $region24: #{decoder_layer.4} parent=11 // pred_fallthru
          _
        // Predicated region
        $region25: #{decoder_layer.4} parent=11 // pred_check
          %p373 = pneg %p191
        $region26: #{decoder_layer.4} parent=11 // pred_check_branch
          %375 = sbr.rel (%p373) target = $region28
        $region27: #{decoder_layer.4} parent=11 // pred_region
          %377 = vsyncadd [#allocation9], 0
          %s379 = sshll.u32 %s6, 4
          %s380 = int_to_ptr.hbm [resolvable:$true] %s379
          %s381 = sshll.u32 [#allocation8], 4
          %s382 = int_to_ptr.vmem [resolvable:$true] %s381
          %384 = dma.hbm_to_vmem [thread:$0]  %s380, 16, %s382, [#allocation9]
        $region28: #{decoder_layer.4} parent=11 // pred_fallthru
          _
        // Predicated region
        $region29: #{decoder_layer.4} parent=11 // pred_check
          %p385 = pneg %p212
        $region30: #{decoder_layer.4} parent=11 // pred_check_branch
          %387 = sbr.rel (%p385) target = $region32
        $region31: #{decoder_layer.4} parent=11 // pred_region
          %389 = vsyncadd [#allocation9], 0
          %s390 = sshll.u32 %s7, 4
          %s391 = int_to_ptr.hbm [resolvable:$true] %s390
          %s392 = sshll.u32 [#allocation10], 4
          %s393 = int_to_ptr.vmem [resolvable:$true] %s392
          %398 = dma.hbm_to_vmem [thread:$0]  %s391, 256, %s393, [#allocation9], 64, 64, 4
        $region32: #{decoder_layer.4} parent=11 // pred_fallthru
          _
        // Predicated region
        $region33: #{decoder_layer.4} parent=11 // pred_check
          %p399 = pneg %p233
        $region34: #{decoder_layer.4} parent=11 // pred_check_branch
          %401 = sbr.rel (%p399) target = $region36
        $region35: #{decoder_layer.4} parent=11 // pred_region
          %403 = vsyncadd [#allocation12], 0
          %s405 = sshll.u32 %s8, 4
          %s406 = int_to_ptr.hbm [resolvable:$true] %s405
          %s407 = sshll.u32 [#allocation11], 4
          %s408 = int_to_ptr.vmem [resolvable:$true] %s407
          %410 = dma.hbm_to_vmem [thread:$0]  %s406, 16, %s408, [#allocation12]
        $region36: #{decoder_layer.4} parent=11 // pred_fallthru
          _
        // Predicated region
        $region37: #{decoder_layer.4} parent=11 // pred_check
          %p411 = pneg %p254
        $region38: #{decoder_layer.4} parent=11 // pred_check_branch
          %413 = sbr.rel (%p411) target = $region40
        $region39: #{decoder_layer.4} parent=11 // pred_region
          %415 = vsyncadd [#allocation12], 0
          %s417 = sshll.u32 %s9, 4
          %s418 = int_to_ptr.hbm [resolvable:$true] %s417
          %s419 = sshll.u32 [#allocation13], 4
          %s420 = int_to_ptr.vmem [resolvable:$true] %s419
          %422 = dma.hbm_to_vmem [thread:$0]  %s418, 16, %s420, [#allocation12]
        $region40: #{decoder_layer.4} parent=11 // pred_fallthru
          _
        // Predicated region
        $region41: #{decoder_layer.4} parent=11 // pred_check
          %p423 = pneg %p275
        $region42: #{decoder_layer.4} parent=11 // pred_check_branch
          %425 = sbr.rel (%p423) target = $region44
        $region43: #{decoder_layer.4} parent=11 // pred_region
          %427 = vsyncadd [#allocation15], 0
          %s429 = sshll.u32 %s10, 4
          %s430 = int_to_ptr.hbm [resolvable:$true] %s429
          %s431 = sshll.u32 [#allocation14], 4
          %s432 = int_to_ptr.vmem [resolvable:$true] %s431
          %434 = dma.hbm_to_vmem [thread:$0]  %s430, 16, %s432, [#allocation15]
        $region44: #{decoder_layer.4} parent=11 // pred_fallthru
          _
      $region12: #{decoder_layer.4} parent=5 // pred_fallthru
        _
      %p435 = scmp.lt.s32.totalorder %s29, 2
      // Predicated region
      $region45: #{decoder_layer.4} parent=5 // pred_check
        %p436 = pneg %p435
      $region46: #{decoder_layer.4} parent=5 // pred_check_branch
        %438 = sbr.rel (%p436) target = $region48
      $region47: #{decoder_layer.4} parent=5 // pred_region
        // Predicated region
        $region49: #{decoder_layer.4} parent=47 // pred_check
          %p439 = pneg %p49
        $region50: #{decoder_layer.4} parent=47 // pred_check_branch
          %441 = sbr.rel (%p439) target = $region52
        $region51: #{decoder_layer.4} parent=47 // pred_region
          %p442 = scmp.lt.s32.totalorder %s29, 1
          %s443 = scalar_select %p442, %s29, 1
          %s444 = smul.addr %s443, 8
          %s445 = scalar_lea.vmem %s0, %s444
        $region52: #{decoder_layer.4} parent=47 // pred_fallthru
          _
        // Predicated region
        $region53: #{decoder_layer.4} parent=47 // pred_check
          %p446 = pneg %p75
        $region54: #{decoder_layer.4} parent=47 // pred_check_branch
          %448 = sbr.rel (%p446) target = $region56
        $region55: #{decoder_layer.4} parent=47 // pred_region
          %s449 = sand.u32 %s65, 1
          %s450 = scalar_lea.sflag [#allocation3], %s449
          %s451 = sand.u32 %s65, 1
          %s452 = smul.addr %s451, 8
          %s453 = scalar_lea.vmem [#allocation2], %s452
          %455 = vsyncadd %s450, 0
          %s456 = smul.addr %s29, 8
          %s457 = scalar_lea.hbm %s1, %s456
          %s459 = sshll.u32 %s457, 4
          %s460 = int_to_ptr.hbm [resolvable:$true] %s459
          %s461 = sshll.u32 %s453, 4
          %s462 = int_to_ptr.vmem [resolvable:$true] %s461
          %464 = dma.hbm_to_vmem [thread:$0]  %s460, 128, %s462, %s450
        $region56: #{decoder_layer.4} parent=47 // pred_fallthru
          _
        // Predicated region
        $region57: #{decoder_layer.4} parent=47 // pred_check
          %p465 = pneg %p101
        $region58: #{decoder_layer.4} parent=47 // pred_check_branch
          %467 = sbr.rel (%p465) target = $region60
        $region59: #{decoder_layer.4} parent=47 // pred_region
          %p468 = scmp.lt.s32.totalorder %s29, 1
          %s469 = scalar_select %p468, %s29, 1
          %s470 = smul.addr %s469, 8
          %s471 = scalar_lea.vmem %s2, %s470
        $region60: #{decoder_layer.4} parent=47 // pred_fallthru
          _
      $region48: #{decoder_layer.4} parent=5 // pred_fallthru
        _
      %p472 = scmp.le.s32.totalorder 1, %s29
      %p473 = scmp.lt.s32.totalorder %s29, 3
      %p474 = pnand %p472, %p473
      %p475 = pneg %p474
      // Predicated region
      $region61: #{decoder_layer.4} parent=5 // pred_check
        _
      $region62: #{decoder_layer.4} parent=5 // pred_check_branch
        %477 = sbr.rel (%p474) target = $region64
      $region63: #{decoder_layer.4} parent=5 // pred_region
        %s478 = ssub.s32 %s29, 1
        %s479 = sand.u32 %s68, 1
        %s480 = scalar_lea.sflag [#allocation3], %s479
        %s481 = sand.u32 %s68, 1
        %s482 = smul.addr %s481, 8
        %s483 = scalar_lea.vmem [#allocation2], %s482
        // Predicated region
        $region65: #{decoder_layer.4} parent=63 // pred_check
          %p484 = pneg %p81
        $region66: #{decoder_layer.4} parent=63 // pred_check_branch
          %486 = sbr.rel (%p484) target = $region68
        $region67: #{decoder_layer.4} parent=63 // pred_region
          %488 = dma.done %s480, 128
        $region68: #{decoder_layer.4} parent=63 // pred_fallthru
          _
        // Predicated region
        $region69: #{decoder_layer.4} parent=63 // pred_check
          %p489 = pneg %p128
        $region70: #{decoder_layer.4} parent=63 // pred_check_branch
          %491 = sbr.rel (%p489) target = $region72
        $region71: #{decoder_layer.4} parent=63 // pred_region
          %493 = dma.done [#allocation6], 256
        $region72: #{decoder_layer.4} parent=63 // pred_fallthru
          _
        // Predicated region
        $region73: #{decoder_layer.4} parent=63 // pred_check
          %p494 = pneg %p170
        $region74: #{decoder_layer.4} parent=63 // pred_check_branch
          %496 = sbr.rel (%p494) target = $region76
        $region75: #{decoder_layer.4} parent=63 // pred_region
          %498 = dma.done [#allocation6], 256
        $region76: #{decoder_layer.4} parent=63 // pred_fallthru
          _
        // Predicated region
        $region77: #{decoder_layer.4} parent=63 // pred_check
          %p499 = pneg %p191
        $region78: #{decoder_layer.4} parent=63 // pred_check_branch
          %501 = sbr.rel (%p499) target = $region80
        $region79: #{decoder_layer.4} parent=63 // pred_region
          %503 = dma.done [#allocation9], 16
        $region80: #{decoder_layer.4} parent=63 // pred_fallthru
          _
        // Predicated region
        $region81: #{decoder_layer.4} parent=63 // pred_check
          %p504 = pneg %p212
        $region82: #{decoder_layer.4} parent=63 // pred_check_branch
          %506 = sbr.rel (%p504) target = $region84
        $region83: #{decoder_layer.4} parent=63 // pred_region
          %508 = dma.done [#allocation9], 256
        $region84: #{decoder_layer.4} parent=63 // pred_fallthru
          _
        // Predicated region
        $region85: #{decoder_layer.4} parent=63 // pred_check
          %p509 = pneg %p233
        $region86: #{decoder_layer.4} parent=63 // pred_check_branch
          %511 = sbr.rel (%p509) target = $region88
        $region87: #{decoder_layer.4} parent=63 // pred_region
          %513 = dma.done [#allocation12], 16
        $region88: #{decoder_layer.4} parent=63 // pred_fallthru
          _
        // Predicated region
        $region89: #{decoder_layer.4} parent=63 // pred_check
          %p514 = pneg %p254
        $region90: #{decoder_layer.4} parent=63 // pred_check_branch
          %516 = sbr.rel (%p514) target = $region92
        $region91: #{decoder_layer.4} parent=63 // pred_region
          %518 = dma.done [#allocation12], 16
        $region92: #{decoder_layer.4} parent=63 // pred_fallthru
          _
        // Predicated region
        $region93: #{decoder_layer.4} parent=63 // pred_check
          %p519 = pneg %p275
        $region94: #{decoder_layer.4} parent=63 // pred_check_branch
          %521 = sbr.rel (%p519) target = $region96
        $region95: #{decoder_layer.4} parent=63 // pred_region
          %523 = dma.done [#allocation15], 16
        $region96: #{decoder_layer.4} parent=63 // pred_fallthru
          _
        %p524 = scmp.lt.s32.totalorder %s34, 1
        %s525 = scalar_select %p524, %s34, 1
        %s526 = smul.addr %s525, 8
        %s527 = scalar_lea.vmem %s0, %s526
        %p528 = pneg %p55
        %p529 = pneg %p52
        %s530 = sand.u32 %s68, 1
        %s531 = scalar_lea.sflag [#allocation3], %s530
        %s532 = sand.u32 %s68, 1
        %s533 = smul.addr %s532, 8
        %s534 = scalar_lea.vmem [#allocation2], %s533
        %p535 = pneg %p81
        %p536 = pneg %p78
        %p537 = scmp.lt.s32.totalorder %s34, 1
        %s538 = scalar_select %p537, %s34, 1
        %s539 = smul.addr %s538, 8
        %s540 = scalar_lea.vmem %s2, %s539
        %p541 = pneg %p107
        %p542 = pneg %p104
        %p543 = pneg %p128
        %p544 = pneg %p125
        %p545 = pneg %p149
        %p546 = pneg %p146
        %p547 = pneg %p170
        %p548 = pneg %p167
        %p549 = pneg %p191
        %p550 = pneg %p188
        %p551 = pneg %p212
        %p552 = pneg %p209
        %p553 = pneg %p233
        %p554 = pneg %p230
        %p555 = pneg %p254
        %p556 = pneg %p251
        %p557 = pneg %p275
        %p558 = pneg %p272
        %p559 = pneg %p301
        %p560 = pneg %p298
        %p561 = scmp.lt.s32.totalorder %s34, 1
        %s562 = scalar_select %p561, %s34, 1
        %s563 = smul.addr %s562, 8
        %s564 = scalar_lea.vmem %s11, %s563
        %p565 = pneg %p327
        %p566 = pneg %p324
        %s567 = sand.u32 %s314, 1
        %s568 = scalar_lea.sflag [#allocation4], %s567
        %s569 = sand.u32 %s314, 1
        %s570 = smul.addr %s569, 32
        %s571 = scalar_lea.vmem [#allocation16], %s570
        %p572 = scmp.lt.s32.totalorder %s34, 1
        %s573 = scalar_select %p572, %s34, 1
        %s574 = smul.addr %s573, 8
        %s575 = scalar_lea.vmem %s0, %s574
        %p576 = scmp.lt.s32.totalorder %s34, 1
        %s577 = scalar_select %p576, %s34, 1
        %s578 = smul.addr %s577, 8
        %s579 = scalar_lea.vmem %s2, %s578
        %p580 = scmp.lt.s32.totalorder %s34, 1
        %s581 = scalar_select %p580, %s34, 1
        %s582 = smul.addr %s581, 8
        %s583 = scalar_lea.vmem %s11, %s582
        %v585 = vld [vmem:[%s575] sm:$0xff]
        %v586 = vld [vmem:[%s483] sm:$0xff]
        %v587 = vpack.c.bf16 %v585, %v585
        %v588 = vld [vmem:[#allocation5] sm:$0xf]
        %v589 = vld [vmem:[#allocation5 + $0x4] sm:$0xf]
        %v590 = vld [vmem:[#allocation5 + $0x8] sm:$0xf]
        %v591 = vld [vmem:[#allocation5 + $0xc] sm:$0xf]
        %v592 = vld [vmem:[%s4] sm:$0x1]
        %v594 = vperm.slane %v592, 0
        %v600 = vunpack.c.l.b16 %v588
        %v601 = vunpack.c.l.b16 %v589
        %v602 = vunpack.c.l.b16 %v590
        %v603 = vunpack.c.l.b16 %v591
        %v604 = vpack.c.b16 %v601, %v600
        %v605 = vpack.c.b16 %v603, %v602
        %vm608 = vcmask 261120
        %v610 = vsel %vm608, %v587, 0
        %612 = vmatpush.bf16.msra.mxu0 0
        %613 = vmatpush.bf16.msra.mxu0 0
        %614 = vmatpush.bf16.msra.mxu0 0
        %615 = vmatpush.bf16.msra.mxu0 0
        %616 = vmatpush.bf16.msra.mxu0 0
        %617 = vmatpush.bf16.msra.mxu0 0
        %618 = vmatpush.bf16.msra.mxu0 %v605
        %619 = vmatpush.bf16.msra.mxu0 %v604
        %620 = vmatmul.bf16.gmra.mxu0 %v610
        %v621 = vpop.f32.mrf.mxu0
        %v622 = vadd.f32 %v594, %v621
        %v623 = vpop.f32.mrf.mxu0
        %624 = vdwg.mxu0
        %v625 = vpack.c.bf16 %v586, %v586
        %v626 = vld [vmem:[#allocation7] sm:$0xf]
        %v627 = vld [vmem:[#allocation7 + $0x4] sm:$0xf]
        %v628 = vld [vmem:[#allocation7 + $0x8] sm:$0xf]
        %v629 = vld [vmem:[#allocation7 + $0xc] sm:$0xf]
        %v630 = vld [vmem:[#allocation8] sm:$0x1]
        %v632 = vperm.slane %v630, 0
        %v638 = vunpack.c.l.b16 %v626
        %v639 = vunpack.c.l.b16 %v627
        %v640 = vunpack.c.l.b16 %v628
        %v641 = vunpack.c.l.b16 %v629
        %v642 = vpack.c.b16 %v639, %v638
        %v643 = vpack.c.b16 %v641, %v640
        %v647 = vsel %vm608, %v625, 0
        %649 = vmatpush.bf16.msra.mxu0 0
        %650 = vmatpush.bf16.msra.mxu0 0
        %651 = vmatpush.bf16.msra.mxu0 0
        %652 = vmatpush.bf16.msra.mxu0 0
        %653 = vmatpush.bf16.msra.mxu0 0
        %654 = vmatpush.bf16.msra.mxu0 0
        %655 = vmatpush.bf16.msra.mxu0 %v643
        %656 = vmatpush.bf16.msra.mxu0 %v642
        %657 = vmatmul.bf16.gmra.mxu0 %v647
        %v658 = vpop.f32.mrf.mxu0
        %v659 = vadd.f32 %v632, %v658
        %v660 = vpop.f32.mrf.mxu0
        %661 = vdwg.mxu0
        %v662 = vld [vmem:[%s579] sm:$0xff]
        %v663 = vld [vmem:[#allocation10] sm:$0xf]
        %v664 = vld [vmem:[#allocation10 + $0x4] sm:$0xf]
        %v665 = vld [vmem:[#allocation10 + $0x8] sm:$0xf]
        %v666 = vld [vmem:[#allocation10 + $0xc] sm:$0xf]
        %v667 = vmul.f32 %v622, 0.35355338
        %v668 = vpack.c.bf16 %v667, %v667
        %v669 = vpack.c.bf16 %v659, %v659
        %vm670 = vcmask 64512
        %v672 = vsel %vm670, %v668, 0
        %v675 = vsel %vm670, %v669, 0
        %677 = vmatpush.bf16.xpose.msra.mxu0 0
        %678 = vmatpush.bf16.xpose.msra.mxu0 0
        %679 = vmatpush.bf16.xpose.msra.mxu0 0
        %680 = vmatpush.bf16.xpose.msra.mxu0 0
        %681 = vmatpush.bf16.xpose.msra.mxu0 0
        %682 = vmatpush.bf16.xpose.msra.mxu0 0
        %683 = vmatpush.bf16.xpose.msra.mxu0 0
        %684 = vmatpush.bf16.xpose.msra.mxu0 %v675
        %685 = vmatmul.bf16.gmra.mxu0 %v672
        %v686 = vpop.f32.mrf.mxu0
        %v687 = vadd.f32 0.0, %v686
        %v688 = vpop.f32.mrf.mxu0
        %689 = vdwg.mxu0
        %vm690 = vcmp.eq.f32.partialorder %v662, 0.0
        %v691 = vsel %vm690, -1e+10, %v687
        %v692 = vsel %vm670, %v691, -inf
        %693 = vmax.xlane.f32.xlu0 %v692
        %v694 = vpop.xlane.xlu0 %693
        %v695 = vsub.f32 %v691, %v694
        %v696 = vmul.f32 %v695, 1.442695
        %v697 = vpow.pop %v696
        %v698 = vsel %vm670, %v697, 0.0
        %699 = vadd.xlane.f32.xlu0 %v698
        %v700 = vpop.xlane.xlu0 %699
        %v701 = vrcp.pop %v700
        %v702 = vmul.f32 %v697, %v701
        %703 = vst.msk [vmem:[%s571] sm:$0xff] %vm670, %v702
        %v704 = vpack.c.bf16 %v702, %v702
        %706 = vrot.lane.b32.xlu0 %v669, 96
        %v707 = vpop.permute.xlu0 %706
        %v709 = vsel %vm670, %v704, 0
        %vm711 = vcmask 1043456
        %v713 = vsel %vm711, %v707, 0
        %715 = vmatpush.bf16.msra.mxu0 0
        %716 = vmatpush.bf16.msra.mxu0 0
        %717 = vmatpush.bf16.msra.mxu0 0
        %718 = vmatpush.bf16.msra.mxu0 0
        %719 = vmatpush.bf16.msra.mxu0 0
        %720 = vmatpush.bf16.msra.mxu0 0
        %721 = vmatpush.bf16.msra.mxu0 0
        %722 = vmatpush.bf16.msra.mxu0 %v713
        %723 = vmatmul.bf16.gmra.mxu0 %v709
        %v724 = vpop.f32.mrf.mxu0
        %v725 = vadd.f32 0.0, %v724
        %v726 = vpop.f32.mrf.mxu0
        %727 = vdwg.mxu0
        %v728 = vpack.c.bf16 %v725, %v725
        %730 = vrot.lane.b32.xlu0 %v668, 120
        %v731 = vpop.permute.xlu0 %730
        %732 = vrot.lane.b32.xlu0 %v669, 120
        %v733 = vpop.permute.xlu0 %732
        %v735 = vsel %vm670, %v731, 0
        %v738 = vsel %vm670, %v733, 0
        %740 = vmatpush.bf16.xpose.msra.mxu0 0
        %741 = vmatpush.bf16.xpose.msra.mxu0 0
        %742 = vmatpush.bf16.xpose.msra.mxu0 0
        %743 = vmatpush.bf16.xpose.msra.mxu0 0
        %744 = vmatpush.bf16.xpose.msra.mxu0 0
        %745 = vmatpush.bf16.xpose.msra.mxu0 0
        %746 = vmatpush.bf16.xpose.msra.mxu0 0
        %747 = vmatpush.bf16.xpose.msra.mxu0 %v738
        %748 = vmatmul.bf16.gmra.mxu0 %v735
        %v749 = vpop.f32.mrf.mxu0
        %v750 = vadd.f32 0.0, %v749
        %v751 = vpop.f32.mrf.mxu0
        %752 = vdwg.mxu0
        %v753 = vsel %vm690, -1e+10, %v750
        %v754 = vsel %vm670, %v753, -inf
        %755 = vmax.xlane.f32.xlu0 %v754
        %v756 = vpop.xlane.xlu0 %755
        %v757 = vsub.f32 %v753, %v756
        %v758 = vmul.f32 %v757, 1.442695
        %v759 = vpow.pop %v758
        %v760 = vsel %vm670, %v759, 0.0
        %761 = vadd.xlane.f32.xlu0 %v760
        %v762 = vpop.xlane.xlu0 %761
        %v763 = vrcp.pop %v762
        %v764 = vmul.f32 %v759, %v763
        %s765 = scalar_lea.vmem %s571, 8 [#allocation16]
        %766 = vst.msk [vmem:[%s765] sm:$0xff] %vm670, %v764
        %v767 = vpack.c.bf16 %v764, %v764
        %768 = vrot.lane.b32.xlu0 %v669, 88
        %v769 = vpop.permute.xlu0 %768
        %v771 = vsel %vm670, %v767, 0
        %v774 = vsel %vm711, %v769, 0
        %776 = vmatpush.bf16.msra.mxu0 0
        %777 = vmatpush.bf16.msra.mxu0 0
        %778 = vmatpush.bf16.msra.mxu0 0
        %779 = vmatpush.bf16.msra.mxu0 0
        %780 = vmatpush.bf16.msra.mxu0 0
        %781 = vmatpush.bf16.msra.mxu0 0
        %782 = vmatpush.bf16.msra.mxu0 0
        %783 = vmatpush.bf16.msra.mxu0 %v774
        %784 = vmatmul.bf16.gmra.mxu0 %v771
        %v785 = vpop.f32.mrf.mxu0
        %v786 = vadd.f32 0.0, %v785
        %v787 = vpop.f32.mrf.mxu0
        %788 = vdwg.mxu0
        %v789 = vpack.c.bf16 %v786, %v786
        %v791 = vsel %vm670, %v789, 0
        %v794 = vsel %vm711, %v664, 0
        %796 = vmatpush.bf16.msra.mxu0 0
        %797 = vmatpush.bf16.msra.mxu0 0
        %798 = vmatpush.bf16.msra.mxu0 0
        %799 = vmatpush.bf16.msra.mxu0 0
        %800 = vmatpush.bf16.msra.mxu0 0
        %801 = vmatpush.bf16.msra.mxu0 0
        %802 = vmatpush.bf16.msra.mxu0 0
        %803 = vmatpush.bf16.msra.mxu0 %v794
        %804 = vmatmul.bf16.gmra.mxu0 %v791
        %v805 = vpop.f32.mrf.mxu0
        %v806 = vadd.f32 0.0, %v805
        %v807 = vpop.f32.mrf.mxu0
        %808 = vdwg.mxu0
        %v810 = vsel %vm670, %v728, 0
        %v813 = vsel %vm711, %v663, 0
        %815 = vmatpush.bf16.msra.mxu0 0
        %816 = vmatpush.bf16.msra.mxu0 0
        %817 = vmatpush.bf16.msra.mxu0 0
        %818 = vmatpush.bf16.msra.mxu0 0
        %819 = vmatpush.bf16.msra.mxu0 0
        %820 = vmatpush.bf16.msra.mxu0 0
        %821 = vmatpush.bf16.msra.mxu0 0
        %822 = vmatpush.bf16.msra.mxu0 %v813
        %823 = vmatmul.bf16.gmra.mxu0 %v810
        %v824 = vpop.f32.mrf.mxu0
        %v825 = vadd.f32 %v806, %v824
        %v826 = vpop.f32.mrf.mxu0
        %827 = vdwg.mxu0
        %828 = vrot.lane.b32.xlu0 %v668, 112
        %v829 = vpop.permute.xlu0 %828
        %830 = vrot.lane.b32.xlu0 %v669, 112
        %v831 = vpop.permute.xlu0 %830
        %v833 = vsel %vm670, %v829, 0
        %v836 = vsel %vm670, %v831, 0
        %838 = vmatpush.bf16.xpose.msra.mxu0 0
        %839 = vmatpush.bf16.xpose.msra.mxu0 0
        %840 = vmatpush.bf16.xpose.msra.mxu0 0
        %841 = vmatpush.bf16.xpose.msra.mxu0 0
        %842 = vmatpush.bf16.xpose.msra.mxu0 0
        %843 = vmatpush.bf16.xpose.msra.mxu0 0
        %844 = vmatpush.bf16.xpose.msra.mxu0 0
        %845 = vmatpush.bf16.xpose.msra.mxu0 %v836
        %846 = vmatmul.bf16.gmra.mxu0 %v833
        %v847 = vpop.f32.mrf.mxu0
        %v848 = vadd.f32 0.0, %v847
        %v849 = vpop.f32.mrf.mxu0
        %850 = vdwg.mxu0
        %v851 = vsel %vm690, -1e+10, %v848
        %v852 = vsel %vm670, %v851, -inf
        %853 = vmax.xlane.f32.xlu0 %v852
        %v854 = vpop.xlane.xlu0 %853
        %v855 = vsub.f32 %v851, %v854
        %v856 = vmul.f32 %v855, 1.442695
        %v857 = vpow.pop %v856
        %v858 = vsel %vm670, %v857, 0.0
        %859 = vadd.xlane.f32.xlu0 %v858
        %v860 = vpop.xlane.xlu0 %859
        %v861 = vrcp.pop %v860
        %v862 = vmul.f32 %v857, %v861
        %s863 = scalar_lea.vmem %s571, 16 [#allocation16]
        %864 = vst.msk [vmem:[%s863] sm:$0xff] %vm670, %v862
        %v865 = vpack.c.bf16 %v862, %v862
        %866 = vrot.lane.b32.xlu0 %v669, 80
        %v867 = vpop.permute.xlu0 %866
        %v869 = vsel %vm670, %v865, 0
        %v872 = vsel %vm711, %v867, 0
        %874 = vmatpush.bf16.msra.mxu0 0
        %875 = vmatpush.bf16.msra.mxu0 0
        %876 = vmatpush.bf16.msra.mxu0 0
        %877 = vmatpush.bf16.msra.mxu0 0
        %878 = vmatpush.bf16.msra.mxu0 0
        %879 = vmatpush.bf16.msra.mxu0 0
        %880 = vmatpush.bf16.msra.mxu0 0
        %881 = vmatpush.bf16.msra.mxu0 %v872
        %882 = vmatmul.bf16.gmra.mxu0 %v869
        %v883 = vpop.f32.mrf.mxu0
        %v884 = vadd.f32 0.0, %v883
        %v885 = vpop.f32.mrf.mxu0
        %886 = vdwg.mxu0
        %v887 = vpack.c.bf16 %v884, %v884
        %v889 = vsel %vm670, %v887, 0
        %v892 = vsel %vm711, %v665, 0
        %894 = vmatpush.bf16.msra.mxu0 0
        %895 = vmatpush.bf16.msra.mxu0 0
        %896 = vmatpush.bf16.msra.mxu0 0
        %897 = vmatpush.bf16.msra.mxu0 0
        %898 = vmatpush.bf16.msra.mxu0 0
        %899 = vmatpush.bf16.msra.mxu0 0
        %900 = vmatpush.bf16.msra.mxu0 0
        %901 = vmatpush.bf16.msra.mxu0 %v892
        %902 = vmatmul.bf16.gmra.mxu0 %v889
        %v903 = vpop.f32.mrf.mxu0
        %v904 = vadd.f32 0.0, %v903
        %v905 = vpop.f32.mrf.mxu0
        %906 = vdwg.mxu0
        %v907 = vadd.f32 %v825, %v904
        %908 = vrot.lane.b32.xlu0 %v668, 104
        %v909 = vpop.permute.xlu0 %908
        %910 = vrot.lane.b32.xlu0 %v669, 104
        %v911 = vpop.permute.xlu0 %910
        %v913 = vsel %vm670, %v909, 0
        %v916 = vsel %vm670, %v911, 0
        %918 = vmatpush.bf16.xpose.msra.mxu0 0
        %919 = vmatpush.bf16.xpose.msra.mxu0 0
        %920 = vmatpush.bf16.xpose.msra.mxu0 0
        %921 = vmatpush.bf16.xpose.msra.mxu0 0
        %922 = vmatpush.bf16.xpose.msra.mxu0 0
        %923 = vmatpush.bf16.xpose.msra.mxu0 0
        %924 = vmatpush.bf16.xpose.msra.mxu0 0
        %925 = vmatpush.bf16.xpose.msra.mxu0 %v916
        %926 = vmatmul.bf16.gmra.mxu0 %v913
        %v927 = vpop.f32.mrf.mxu0
        %v928 = vadd.f32 0.0, %v927
        %v929 = vpop.f32.mrf.mxu0
        %930 = vdwg.mxu0
        %v931 = vsel %vm690, -1e+10, %v928
        %v932 = vsel %vm670, %v931, -inf
        %933 = vmax.xlane.f32.xlu0 %v932
        %v934 = vpop.xlane.xlu0 %933
        %v935 = vsub.f32 %v931, %v934
        %v936 = vmul.f32 %v935, 1.442695
        %v937 = vpow.pop %v936
        %v938 = vsel %vm670, %v937, 0.0
        %939 = vadd.xlane.f32.xlu0 %v938
        %v940 = vpop.xlane.xlu0 %939
        %v941 = vrcp.pop %v940
        %v942 = vmul.f32 %v937, %v941
        %s943 = scalar_lea.vmem %s571, 24 [#allocation16]
        %944 = vst.msk [vmem:[%s943] sm:$0xff] %vm670, %v942
        %v945 = vpack.c.bf16 %v942, %v942
        %946 = vrot.lane.b32.xlu0 %v669, 72
        %v947 = vpop.permute.xlu0 %946
        %v949 = vsel %vm670, %v945, 0
        %v952 = vsel %vm711, %v947, 0
        %954 = vmatpush.bf16.msra.mxu0 0
        %955 = vmatpush.bf16.msra.mxu0 0
        %956 = vmatpush.bf16.msra.mxu0 0
        %957 = vmatpush.bf16.msra.mxu0 0
        %958 = vmatpush.bf16.msra.mxu0 0
        %959 = vmatpush.bf16.msra.mxu0 0
        %960 = vmatpush.bf16.msra.mxu0 0
        %961 = vmatpush.bf16.msra.mxu0 %v952
        %962 = vmatmul.bf16.gmra.mxu0 %v949
        %v963 = vpop.f32.mrf.mxu0
        %v964 = vadd.f32 0.0, %v963
        %v965 = vpop.f32.mrf.mxu0
        %966 = vdwg.mxu0
        %v967 = vpack.c.bf16 %v964, %v964
        %v969 = vsel %vm670, %v967, 0
        %v972 = vsel %vm711, %v666, 0
        %974 = vmatpush.bf16.msra.mxu0 0
        %975 = vmatpush.bf16.msra.mxu0 0
        %976 = vmatpush.bf16.msra.mxu0 0
        %977 = vmatpush.bf16.msra.mxu0 0
        %978 = vmatpush.bf16.msra.mxu0 0
        %979 = vmatpush.bf16.msra.mxu0 0
        %980 = vmatpush.bf16.msra.mxu0 0
        %981 = vmatpush.bf16.msra.mxu0 %v972
        %982 = vmatmul.bf16.gmra.mxu0 %v969
        %v983 = vpop.f32.mrf.mxu0
        %v984 = vadd.f32 0.0, %v983
        %v985 = vpop.f32.mrf.mxu0
        %986 = vdwg.mxu0
        %v987 = vadd.f32 %v907, %v984
        %v988 = vadd.f32 %v585, %v987
        %v989 = vld [vmem:[#allocation11] sm:$0x1]
        %v991 = vperm.slane %v989, 0
        %v993 = vadd.f32 %v988, %v991
        %v994 = vld [vmem:[#allocation13] sm:$0x1]
        %v995 = vld [vmem:[#allocation14] sm:$0x1]
        %v996 = vsel %vm608, %v993, 0.0
        %997 = vadd.xlane.f32.xlu0 %v996
        %v998 = vpop.xlane.xlu0 %997
        %v999 = vrcp.pop 32.0
        %v1000 = vmul.f32 32.0, %v999
        %v1001 = vsub.f32 1.0, %v1000
        %v1002 = vmul.f32 %v999, %v1001
        %v1003 = vadd.f32 %v999, %v1002
        %vm1004 = vweird.f32 %v999
        %v1005 = vsel %vm1004, %v999, %v1003
        %v1006 = vmul.f32 %v998, %v1005
        %v1007 = vsub.f32 %v993, %v1006
        %v1008 = vmul.f32 %v1007, %v1007
        %v1009 = vsel %vm608, %v1008, 0.0
        %1010 = vadd.xlane.f32.xlu0 %v1009
        %v1011 = vpop.xlane.xlu0 %1010
        %v1012 = vmul.f32 %v1011, %v1005
        %v1013 = vadd.f32 %v1012, 1e-05
        %v1014 = vrsqrt.pop %v1013
        %v1015 = vmul.f32 %v1014, %v1013
        %v1016 = vmul.f32 %v1015, %v1014
        %v1017 = vmul.f32 0.5, %v1016
        %v1018 = vsub.f32 1.5, %v1017
        %v1019 = vmul.f32 %v1014, %v1018
        %vm1020 = vweird.f32 %v1013
        %vm1021 = vweird.f32 %v1014
        %vm1022 = vmor %vm1020, %vm1021
        %v1023 = vsel %vm1022, %v1014, %v1019
        %v1024 = vmul.f32 %v1007, %v1023
        %v1026 = vperm.slane %v994, 0
        %v1028 = vmul.f32 %v1024, %v1026
        %v1030 = vperm.slane %v995, 0
        %v1032 = vadd.f32 %v1028, %v1030
        %1033 = vst.msk [vmem:[%s583] sm:$0xff] %vm608, %v1032
        %p1034 = scmp.lt.s32.totalorder %s34, 1
        %s1035 = scalar_select %p1034, %s34, 1
        %s1036 = smul.addr %s1035, 8
        %s1037 = scalar_lea.vmem %s11, %s1036
        %s1038 = sand.u32 %s314, 1
        %s1039 = scalar_lea.sflag [#allocation4], %s1038
        %s1040 = sand.u32 %s314, 1
        %s1041 = smul.addr %s1040, 32
        %s1042 = scalar_lea.vmem [#allocation16], %s1041
        // Predicated region
        $region97: #{decoder_layer.4} parent=63 // pred_check
          %p1043 = pneg %p298
        $region98: #{decoder_layer.4} parent=63 // pred_check_branch
          %1045 = sbr.rel (%p1043) target = $region100
        $region99: #{decoder_layer.4} parent=63 // pred_region
          _
        $region100: #{decoder_layer.4} parent=63 // pred_fallthru
          _
        // Predicated region
        $region101: #{decoder_layer.4} parent=63 // pred_check
          %p1046 = pneg %p324
        $region102: #{decoder_layer.4} parent=63 // pred_check_branch
          %1048 = sbr.rel (%p1046) target = $region104
        $region103: #{decoder_layer.4} parent=63 // pred_region
          %1050 = vsyncadd %s1039, 0
          %s1051 = smul.addr %s34, 4
          %s1052 = smul.addr %s1051, 8
          %s1053 = scalar_lea.hbm %s12, %s1052
          %s1054 = sshll.u32 %s1042, 4
          %s1055 = int_to_ptr.vmem [resolvable:$true] %s1054
          %s1056 = sshll.u32 %s1053, 4
          %s1057 = int_to_ptr.hbm [resolvable:$true] %s1056
          %1062 = dma.vmem_to_hbm [thread:$0]  %s1055, 512, %s1057, %s1039, 128, 128, 8
        $region104: #{decoder_layer.4} parent=63 // pred_fallthru
          _
      $region64: #{decoder_layer.4} parent=5 // pred_fallthru
        _
      %p1063 = scmp.le.s32.totalorder 2, %s29
      // Predicated region
      $region105: #{decoder_layer.4} parent=5 // pred_check
        %p1064 = pneg %p1063
      $region106: #{decoder_layer.4} parent=5 // pred_check_branch
        %1066 = sbr.rel (%p1064) target = $region108
      $region107: #{decoder_layer.4} parent=5 // pred_region
        %s1067 = ssub.s32 %s29, 2
        // Predicated region
        $region109: #{decoder_layer.4} parent=107 // pred_check
          %p1068 = pneg %p304
        $region110: #{decoder_layer.4} parent=107 // pred_check_branch
          %1070 = sbr.rel (%p1068) target = $region112
        $region111: #{decoder_layer.4} parent=107 // pred_region
          %p1071 = scmp.lt.s32.totalorder %s35, 1
          %s1072 = scalar_select %p1071, %s35, 1
          %s1073 = smul.addr %s1072, 8
          %s1074 = scalar_lea.vmem %s11, %s1073
        $region112: #{decoder_layer.4} parent=107 // pred_fallthru
          _
        // Predicated region
        $region113: #{decoder_layer.4} parent=107 // pred_check
          %p1075 = pneg %p330
        $region114: #{decoder_layer.4} parent=107 // pred_check_branch
          %1077 = sbr.rel (%p1075) target = $region116
        $region115: #{decoder_layer.4} parent=107 // pred_region
          %s1078 = sand.u32 %s315, 1
          %s1079 = scalar_lea.sflag [#allocation4], %s1078
          %s1080 = sand.u32 %s315, 1
          %s1081 = smul.addr %s1080, 32
          %s1082 = scalar_lea.vmem [#allocation16], %s1081
          %1084 = dma.done %s1079, 512
        $region116: #{decoder_layer.4} parent=107 // pred_fallthru
          _
      $region108: #{decoder_layer.4} parent=5 // pred_fallthru
        _
    $region6: #{decoder_layer.4} parent=1 // loop_footer
      %s33 = sadd.s32 1, %s29
    $region7: #{decoder_layer.4} parent=1 // loop_footer_branch
      %28 = sbr.rel target = $region3
    $region8: #{decoder_layer.4} parent=1 // loop_exit
      _
    %1085 = vsyncpa [#allocation3], 1
    %s1086 = scalar_lea.sflag [#allocation3], 1
    %1087 = vsyncpa %s1086, 1
    %1088 = vsyncpa [#allocation6], 1
    %1089 = vsyncpa [#allocation9], 1
    %1090 = vsyncpa [#allocation12], 1
    %1091 = vsyncpa [#allocation15], 1
    %1092 = vsyncpa [#allocation4], 1
    %s1093 = scalar_lea.sflag [#allocation4], 1
    %1094 = vsyncpa %s1093, 1

// kernel: decoder_layer.3
$region0: #{decoder_layer.3}
  #allocation0 [shape = 'u32[]', space=smem, size = 0x4, offset = 0x4, fixed_abs, tag = 'smem constant byte address 0x4 - core index']
  #allocation1 [shape = 'u32[72,128]{1,0:T(1,128)}', space=vmem, size = 0x9000, scoped, tag = 'internal scratch']
  %s0 = inlined_call_operand.hbm [shape: f32[2,8,32], index: 0, kind: input, shape index: {}]
  %s1 = inlined_call_operand.vmem [shape: f32[2,8,8], index: 1, kind: input, shape index: {}]
  %s2 = inlined_call_operand.hbm [shape: bf16[32,96], index: 2, kind: input, shape index: {}]
  %s3 = inlined_call_operand.vmem [shape: f32[1,96], index: 3, kind: input, shape index: {}]
  %s4 = inlined_call_operand.hbm [shape: bf16[32,32], index: 4, kind: input, shape index: {}]
  %s5 = inlined_call_operand.vmem [shape: f32[1,32], index: 5, kind: input, shape index: {}]
  %s6 = inlined_call_operand.vmem [shape: f32[1,32], index: 6, kind: input, shape index: {}]
  %s7 = inlined_call_operand.vmem [shape: f32[1,32], index: 7, kind: input, shape index: {}]
  %s8 = inlined_call_operand.vmem [shape: f32[2,8,32], index: 8, kind: output, shape index: {}]
  %s9 = sld [smem:[#allocation0]]
  $region77: #{decoder_layer.3} parent=0
    _
  %s11 = ssub.s32 1, %s9
  %s12 = scalar_select 0, %s11, %s9
  $region1: #{decoder_layer.3} parent=0
    #allocation2 [shape = 'u8[8192]{0}', space=vmem, size = 0x2000, scoped, tag = 'input window, operand 0']
    #allocation3 [shape = 's32[2]{0}', space=sflag, size = 0x8, scoped, tag = 'scoped memory for decoder_layer.3']
    #allocation4 [shape = 'u8[8192]{0}', space=vmem, size = 0x2000, scoped, tag = 'input window, operand 2, single buffered']
    #allocation5 [shape = 's32[1]{0}', space=sflag, size = 0x4, scoped, tag = 'scoped memory for decoder_layer.3']
    #allocation6 [shape = 'u8[8192]{0}', space=vmem, size = 0x2000, scoped, tag = 'input window, operand 4, single buffered']
    %13 = vsyncpa [#allocation3], 0
    %s14 = scalar_lea.sflag [#allocation3], 1
    %15 = vsyncpa %s14, 0
    %16 = vsyncpa [#allocation5], 0
    loop: start=0, step=1, limit=4
    $region2: #{decoder_layer.3} parent=1 // loop_pre_header
      _
    $region3: #{decoder_layer.3} parent=1 // loop_header
      %s18 = sphi 0, %s22
      %p19 = scmp.ge.s32.totalorder %s18, 4
      %s28 = sphi 0, %s30
      %s31 = sphi 0, %s28
      %s32 = sphi 0, %s31
      %s48 = sphi 0, %s32
      %s54 = sphi 0, %s56
      %s57 = sphi 0, %s54
      %s58 = sphi 0, %s57
      %s74 = sphi 0, %s58
      %s78 = sphi 0, %s78
      %s80 = sphi 0, %s78
      %s81 = sphi 0, %s80
      %s95 = sphi 0, %s81
      %s99 = sphi 0, %s99
      %s101 = sphi 0, %s99
      %s102 = sphi 0, %s101
      %s116 = sphi 0, %s102
      %s120 = sphi 0, %s120
      %s122 = sphi 0, %s120
      %s123 = sphi 0, %s122
      %s137 = sphi 0, %s123
      %s141 = sphi 0, %s141
      %s143 = sphi 0, %s141
      %s144 = sphi 0, %s143
      %s158 = sphi 0, %s144
      %s162 = sphi 0, %s162
      %s164 = sphi 0, %s162
      %s165 = sphi 0, %s164
      %s179 = sphi 0, %s165
      %s183 = sphi 0, %s183
      %s185 = sphi 0, %s183
      %s186 = sphi 0, %s185
      %s200 = sphi 0, %s186
      %s206 = sphi 0, %s208
      %s209 = sphi 0, %s206
      %s210 = sphi 0, %s209
      %s226 = sphi 0, %s210
    $region4: #{decoder_layer.3} parent=1 // loop_header_branch
      %21 = sbr.rel (%p19) target = $region8
    $region5: #{decoder_layer.3} parent=1 // loop_body
      %s23 = ssub.s32 %s18, 1
      %s24 = ssub.s32 %s18, 2
      %s25 = sadd.s32 %s18, 1
      %s26 = ssub.s32 %s18, %s25
      %p27 = scmp.eq.s32.totalorder %s26, 0
      %s29 = sadd.s32 %s28, 1
      %s30 = scalar_select %p27, %s28, %s29
      %p33 = pneg %p27
      %p34 = scmp.eq.s32.totalorder %s18, 1
      %p35 = por %p33, %p34
      %p36 = scmp.ne.s32.totalorder %s28, %s31
      %p37 = scmp.eq.s32.totalorder %s18, 0
      %p38 = por %p36, %p37
      %p39 = scmp.ne.s32.totalorder %s28, %s31
      %p40 = scmp.eq.s32.totalorder %s23, 1
      %p41 = por %p39, %p40
      %p42 = scmp.ne.s32.totalorder %s31, %s32
      %p43 = scmp.eq.s32.totalorder %s23, 0
      %p44 = por %p42, %p43
      %p45 = scmp.ne.s32.totalorder %s31, %s32
      %p46 = scmp.eq.s32.totalorder %s24, 1
      %p47 = por %p45, %p46
      %p49 = scmp.ne.s32.totalorder %s32, %s48
      %p50 = scmp.eq.s32.totalorder %s24, 0
      %p51 = por %p49, %p50
      %s52 = ssub.s32 %s18, %s25
      %p53 = scmp.eq.s32.totalorder %s52, 0
      %s55 = sadd.s32 %s54, 1
      %s56 = scalar_select %p53, %s54, %s55
      %p59 = pneg %p53
      %p60 = scmp.eq.s32.totalorder %s18, 1
      %p61 = por %p59, %p60
      %p62 = scmp.ne.s32.totalorder %s54, %s57
      %p63 = scmp.eq.s32.totalorder %s18, 0
      %p64 = por %p62, %p63
      %p65 = scmp.ne.s32.totalorder %s54, %s57
      %p66 = scmp.eq.s32.totalorder %s23, 1
      %p67 = por %p65, %p66
      %p68 = scmp.ne.s32.totalorder %s57, %s58
      %p69 = scmp.eq.s32.totalorder %s23, 0
      %p70 = por %p68, %p69
      %p71 = scmp.ne.s32.totalorder %s57, %s58
      %p72 = scmp.eq.s32.totalorder %s24, 1
      %p73 = por %p71, %p72
      %p75 = scmp.ne.s32.totalorder %s58, %s74
      %p76 = scmp.eq.s32.totalorder %s24, 0
      %p77 = por %p75, %p76
      %s79 = sadd.s32 %s78, 1
      %p82 = scmp.eq.s32.totalorder %s18, 1
      %p83 = scmp.ne.s32.totalorder %s78, %s80
      %p84 = scmp.eq.s32.totalorder %s18, 0
      %p85 = por %p83, %p84
      %p86 = scmp.ne.s32.totalorder %s78, %s80
      %p87 = scmp.eq.s32.totalorder %s23, 1
      %p88 = por %p86, %p87
      %p89 = scmp.ne.s32.totalorder %s80, %s81
      %p90 = scmp.eq.s32.totalorder %s23, 0
      %p91 = por %p89, %p90
      %p92 = scmp.ne.s32.totalorder %s80, %s81
      %p93 = scmp.eq.s32.totalorder %s24, 1
      %p94 = por %p92, %p93
      %p96 = scmp.ne.s32.totalorder %s81, %s95
      %p97 = scmp.eq.s32.totalorder %s24, 0
      %p98 = por %p96, %p97
      %s100 = sadd.s32 %s99, 1
      %p103 = scmp.eq.s32.totalorder %s18, 1
      %p104 = scmp.ne.s32.totalorder %s99, %s101
      %p105 = scmp.eq.s32.totalorder %s18, 0
      %p106 = por %p104, %p105
      %p107 = scmp.ne.s32.totalorder %s99, %s101
      %p108 = scmp.eq.s32.totalorder %s23, 1
      %p109 = por %p107, %p108
      %p110 = scmp.ne.s32.totalorder %s101, %s102
      %p111 = scmp.eq.s32.totalorder %s23, 0
      %p112 = por %p110, %p111
      %p113 = scmp.ne.s32.totalorder %s101, %s102
      %p114 = scmp.eq.s32.totalorder %s24, 1
      %p115 = por %p113, %p114
      %p117 = scmp.ne.s32.totalorder %s102, %s116
      %p118 = scmp.eq.s32.totalorder %s24, 0
      %p119 = por %p117, %p118
      %s121 = sadd.s32 %s120, 1
      %p124 = scmp.eq.s32.totalorder %s18, 1
      %p125 = scmp.ne.s32.totalorder %s120, %s122
      %p126 = scmp.eq.s32.totalorder %s18, 0
      %p127 = por %p125, %p126
      %p128 = scmp.ne.s32.totalorder %s120, %s122
      %p129 = scmp.eq.s32.totalorder %s23, 1
      %p130 = por %p128, %p129
      %p131 = scmp.ne.s32.totalorder %s122, %s123
      %p132 = scmp.eq.s32.totalorder %s23, 0
      %p133 = por %p131, %p132
      %p134 = scmp.ne.s32.totalorder %s122, %s123
      %p135 = scmp.eq.s32.totalorder %s24, 1
      %p136 = por %p134, %p135
      %p138 = scmp.ne.s32.totalorder %s123, %s137
      %p139 = scmp.eq.s32.totalorder %s24, 0
      %p140 = por %p138, %p139
      %s142 = sadd.s32 %s141, 1
      %p145 = scmp.eq.s32.totalorder %s18, 1
      %p146 = scmp.ne.s32.totalorder %s141, %s143
      %p147 = scmp.eq.s32.totalorder %s18, 0
      %p148 = por %p146, %p147
      %p149 = scmp.ne.s32.totalorder %s141, %s143
      %p150 = scmp.eq.s32.totalorder %s23, 1
      %p151 = por %p149, %p150
      %p152 = scmp.ne.s32.totalorder %s143, %s144
      %p153 = scmp.eq.s32.totalorder %s23, 0
      %p154 = por %p152, %p153
      %p155 = scmp.ne.s32.totalorder %s143, %s144
      %p156 = scmp.eq.s32.totalorder %s24, 1
      %p157 = por %p155, %p156
      %p159 = scmp.ne.s32.totalorder %s144, %s158
      %p160 = scmp.eq.s32.totalorder %s24, 0
      %p161 = por %p159, %p160
      %s163 = sadd.s32 %s162, 1
      %p166 = scmp.eq.s32.totalorder %s18, 1
      %p167 = scmp.ne.s32.totalorder %s162, %s164
      %p168 = scmp.eq.s32.totalorder %s18, 0
      %p169 = por %p167, %p168
      %p170 = scmp.ne.s32.totalorder %s162, %s164
      %p171 = scmp.eq.s32.totalorder %s23, 1
      %p172 = por %p170, %p171
      %p173 = scmp.ne.s32.totalorder %s164, %s165
      %p174 = scmp.eq.s32.totalorder %s23, 0
      %p175 = por %p173, %p174
      %p176 = scmp.ne.s32.totalorder %s164, %s165
      %p177 = scmp.eq.s32.totalorder %s24, 1
      %p178 = por %p176, %p177
      %p180 = scmp.ne.s32.totalorder %s165, %s179
      %p181 = scmp.eq.s32.totalorder %s24, 0
      %p182 = por %p180, %p181
      %s184 = sadd.s32 %s183, 1
      %p187 = scmp.eq.s32.totalorder %s18, 1
      %p188 = scmp.ne.s32.totalorder %s183, %s185
      %p189 = scmp.eq.s32.totalorder %s18, 0
      %p190 = por %p188, %p189
      %p191 = scmp.ne.s32.totalorder %s183, %s185
      %p192 = scmp.eq.s32.totalorder %s23, 1
      %p193 = por %p191, %p192
      %p194 = scmp.ne.s32.totalorder %s185, %s186
      %p195 = scmp.eq.s32.totalorder %s23, 0
      %p196 = por %p194, %p195
      %p197 = scmp.ne.s32.totalorder %s185, %s186
      %p198 = scmp.eq.s32.totalorder %s24, 1
      %p199 = por %p197, %p198
      %p201 = scmp.ne.s32.totalorder %s186, %s200
      %p202 = scmp.eq.s32.totalorder %s24, 0
      %p203 = por %p201, %p202
      %s204 = ssub.s32 %s18, %s25
      %p205 = scmp.eq.s32.totalorder %s204, 0
      %s207 = sadd.s32 %s206, 1
      %s208 = scalar_select %p205, %s206, %s207
      %p211 = pneg %p205
      %p212 = scmp.eq.s32.totalorder %s18, 1
      %p213 = por %p211, %p212
      %p214 = scmp.ne.s32.totalorder %s206, %s209
      %p215 = scmp.eq.s32.totalorder %s18, 0
      %p216 = por %p214, %p215
      %p217 = scmp.ne.s32.totalorder %s206, %s209
      %p218 = scmp.eq.s32.totalorder %s23, 1
      %p219 = por %p217, %p218
      %p220 = scmp.ne.s32.totalorder %s209, %s210
      %p221 = scmp.eq.s32.totalorder %s23, 0
      %p222 = por %p220, %p221
      %p223 = scmp.ne.s32.totalorder %s209, %s210
      %p224 = scmp.eq.s32.totalorder %s24, 1
      %p225 = por %p223, %p224
      %p227 = scmp.ne.s32.totalorder %s210, %s226
      %p228 = scmp.eq.s32.totalorder %s24, 0
      %p229 = por %p227, %p228
      %p230 = scmp.le.s32.totalorder 1, %s18
      %p231 = scmp.lt.s32.totalorder %s18, 3
      %p232 = pnand %p230, %p231
      %p233 = pneg %p232
      // Predicated region
      $region9: #{decoder_layer.3} parent=5 // pred_check
        _
      $region10: #{decoder_layer.3} parent=5 // pred_check_branch
        %235 = sbr.rel (%p232) target = $region12
      $region11: #{decoder_layer.3} parent=5 // pred_region
        %s236 = ssub.s32 %s18, 1
        // Predicated region
        $region13: #{decoder_layer.3} parent=11 // pred_check
          %p237 = pneg %p91
        $region14: #{decoder_layer.3} parent=11 // pred_check_branch
          %239 = sbr.rel (%p237) target = $region16
        $region15: #{decoder_layer.3} parent=11 // pred_region
          %241 = vsyncadd [#allocation5], 0
          %s242 = sshll.u32 %s2, 4
          %s243 = int_to_ptr.hbm [resolvable:$true] %s242
          %s244 = sshll.u32 [#allocation4], 4
          %s245 = int_to_ptr.vmem [resolvable:$true] %s244
          %250 = dma.hbm_to_vmem [thread:$0]  %s243, 256, %s245, [#allocation5], 64, 64, 4
        $region16: #{decoder_layer.3} parent=11 // pred_fallthru
          _
        // Predicated region
        $region17: #{decoder_layer.3} parent=11 // pred_check
          %p251 = pneg %p112
        $region18: #{decoder_layer.3} parent=11 // pred_check_branch
          %253 = sbr.rel (%p251) target = $region20
        $region19: #{decoder_layer.3} parent=11 // pred_region
          _
        $region20: #{decoder_layer.3} parent=11 // pred_fallthru
          _
        // Predicated region
        $region21: #{decoder_layer.3} parent=11 // pred_check
          %p254 = pneg %p133
        $region22: #{decoder_layer.3} parent=11 // pred_check_branch
          %256 = sbr.rel (%p254) target = $region24
        $region23: #{decoder_layer.3} parent=11 // pred_region
          %258 = vsyncadd [#allocation5], 0
          %s259 = sshll.u32 %s4, 4
          %s260 = int_to_ptr.hbm [resolvable:$true] %s259
          %s261 = sshll.u32 [#allocation6], 4
          %s262 = int_to_ptr.vmem [resolvable:$true] %s261
          %267 = dma.hbm_to_vmem [thread:$0]  %s260, 256, %s262, [#allocation5], 64, 64, 4
        $region24: #{decoder_layer.3} parent=11 // pred_fallthru
          _
        // Predicated region
        $region25: #{decoder_layer.3} parent=11 // pred_check
          %p268 = pneg %p154
        $region26: #{decoder_layer.3} parent=11 // pred_check_branch
          %270 = sbr.rel (%p268) target = $region28
        $region27: #{decoder_layer.3} parent=11 // pred_region
          _
        $region28: #{decoder_layer.3} parent=11 // pred_fallthru
          _
        // Predicated region
        $region29: #{decoder_layer.3} parent=11 // pred_check
          %p271 = pneg %p175
        $region30: #{decoder_layer.3} parent=11 // pred_check_branch
          %273 = sbr.rel (%p271) target = $region32
        $region31: #{decoder_layer.3} parent=11 // pred_region
          _
        $region32: #{decoder_layer.3} parent=11 // pred_fallthru
          _
        // Predicated region
        $region33: #{decoder_layer.3} parent=11 // pred_check
          %p274 = pneg %p196
        $region34: #{decoder_layer.3} parent=11 // pred_check_branch
          %276 = sbr.rel (%p274) target = $region36
        $region35: #{decoder_layer.3} parent=11 // pred_region
          _
        $region36: #{decoder_layer.3} parent=11 // pred_fallthru
          _
      $region12: #{decoder_layer.3} parent=5 // pred_fallthru
        _
      %p277 = scmp.lt.s32.totalorder %s18, 2
      // Predicated region
      $region37: #{decoder_layer.3} parent=5 // pred_check
        %p278 = pneg %p277
      $region38: #{decoder_layer.3} parent=5 // pred_check_branch
        %280 = sbr.rel (%p278) target = $region40
      $region39: #{decoder_layer.3} parent=5 // pred_region
        // Predicated region
        $region41: #{decoder_layer.3} parent=39 // pred_check
          %p281 = pneg %p38
        $region42: #{decoder_layer.3} parent=39 // pred_check_branch
          %283 = sbr.rel (%p281) target = $region44
        $region43: #{decoder_layer.3} parent=39 // pred_region
          %s284 = sand.u32 %s28, 1
          %s285 = scalar_lea.sflag [#allocation3], %s284
          %s286 = sand.u32 %s28, 1
          %s287 = smul.addr %s286, 8
          %s288 = scalar_lea.vmem [#allocation2], %s287
          %290 = vsyncadd %s285, 0
          %s291 = smul.addr %s18, 8
          %s292 = scalar_lea.hbm %s0, %s291
          %s294 = sshll.u32 %s292, 4
          %s295 = int_to_ptr.hbm [resolvable:$true] %s294
          %s296 = sshll.u32 %s288, 4
          %s297 = int_to_ptr.vmem [resolvable:$true] %s296
          %299 = dma.hbm_to_vmem [thread:$0]  %s295, 128, %s297, %s285
        $region44: #{decoder_layer.3} parent=39 // pred_fallthru
          _
        // Predicated region
        $region45: #{decoder_layer.3} parent=39 // pred_check
          %p300 = pneg %p64
        $region46: #{decoder_layer.3} parent=39 // pred_check_branch
          %302 = sbr.rel (%p300) target = $region48
        $region47: #{decoder_layer.3} parent=39 // pred_region
          %p303 = scmp.lt.s32.totalorder %s18, 1
          %s304 = scalar_select %p303, %s18, 1
          %s305 = smul.addr %s304, 8
          %s306 = scalar_lea.vmem %s1, %s305
        $region48: #{decoder_layer.3} parent=39 // pred_fallthru
          _
      $region40: #{decoder_layer.3} parent=5 // pred_fallthru
        _
      %p307 = scmp.le.s32.totalorder 1, %s18
      %p308 = scmp.lt.s32.totalorder %s18, 3
      %p309 = pnand %p307, %p308
      %p310 = pneg %p309
      // Predicated region
      $region49: #{decoder_layer.3} parent=5 // pred_check
        _
      $region50: #{decoder_layer.3} parent=5 // pred_check_branch
        %312 = sbr.rel (%p309) target = $region52
      $region51: #{decoder_layer.3} parent=5 // pred_region
        %s313 = ssub.s32 %s18, 1
        %s314 = sand.u32 %s31, 1
        %s315 = scalar_lea.sflag [#allocation3], %s314
        %s316 = sand.u32 %s31, 1
        %s317 = smul.addr %s316, 8
        %s318 = scalar_lea.vmem [#allocation2], %s317
        // Predicated region
        $region53: #{decoder_layer.3} parent=51 // pred_check
          %p319 = pneg %p44
        $region54: #{decoder_layer.3} parent=51 // pred_check_branch
          %321 = sbr.rel (%p319) target = $region56
        $region55: #{decoder_layer.3} parent=51 // pred_region
          %323 = dma.done %s315, 128
        $region56: #{decoder_layer.3} parent=51 // pred_fallthru
          _
        // Predicated region
        $region57: #{decoder_layer.3} parent=51 // pred_check
          %p324 = pneg %p91
        $region58: #{decoder_layer.3} parent=51 // pred_check_branch
          %326 = sbr.rel (%p324) target = $region60
        $region59: #{decoder_layer.3} parent=51 // pred_region
          %328 = dma.done [#allocation5], 256
        $region60: #{decoder_layer.3} parent=51 // pred_fallthru
          _
        // Predicated region
        $region61: #{decoder_layer.3} parent=51 // pred_check
          %p329 = pneg %p133
        $region62: #{decoder_layer.3} parent=51 // pred_check_branch
          %331 = sbr.rel (%p329) target = $region64
        $region63: #{decoder_layer.3} parent=51 // pred_region
          %333 = dma.done [#allocation5], 256
        $region64: #{decoder_layer.3} parent=51 // pred_fallthru
          _
        %s334 = sand.u32 %s31, 1
        %s335 = scalar_lea.sflag [#allocation3], %s334
        %s336 = sand.u32 %s31, 1
        %s337 = smul.addr %s336, 8
        %s338 = scalar_lea.vmem [#allocation2], %s337
        %p339 = pneg %p44
        %p340 = pneg %p41
        %p341 = scmp.lt.s32.totalorder %s23, 1
        %s342 = scalar_select %p341, %s23, 1
        %s343 = smul.addr %s342, 8
        %s344 = scalar_lea.vmem %s1, %s343
        %p345 = pneg %p70
        %p346 = pneg %p67
        %p347 = pneg %p91
        %p348 = pneg %p88
        %p349 = pneg %p112
        %p350 = pneg %p109
        %p351 = pneg %p133
        %p352 = pneg %p130
        %p353 = pneg %p154
        %p354 = pneg %p151
        %p355 = pneg %p175
        %p356 = pneg %p172
        %p357 = pneg %p196
        %p358 = pneg %p193
        %p359 = pneg %p222
        %p360 = pneg %p219
        %p361 = scmp.lt.s32.totalorder %s23, 1
        %s362 = scalar_select %p361, %s23, 1
        %s363 = smul.addr %s362, 8
        %s364 = scalar_lea.vmem %s8, %s363
        %p365 = scmp.lt.s32.totalorder %s23, 1
        %s366 = scalar_select %p365, %s23, 1
        %s367 = smul.addr %s366, 8
        %s368 = scalar_lea.vmem %s1, %s367
        %p369 = scmp.lt.s32.totalorder %s23, 1
        %s370 = scalar_select %p369, %s23, 1
        %s371 = smul.addr %s370, 8
        %s372 = scalar_lea.vmem %s8, %s371
        %v374 = vld [vmem:[%s318] sm:$0xff]
        %v375 = vpack.c.bf16 %v374, %v374
        %v376 = vld [vmem:[#allocation4] sm:$0xf]
        %v377 = vld [vmem:[#allocation4 + $0x4] sm:$0xf]
        %v378 = vld [vmem:[#allocation4 + $0x8] sm:$0xf]
        %v379 = vld [vmem:[#allocation4 + $0xc] sm:$0xf]
        %v380 = vld [vmem:[%s3] sm:$0x1]
        %v382 = vperm.slane %v380, 0
        %v388 = vunpack.c.l.b16 %v376
        %v389 = vunpack.c.l.b16 %v377
        %v390 = vunpack.c.l.b16 %v378
        %v391 = vunpack.c.l.b16 %v379
        %v392 = vpack.c.b16 %v389, %v388
        %v393 = vpack.c.b16 %v391, %v390
        %vm396 = vcmask 261120
        %v398 = vsel %vm396, %v375, 0
        %400 = vmatpush.bf16.msra.mxu0 0
        %401 = vmatpush.bf16.msra.mxu0 0
        %402 = vmatpush.bf16.msra.mxu0 0
        %403 = vmatpush.bf16.msra.mxu0 0
        %404 = vmatpush.bf16.msra.mxu0 0
        %405 = vmatpush.bf16.msra.mxu0 0
        %406 = vmatpush.bf16.msra.mxu0 %v393
        %407 = vmatpush.bf16.msra.mxu0 %v392
        %408 = vmatmul.bf16.gmra.mxu0 %v398
        %v409 = vpop.f32.mrf.mxu0
        %v410 = vadd.f32 %v382, %v409
        %v411 = vpop.f32.mrf.mxu0
        %412 = vdwg.mxu0
        %v413 = vld [vmem:[%s368] sm:$0xff]
        %v414 = vld [vmem:[#allocation6] sm:$0xf]
        %v415 = vld [vmem:[#allocation6 + $0x4] sm:$0xf]
        %v416 = vld [vmem:[#allocation6 + $0x8] sm:$0xf]
        %v417 = vld [vmem:[#allocation6 + $0xc] sm:$0xf]
        %v418 = vmul.f32 %v410, 0.35355338
        %v419 = vpack.c.bf16 %v418, %v418
        %v420 = vpack.c.bf16 %v410, %v410
        %422 = vrot.lane.b32.xlu0 %v420, 96
        %v423 = vpop.permute.xlu0 %422
        %vm424 = vcmask 64512
        %v426 = vsel %vm424, %v419, 0
        %v429 = vsel %vm424, %v423, 0
        %431 = vmatpush.bf16.xpose.msra.mxu0 0
        %432 = vmatpush.bf16.xpose.msra.mxu0 0
        %433 = vmatpush.bf16.xpose.msra.mxu0 0
        %434 = vmatpush.bf16.xpose.msra.mxu0 0
        %435 = vmatpush.bf16.xpose.msra.mxu0 0
        %436 = vmatpush.bf16.xpose.msra.mxu0 0
        %437 = vmatpush.bf16.xpose.msra.mxu0 0
        %438 = vmatpush.bf16.xpose.msra.mxu0 %v429
        %439 = vmatmul.bf16.gmra.mxu0 %v426
        %v440 = vpop.f32.mrf.mxu0
        %v441 = vadd.f32 0.0, %v440
        %v442 = vpop.f32.mrf.mxu0
        %443 = vdwg.mxu0
        %vm444 = vcmp.eq.f32.partialorder %v413, 0.0
        %v445 = vsel %vm444, -1e+10, %v441
        %v446 = vsel %vm424, %v445, -inf
        %447 = vmax.xlane.f32.xlu0 %v446
        %v448 = vpop.xlane.xlu0 %447
        %v449 = vsub.f32 %v445, %v448
        %v450 = vmul.f32 %v449, 1.442695
        %v451 = vpow.pop %v450
        %v452 = vsel %vm424, %v451, 0.0
        %453 = vadd.xlane.f32.xlu0 %v452
        %v454 = vpop.xlane.xlu0 %453
        %v455 = vrcp.pop %v454
        %v456 = vmul.f32 %v451, %v455
        %v457 = vpack.c.bf16 %v456, %v456
        %458 = vrot.lane.b32.xlu0 %v420, 64
        %v459 = vpop.permute.xlu0 %458
        %v461 = vsel %vm424, %v457, 0
        %vm463 = vcmask 1043456
        %v465 = vsel %vm463, %v459, 0
        %467 = vmatpush.bf16.msra.mxu0 0
        %468 = vmatpush.bf16.msra.mxu0 0
        %469 = vmatpush.bf16.msra.mxu0 0
        %470 = vmatpush.bf16.msra.mxu0 0
        %471 = vmatpush.bf16.msra.mxu0 0
        %472 = vmatpush.bf16.msra.mxu0 0
        %473 = vmatpush.bf16.msra.mxu0 0
        %474 = vmatpush.bf16.msra.mxu0 %v465
        %475 = vmatmul.bf16.gmra.mxu0 %v461
        %v476 = vpop.f32.mrf.mxu0
        %v477 = vadd.f32 0.0, %v476
        %v478 = vpop.f32.mrf.mxu0
        %479 = vdwg.mxu0
        %v480 = vpack.c.bf16 %v477, %v477
        %482 = vrot.lane.b32.xlu0 %v419, 120
        %v483 = vpop.permute.xlu0 %482
        %484 = vrot.lane.b32.xlu0 %v420, 88
        %v485 = vpop.permute.xlu0 %484
        %v487 = vsel %vm424, %v483, 0
        %v490 = vsel %vm424, %v485, 0
        %492 = vmatpush.bf16.xpose.msra.mxu0 0
        %493 = vmatpush.bf16.xpose.msra.mxu0 0
        %494 = vmatpush.bf16.xpose.msra.mxu0 0
        %495 = vmatpush.bf16.xpose.msra.mxu0 0
        %496 = vmatpush.bf16.xpose.msra.mxu0 0
        %497 = vmatpush.bf16.xpose.msra.mxu0 0
        %498 = vmatpush.bf16.xpose.msra.mxu0 0
        %499 = vmatpush.bf16.xpose.msra.mxu0 %v490
        %500 = vmatmul.bf16.gmra.mxu0 %v487
        %v501 = vpop.f32.mrf.mxu0
        %v502 = vadd.f32 0.0, %v501
        %v503 = vpop.f32.mrf.mxu0
        %504 = vdwg.mxu0
        %v505 = vsel %vm444, -1e+10, %v502
        %v506 = vsel %vm424, %v505, -inf
        %507 = vmax.xlane.f32.xlu0 %v506
        %v508 = vpop.xlane.xlu0 %507
        %v509 = vsub.f32 %v505, %v508
        %v510 = vmul.f32 %v509, 1.442695
        %v511 = vpow.pop %v510
        %v512 = vsel %vm424, %v511, 0.0
        %513 = vadd.xlane.f32.xlu0 %v512
        %v514 = vpop.xlane.xlu0 %513
        %v515 = vrcp.pop %v514
        %v516 = vmul.f32 %v511, %v515
        %v517 = vpack.c.bf16 %v516, %v516
        %518 = vrot.lane.b32.xlu0 %v420, 56
        %v519 = vpop.permute.xlu0 %518
        %v521 = vsel %vm424, %v517, 0
        %v524 = vsel %vm463, %v519, 0
        %526 = vmatpush.bf16.msra.mxu0 0
        %527 = vmatpush.bf16.msra.mxu0 0
        %528 = vmatpush.bf16.msra.mxu0 0
        %529 = vmatpush.bf16.msra.mxu0 0
        %530 = vmatpush.bf16.msra.mxu0 0
        %531 = vmatpush.bf16.msra.mxu0 0
        %532 = vmatpush.bf16.msra.mxu0 0
        %533 = vmatpush.bf16.msra.mxu0 %v524
        %534 = vmatmul.bf16.gmra.mxu0 %v521
        %v535 = vpop.f32.mrf.mxu0
        %v536 = vadd.f32 0.0, %v535
        %v537 = vpop.f32.mrf.mxu0
        %538 = vdwg.mxu0
        %v539 = vpack.c.bf16 %v536, %v536
        %v541 = vsel %vm424, %v539, 0
        %v544 = vsel %vm463, %v415, 0
        %546 = vmatpush.bf16.msra.mxu0 0
        %547 = vmatpush.bf16.msra.mxu0 0
        %548 = vmatpush.bf16.msra.mxu0 0
        %549 = vmatpush.bf16.msra.mxu0 0
        %550 = vmatpush.bf16.msra.mxu0 0
        %551 = vmatpush.bf16.msra.mxu0 0
        %552 = vmatpush.bf16.msra.mxu0 0
        %553 = vmatpush.bf16.msra.mxu0 %v544
        %554 = vmatmul.bf16.gmra.mxu0 %v541
        %v555 = vpop.f32.mrf.mxu0
        %v556 = vadd.f32 0.0, %v555
        %v557 = vpop.f32.mrf.mxu0
        %558 = vdwg.mxu0
        %v560 = vsel %vm424, %v480, 0
        %v563 = vsel %vm463, %v414, 0
        %565 = vmatpush.bf16.msra.mxu0 0
        %566 = vmatpush.bf16.msra.mxu0 0
        %567 = vmatpush.bf16.msra.mxu0 0
        %568 = vmatpush.bf16.msra.mxu0 0
        %569 = vmatpush.bf16.msra.mxu0 0
        %570 = vmatpush.bf16.msra.mxu0 0
        %571 = vmatpush.bf16.msra.mxu0 0
        %572 = vmatpush.bf16.msra.mxu0 %v563
        %573 = vmatmul.bf16.gmra.mxu0 %v560
        %v574 = vpop.f32.mrf.mxu0
        %v575 = vadd.f32 %v556, %v574
        %v576 = vpop.f32.mrf.mxu0
        %577 = vdwg.mxu0
        %578 = vrot.lane.b32.xlu0 %v419, 112
        %v579 = vpop.permute.xlu0 %578
        %580 = vrot.lane.b32.xlu0 %v420, 80
        %v581 = vpop.permute.xlu0 %580
        %v583 = vsel %vm424, %v579, 0
        %v586 = vsel %vm424, %v581, 0
        %588 = vmatpush.bf16.xpose.msra.mxu0 0
        %589 = vmatpush.bf16.xpose.msra.mxu0 0
        %590 = vmatpush.bf16.xpose.msra.mxu0 0
        %591 = vmatpush.bf16.xpose.msra.mxu0 0
        %592 = vmatpush.bf16.xpose.msra.mxu0 0
        %593 = vmatpush.bf16.xpose.msra.mxu0 0
        %594 = vmatpush.bf16.xpose.msra.mxu0 0
        %595 = vmatpush.bf16.xpose.msra.mxu0 %v586
        %596 = vmatmul.bf16.gmra.mxu0 %v583
        %v597 = vpop.f32.mrf.mxu0
        %v598 = vadd.f32 0.0, %v597
        %v599 = vpop.f32.mrf.mxu0
        %600 = vdwg.mxu0
        %v601 = vsel %vm444, -1e+10, %v598
        %v602 = vsel %vm424, %v601, -inf
        %603 = vmax.xlane.f32.xlu0 %v602
        %v604 = vpop.xlane.xlu0 %603
        %v605 = vsub.f32 %v601, %v604
        %v606 = vmul.f32 %v605, 1.442695
        %v607 = vpow.pop %v606
        %v608 = vsel %vm424, %v607, 0.0
        %609 = vadd.xlane.f32.xlu0 %v608
        %v610 = vpop.xlane.xlu0 %609
        %v611 = vrcp.pop %v610
        %v612 = vmul.f32 %v607, %v611
        %v613 = vpack.c.bf16 %v612, %v612
        %614 = vrot.lane.b32.xlu0 %v420, 48
        %v615 = vpop.permute.xlu0 %614
        %v617 = vsel %vm424, %v613, 0
        %v620 = vsel %vm463, %v615, 0
        %622 = vmatpush.bf16.msra.mxu0 0
        %623 = vmatpush.bf16.msra.mxu0 0
        %624 = vmatpush.bf16.msra.mxu0 0
        %625 = vmatpush.bf16.msra.mxu0 0
        %626 = vmatpush.bf16.msra.mxu0 0
        %627 = vmatpush.bf16.msra.mxu0 0
        %628 = vmatpush.bf16.msra.mxu0 0
        %629 = vmatpush.bf16.msra.mxu0 %v620
        %630 = vmatmul.bf16.gmra.mxu0 %v617
        %v631 = vpop.f32.mrf.mxu0
        %v632 = vadd.f32 0.0, %v631
        %v633 = vpop.f32.mrf.mxu0
        %634 = vdwg.mxu0
        %v635 = vpack.c.bf16 %v632, %v632
        %v637 = vsel %vm424, %v635, 0
        %v640 = vsel %vm463, %v416, 0
        %642 = vmatpush.bf16.msra.mxu0 0
        %643 = vmatpush.bf16.msra.mxu0 0
        %644 = vmatpush.bf16.msra.mxu0 0
        %645 = vmatpush.bf16.msra.mxu0 0
        %646 = vmatpush.bf16.msra.mxu0 0
        %647 = vmatpush.bf16.msra.mxu0 0
        %648 = vmatpush.bf16.msra.mxu0 0
        %649 = vmatpush.bf16.msra.mxu0 %v640
        %650 = vmatmul.bf16.gmra.mxu0 %v637
        %v651 = vpop.f32.mrf.mxu0
        %v652 = vadd.f32 0.0, %v651
        %v653 = vpop.f32.mrf.mxu0
        %654 = vdwg.mxu0
        %v655 = vadd.f32 %v575, %v652
        %656 = vrot.lane.b32.xlu0 %v419, 104
        %v657 = vpop.permute.xlu0 %656
        %658 = vrot.lane.b32.xlu0 %v420, 72
        %v659 = vpop.permute.xlu0 %658
        %v661 = vsel %vm424, %v657, 0
        %v664 = vsel %vm424, %v659, 0
        %666 = vmatpush.bf16.xpose.msra.mxu0 0
        %667 = vmatpush.bf16.xpose.msra.mxu0 0
        %668 = vmatpush.bf16.xpose.msra.mxu0 0
        %669 = vmatpush.bf16.xpose.msra.mxu0 0
        %670 = vmatpush.bf16.xpose.msra.mxu0 0
        %671 = vmatpush.bf16.xpose.msra.mxu0 0
        %672 = vmatpush.bf16.xpose.msra.mxu0 0
        %673 = vmatpush.bf16.xpose.msra.mxu0 %v664
        %674 = vmatmul.bf16.gmra.mxu0 %v661
        %v675 = vpop.f32.mrf.mxu0
        %v676 = vadd.f32 0.0, %v675
        %v677 = vpop.f32.mrf.mxu0
        %678 = vdwg.mxu0
        %v679 = vsel %vm444, -1e+10, %v676
        %v680 = vsel %vm424, %v679, -inf
        %681 = vmax.xlane.f32.xlu0 %v680
        %v682 = vpop.xlane.xlu0 %681
        %v683 = vsub.f32 %v679, %v682
        %v684 = vmul.f32 %v683, 1.442695
        %v685 = vpow.pop %v684
        %v686 = vsel %vm424, %v685, 0.0
        %687 = vadd.xlane.f32.xlu0 %v686
        %v688 = vpop.xlane.xlu0 %687
        %v689 = vrcp.pop %v688
        %v690 = vmul.f32 %v685, %v689
        %v691 = vpack.c.bf16 %v690, %v690
        %692 = vrot.lane.b32.xlu0 %v420, 40
        %v693 = vpop.permute.xlu0 %692
        %v695 = vsel %vm424, %v691, 0
        %v698 = vsel %vm463, %v693, 0
        %700 = vmatpush.bf16.msra.mxu0 0
        %701 = vmatpush.bf16.msra.mxu0 0
        %702 = vmatpush.bf16.msra.mxu0 0
        %703 = vmatpush.bf16.msra.mxu0 0
        %704 = vmatpush.bf16.msra.mxu0 0
        %705 = vmatpush.bf16.msra.mxu0 0
        %706 = vmatpush.bf16.msra.mxu0 0
        %707 = vmatpush.bf16.msra.mxu0 %v698
        %708 = vmatmul.bf16.gmra.mxu0 %v695
        %v709 = vpop.f32.mrf.mxu0
        %v710 = vadd.f32 0.0, %v709
        %v711 = vpop.f32.mrf.mxu0
        %712 = vdwg.mxu0
        %v713 = vpack.c.bf16 %v710, %v710
        %v715 = vsel %vm424, %v713, 0
        %v718 = vsel %vm463, %v417, 0
        %720 = vmatpush.bf16.msra.mxu0 0
        %721 = vmatpush.bf16.msra.mxu0 0
        %722 = vmatpush.bf16.msra.mxu0 0
        %723 = vmatpush.bf16.msra.mxu0 0
        %724 = vmatpush.bf16.msra.mxu0 0
        %725 = vmatpush.bf16.msra.mxu0 0
        %726 = vmatpush.bf16.msra.mxu0 0
        %727 = vmatpush.bf16.msra.mxu0 %v718
        %728 = vmatmul.bf16.gmra.mxu0 %v715
        %v729 = vpop.f32.mrf.mxu0
        %v730 = vadd.f32 0.0, %v729
        %v731 = vpop.f32.mrf.mxu0
        %732 = vdwg.mxu0
        %v733 = vadd.f32 %v655, %v730
        %v734 = vadd.f32 %v374, %v733
        %v735 = vld [vmem:[%s5] sm:$0x1]
        %v737 = vperm.slane %v735, 0
        %v739 = vadd.f32 %v734, %v737
        %v740 = vld [vmem:[%s6] sm:$0x1]
        %v741 = vld [vmem:[%s7] sm:$0x1]
        %v742 = vsel %vm396, %v739, 0.0
        %743 = vadd.xlane.f32.xlu0 %v742
        %v744 = vpop.xlane.xlu0 %743
        %v745 = vrcp.pop 32.0
        %v746 = vmul.f32 32.0, %v745
        %v747 = vsub.f32 1.0, %v746
        %v748 = vmul.f32 %v745, %v747
        %v749 = vadd.f32 %v745, %v748
        %vm750 = vweird.f32 %v745
        %v751 = vsel %vm750, %v745, %v749
        %v752 = vmul.f32 %v744, %v751
        %v753 = vsub.f32 %v739, %v752
        %v754 = vmul.f32 %v753, %v753
        %v755 = vsel %vm396, %v754, 0.0
        %756 = vadd.xlane.f32.xlu0 %v755
        %v757 = vpop.xlane.xlu0 %756
        %v758 = vmul.f32 %v757, %v751
        %v759 = vadd.f32 %v758, 1e-05
        %v760 = vrsqrt.pop %v759
        %v761 = vmul.f32 %v760, %v759
        %v762 = vmul.f32 %v761, %v760
        %v763 = vmul.f32 0.5, %v762
        %v764 = vsub.f32 1.5, %v763
        %v765 = vmul.f32 %v760, %v764
        %vm766 = vweird.f32 %v759
        %vm767 = vweird.f32 %v760
        %vm768 = vmor %vm766, %vm767
        %v769 = vsel %vm768, %v760, %v765
        %v770 = vmul.f32 %v753, %v769
        %v772 = vperm.slane %v740, 0
        %v774 = vmul.f32 %v770, %v772
        %v776 = vperm.slane %v741, 0
        %v778 = vadd.f32 %v774, %v776
        %779 = vst.msk [vmem:[%s372] sm:$0xff] %vm396, %v778
        %p780 = scmp.lt.s32.totalorder %s23, 1
        %s781 = scalar_select %p780, %s23, 1
        %s782 = smul.addr %s781, 8
        %s783 = scalar_lea.vmem %s8, %s782
        // Predicated region
        $region65: #{decoder_layer.3} parent=51 // pred_check
          %p784 = pneg %p219
        $region66: #{decoder_layer.3} parent=51 // pred_check_branch
          %786 = sbr.rel (%p784) target = $region68
        $region67: #{decoder_layer.3} parent=51 // pred_region
          _
        $region68: #{decoder_layer.3} parent=51 // pred_fallthru
          _
      $region52: #{decoder_layer.3} parent=5 // pred_fallthru
        _
      %p787 = scmp.le.s32.totalorder 2, %s18
      // Predicated region
      $region69: #{decoder_layer.3} parent=5 // pred_check
        %p788 = pneg %p787
      $region70: #{decoder_layer.3} parent=5 // pred_check_branch
        %790 = sbr.rel (%p788) target = $region72
      $region71: #{decoder_layer.3} parent=5 // pred_region
        %s791 = ssub.s32 %s18, 2
        // Predicated region
        $region73: #{decoder_layer.3} parent=71 // pred_check
          %p792 = pneg %p225
        $region74: #{decoder_layer.3} parent=71 // pred_check_branch
          %794 = sbr.rel (%p792) target = $region76
        $region75: #{decoder_layer.3} parent=71 // pred_region
          %p795 = scmp.lt.s32.totalorder %s24, 1
          %s796 = scalar_select %p795, %s24, 1
          %s797 = smul.addr %s796, 8
          %s798 = scalar_lea.vmem %s8, %s797
        $region76: #{decoder_layer.3} parent=71 // pred_fallthru
          _
      $region72: #{decoder_layer.3} parent=5 // pred_fallthru
        _
    $region6: #{decoder_layer.3} parent=1 // loop_footer
      %s22 = sadd.s32 1, %s18
    $region7: #{decoder_layer.3} parent=1 // loop_footer_branch
      %17 = sbr.rel target = $region3
    $region8: #{decoder_layer.3} parent=1 // loop_exit
      _
    %799 = vsyncpa [#allocation3], 1
    %s800 = scalar_lea.sflag [#allocation3], 1
    %801 = vsyncpa %s800, 1
    %802 = vsyncpa [#allocation5], 1

</llo_original>
